<compile_context>
chip_gen: v7x
topology: tpu7x:2x2x1
jax: 0.10.0
libtpu: 0.0.40
codegen_flags: <defaults>
</compile_context>

<pallas_src>
import jax
import jax.numpy as jnp
from jax.experimental import pallas as pl
from jax.experimental.pallas import tpu as pltpu

LANES = 128


# --------------------- fused conv + bias + ReLU + maxpool -------------------

def _conv_pool_kernel(tl_ref, tr_ref, bl_ref, br_ref, w_ref, b_ref, o_ref):
    # The four inputs are the im2col rows of the four corners of each 2x2
    # pooling window.  max(relu(conv+b)) == relu(max(conv)+b) because the bias
    # is per-channel and ReLU is monotone, so pooling can happen on the raw
    # accumulators.
    w = w_ref[...]
    acc = jnp.dot(tl_ref[...], w, preferred_element_type=jnp.float32)
    acc = jnp.maximum(acc, jnp.dot(tr_ref[...], w, preferred_element_type=jnp.float32))
    acc = jnp.maximum(acc, jnp.dot(bl_ref[...], w, preferred_element_type=jnp.float32))
    acc = jnp.maximum(acc, jnp.dot(br_ref[...], w, preferred_element_type=jnp.float32))
    o_ref[...] = jnp.maximum(acc + b_ref[...], 0.0)


def conv_relu_pool(x_nhwc, w_kn, b_1n, kh, kw, *, tm=256):
    """Valid conv (stride 1) + ReLU + 2x2/2 max-pool on NHWC activations.

    w_kn: (kh*kw*Cin, N) bf16 with N = Cout zero-padded to 128 lanes.
    b_1n: (1, N) f32, zero-padded.
    Returns (B, Ho//2, Wo//2, N) f32; the padded channels are exactly zero.
    """
    B, H, W, Cin = x_nhwc.shape
    K, N = w_kn.shape
    assert K == kh * kw * Cin
    Ho, Wo = H - kh + 1, W - kw + 1
    Hp, Wp = Ho // 2, Wo // 2
    M = B * Hp * Wp

    x = x_nhwc.astype(jnp.bfloat16)

    # TODO(synk): im2col stays as (bf16) XLA glue; folding the kh*kw shifted
    # loads fully inside the kernel needs in-kernel (Ho,Wo,Cin)->(Ho*Wo,Cin)
    # relayouts that are unfriendly for lane-sparse Cin (1 / 20).
    def corner(dy, dx):
        patches = [
            x[:, dy + i::2, dx + j::2, :][:, :Hp, :Wp, :]
            for i in range(kh) for j in range(kw)
        ]
        cols = jnp.stack(patches, axis=3)            # (B, Hp, Wp, kh*kw, Cin)
        return cols.reshape(M, K)

    c_tl, c_tr, c_bl, c_br = corner(0, 0), corner(0, 1), corner(1, 0), corner(1, 1)

    tm = min(tm, M)
    out = pl.pallas_call(
        _conv_pool_kernel,
        out_shape=jax.ShapeDtypeStruct((M, N), jnp.float32),
        grid=(pl.cdiv(M, tm),),
        in_specs=[pl.BlockSpec((tm, K), lambda m: (m, 0)) for _ in range(4)]
        + [
            pl.BlockSpec((K, N), lambda m: (0, 0)),   # weights stay resident
            pl.BlockSpec((1, N), lambda m: (0, 0)),   # bias stays resident
        ],
        out_specs=pl.BlockSpec((tm, N), lambda m: (m, 0)),
        compiler_params=pltpu.CompilerParams(dimension_semantics=("parallel",)),
    )(c_tl, c_tr, c_bl, c_br, w_kn, b_1n)
    return out.reshape(B, Hp, Wp, N)


# --------------------------- fused fc1+ReLU+fc2 ------------------------------

def _fc_fused_kernel(x_ref, w1_ref, b1_ref, w2_ref, b2_ref, o_ref):
    h = jnp.dot(x_ref[...], w1_ref[...], preferred_element_type=jnp.float32)
    h = jnp.maximum(h + b1_ref[...], 0.0)
    # TODO(synk): nn.Dropout(p=0.5) is identity at inference time; omitted.
    o = jnp.dot(h.astype(w2_ref.dtype), w2_ref[...],
                preferred_element_type=jnp.float32)
    o_ref[...] = o + b2_ref[...]


def fc1_relu_fc2(x, w1, b1, w2, b2, *, tb=512):
    """out = (relu(x@w1+b1)) @ w2 + b2, hidden kept in VMEM only."""
    B, K = x.shape
    K1, H = w1.shape
    H2, N = w2.shape
    assert K == K1 and H == H2
    tb = min(tb, B)
    return pl.pallas_call(
        _fc_fused_kernel,
        out_shape=jax.ShapeDtypeStruct((B, N), jnp.float32),
        grid=(pl.cdiv(B, tb),),
        in_specs=[
            pl.BlockSpec((tb, K), lambda i: (i, 0)),
            pl.BlockSpec((K, H), lambda i: (0, 0)),
            pl.BlockSpec((1, H), lambda i: (0, 0)),
            pl.BlockSpec((H, N), lambda i: (0, 0)),
            pl.BlockSpec((1, N), lambda i: (0, 0)),
        ],
        out_specs=pl.BlockSpec((tb, N), lambda i: (i, 0)),
        compiler_params=pltpu.CompilerParams(dimension_semantics=("parallel",)),
    )(x.astype(jnp.bfloat16), w1, b1, w2, b2)


# ------------------------------- parameters ---------------------------------

def init_params(key):
    ks = jax.random.split(key, 8)

    def u(k, shape, fan_in):
        bound = 1.0 / (fan_in ** 0.5)
        return jax.random.uniform(k, shape, jnp.float32, -bound, bound)

    return {
        "conv1_w": u(ks[0], (20, 1, 5, 5), 1 * 5 * 5),
        "conv1_b": u(ks[1], (20,), 1 * 5 * 5),
        "conv2_w": u(ks[2], (50, 20, 5, 5), 20 * 5 * 5),
        "conv2_b": u(ks[3], (50,), 20 * 5 * 5),
        "fc1_w": u(ks[4], (500, 4 * 4 * 50), 4 * 4 * 50),
        "fc1_b": u(ks[5], (500,), 4 * 4 * 50),
        "fc2_w": u(ks[6], (10, 500), 500),
        "fc2_b": u(ks[7], (10,), 500),
    }


def prepare_params(params):
    """One-time layout prep: transpose/reshape, lane-pad to 128, cast to bf16."""
    def conv_prep(w, b):
        cout, cin, kh, kw = w.shape
        wk = jnp.transpose(w, (2, 3, 1, 0)).reshape(kh * kw * cin, cout)
        wk = jnp.pad(wk, ((0, 0), (0, LANES - cout))).astype(jnp.bfloat16)
        bk = jnp.pad(b, (0, LANES - cout)).reshape(1, LANES).astype(jnp.float32)
        return wk, bk

    w1c, b1c = conv_prep(params["conv1_w"], params["conv1_b"])
    w2c, b2c = conv_prep(params["conv2_w"], params["conv2_b"])

    F1 = 512  # 500 -> next multiple of 128
    # torch flattens the conv2 activation in NCHW order (c, h, w); our kernel
    # produces (h, w, c_pad128).  Fold that permutation + channel padding into
    # fc1's weight once.
    f1w = params["fc1_w"].reshape(500, 50, 4, 4)         # (out, c, h, w)
    f1w = jnp.transpose(f1w, (2, 3, 1, 0))               # (h, w, c, out)
    f1w = jnp.pad(f1w, ((0, 0), (0, 0), (0, LANES - 50), (0, F1 - 500)))
    f1w = f1w.reshape(4 * 4 * LANES, F1).astype(jnp.bfloat16)
    f1b = jnp.pad(params["fc1_b"], (0, F1 - 500)).reshape(1, F1).astype(jnp.float32)

    f2w = jnp.pad(params["fc2_w"].T, ((0, F1 - 500), (0, LANES - 10)))
    f2w = f2w.astype(jnp.bfloat16)
    f2b = jnp.pad(params["fc2_b"], (0, LANES - 10)).reshape(1, LANES).astype(jnp.float32)

    return {"conv1_w": w1c, "conv1_b": b1c,
            "conv2_w": w2c, "conv2_b": b2c,
            "fc1_w": f1w, "fc1_b": f1b,
            "fc2_w": f2w, "fc2_b": f2b}


# -------------------------------- forward -----------------------------------

def lenet_forward(prep, x_nchw):
    x = jnp.transpose(x_nchw, (0, 2, 3, 1))                        # NCHW -> NHWC
    x = conv_relu_pool(x, prep["conv1_w"], prep["conv1_b"], 5, 5)  # (B,12,12,128)
    x = x[..., :20]                        # drop zero lane-padding channels
    x = conv_relu_pool(x, prep["conv2_w"], prep["conv2_b"], 5, 5)  # (B,4,4,128)
    B = x.shape[0]
    x = x.reshape(B, 4 * 4 * LANES)        # (h,w,c_pad) flatten; fc1_w pre-permuted
    x = fc1_relu_fc2(x, prep["fc1_w"], prep["fc1_b"],
                     prep["fc2_w"], prep["fc2_b"])                 # (B, 128)
    return x[:, :10]


if __name__ == "__main__":
    key = jax.random.PRNGKey(0)
    pkey, xkey = jax.random.split(key)
    params = init_params(pkey)
    prep = prepare_params(params)
    # fc1 expects 4*4*50 features => spatial must be 28x28 (LeNet/MNIST shape)
    x = jax.random.normal(xkey, (2, 1, 28, 28), dtype=jnp.float32)
    out = jax.jit(lenet_forward)(prep, x)
    out = jax.block_until_ready(out)
    assert out.shape == (2, 10) and out.dtype == jnp.float32
    print("KERNEL_OK")
</pallas_src>

<mosaic_0001>
module attributes {stable_mosaic.version = 11 : i64} {
  func.func @_conv_pool_kernel(%arg0: i32, %arg1: memref<256x25xbf16, #tpu.memory_space<vmem>>, %arg2: memref<256x25xbf16, #tpu.memory_space<vmem>>, %arg3: memref<256x25xbf16, #tpu.memory_space<vmem>>, %arg4: memref<256x25xbf16, #tpu.memory_space<vmem>>, %arg5: memref<25x128xbf16, #tpu.memory_space<vmem>>, %arg6: memref<1x128xf32, #tpu.memory_space<vmem>>, %arg7: memref<256x128xf32, #tpu.memory_space<vmem>>) attributes {dimension_semantics = [#tpu.dimension_semantics<parallel>], iteration_bounds = array<i64: 2>, scalar_prefetch = 0 : i64, scratch_operands = 0 : i64, tpu.core_type = #tpu.core_type<tc>, window_params = [{transform_indices = @transform_0, window_bounds = array<i64: 256, 25>}, {transform_indices = @transform_1, window_bounds = array<i64: 256, 25>}, {transform_indices = @transform_2, window_bounds = array<i64: 256, 25>}, {transform_indices = @transform_3, window_bounds = array<i64: 256, 25>}, {pipeline_mode = #tpu.pipeline_mode<synchronous>, transform_indices = @transform_4, window_bounds = array<i64: 25, 128>}, {pipeline_mode = #tpu.pipeline_mode<synchronous>, transform_indices = @transform_5, window_bounds = array<i64: 1, 128>}, {transform_indices = @transform_6, window_bounds = array<i64: 256, 128>}]} {
    %c0 = arith.constant 0 : index
    %c0_0 = arith.constant 0 : index
    %0 = vector.load %arg5[%c0, %c0_0] : memref<25x128xbf16, #tpu.memory_space<vmem>>, vector<25x128xbf16>
    %c0_1 = arith.constant 0 : index
    %c0_2 = arith.constant 0 : index
    %1 = vector.load %arg1[%c0_1, %c0_2] : memref<256x25xbf16, #tpu.memory_space<vmem>>, vector<256x25xbf16>
    %cst = arith.constant dense<0.000000e+00> : vector<256x128xf32>
    %2 = tpu.matmul %1, %0, %cst {dimension_numbers = #tpu.dot_dimension_numbers<[1], [0], [0], [1], [0, 0, 1, 1], [], []>} : vector<256x25xbf16>, vector<25x128xbf16>, vector<256x128xf32> -> vector<256x128xf32>
    %c0_3 = arith.constant 0 : index
    %c0_4 = arith.constant 0 : index
    %3 = vector.load %arg2[%c0_3, %c0_4] : memref<256x25xbf16, #tpu.memory_space<vmem>>, vector<256x25xbf16>
    %cst_5 = arith.constant dense<0.000000e+00> : vector<256x128xf32>
    %4 = tpu.matmul %3, %0, %cst_5 {dimension_numbers = #tpu.dot_dimension_numbers<[1], [0], [0], [1], [0, 0, 1, 1], [], []>} : vector<256x25xbf16>, vector<25x128xbf16>, vector<256x128xf32> -> vector<256x128xf32>
    %5 = arith.maximumf %2, %4 : vector<256x128xf32>
    %c0_6 = arith.constant 0 : index
    %c0_7 = arith.constant 0 : index
    %6 = vector.load %arg3[%c0_6, %c0_7] : memref<256x25xbf16, #tpu.memory_space<vmem>>, vector<256x25xbf16>
    %cst_8 = arith.constant dense<0.000000e+00> : vector<256x128xf32>
    %7 = tpu.matmul %6, %0, %cst_8 {dimension_numbers = #tpu.dot_dimension_numbers<[1], [0], [0], [1], [0, 0, 1, 1], [], []>} : vector<256x25xbf16>, vector<25x128xbf16>, vector<256x128xf32> -> vector<256x128xf32>
    %8 = arith.maximumf %5, %7 : vector<256x128xf32>
    %c0_9 = arith.constant 0 : index
    %c0_10 = arith.constant 0 : index
    %9 = vector.load %arg4[%c0_9, %c0_10] : memref<256x25xbf16, #tpu.memory_space<vmem>>, vector<256x25xbf16>
    %cst_11 = arith.constant dense<0.000000e+00> : vector<256x128xf32>
    %10 = tpu.matmul %9, %0, %cst_11 {dimension_numbers = #tpu.dot_dimension_numbers<[1], [0], [0], [1], [0, 0, 1, 1], [], []>} : vector<256x25xbf16>, vector<25x128xbf16>, vector<256x128xf32> -> vector<256x128xf32>
    %11 = arith.maximumf %8, %10 : vector<256x128xf32>
    %c0_12 = arith.constant 0 : index
    %c0_13 = arith.constant 0 : index
    %12 = vector.load %arg6[%c0_12, %c0_13] : memref<1x128xf32, #tpu.memory_space<vmem>>, vector<1x128xf32>
    %13 = vector.broadcast %12 : vector<1x128xf32> to vector<256x128xf32>
    %14 = arith.addf %11, %13 : vector<256x128xf32>
    %cst_14 = arith.constant 0.000000e+00 : f32
    %15 = vector.broadcast %cst_14 : f32 to vector<256x128xf32>
    %16 = arith.maximumf %14, %15 : vector<256x128xf32>
    %c0_15 = arith.constant 0 : index
    %c0_16 = arith.constant 0 : index
    %17 = vector.load %arg7[%c0_15, %c0_16] : memref<256x128xf32, #tpu.memory_space<vmem>>, vector<256x128xf32>
    tpu.vector_store %arg7[%c0_15, %c0_16], %16 {strides = array<i32>} : memref<256x128xf32, #tpu.memory_space<vmem>>, vector<256x128xf32>,
    return
  }
  func.func @transform_0(%arg0: i32) -> (i32, i32) {
    %c0_i32 = arith.constant 0 : i32
    %c0_i32_0 = arith.constant 0 : i32
    return %arg0, %c0_i32 : i32, i32
  }
  func.func @transform_1(%arg0: i32) -> (i32, i32) {
    %c0_i32 = arith.constant 0 : i32
    %c0_i32_0 = arith.constant 0 : i32
    return %arg0, %c0_i32 : i32, i32
  }
  func.func @transform_2(%arg0: i32) -> (i32, i32) {
    %c0_i32 = arith.constant 0 : i32
    %c0_i32_0 = arith.constant 0 : i32
    return %arg0, %c0_i32 : i32, i32
  }
  func.func @transform_3(%arg0: i32) -> (i32, i32) {
    %c0_i32 = arith.constant 0 : i32
    %c0_i32_0 = arith.constant 0 : i32
    return %arg0, %c0_i32 : i32, i32
  }
  func.func @transform_4(%arg0: i32) -> (i32, i32) {
    %c0_i32 = arith.constant 0 : i32
    %c0_i32_0 = arith.constant 0 : i32
    %c0_i32_1 = arith.constant 0 : i32
    return %c0_i32, %c0_i32_0 : i32, i32
  }
  func.func @transform_5(%arg0: i32) -> (i32, i32) {
    %c0_i32 = arith.constant 0 : i32
    %c0_i32_0 = arith.constant 0 : i32
    %c0_i32_1 = arith.constant 0 : i32
    return %c0_i32, %c0_i32_0 : i32, i32
  }
  func.func @transform_6(%arg0: i32) -> (i32, i32) {
    %c0_i32 = arith.constant 0 : i32
    %c0_i32_0 = arith.constant 0 : i32
    return %arg0, %c0_i32 : i32, i32
  }
}

module attributes {stable_mosaic.version = 11 : i64} {
  func.func @_conv_pool_kernel(%arg0: i32, %arg1: memref<32x500xbf16, #tpu.memory_space<vmem>>, %arg2: memref<32x500xbf16, #tpu.memory_space<vmem>>, %arg3: memref<32x500xbf16, #tpu.memory_space<vmem>>, %arg4: memref<32x500xbf16, #tpu.memory_space<vmem>>, %arg5: memref<500x128xbf16, #tpu.memory_space<vmem>>, %arg6: memref<1x128xf32, #tpu.memory_space<vmem>>, %arg7: memref<32x128xf32, #tpu.memory_space<vmem>>) attributes {dimension_semantics = [#tpu.dimension_semantics<parallel>], iteration_bounds = array<i64: 1>, scalar_prefetch = 0 : i64, scratch_operands = 0 : i64, tpu.core_type = #tpu.core_type<tc>, window_params = [{transform_indices = @transform_0, window_bounds = array<i64: 32, 500>}, {transform_indices = @transform_1, window_bounds = array<i64: 32, 500>}, {transform_indices = @transform_2, window_bounds = array<i64: 32, 500>}, {transform_indices = @transform_3, window_bounds = array<i64: 32, 500>}, {pipeline_mode = #tpu.pipeline_mode<synchronous>, transform_indices = @transform_4, window_bounds = array<i64: 500, 128>}, {pipeline_mode = #tpu.pipeline_mode<synchronous>, transform_indices = @transform_5, window_bounds = array<i64: 1, 128>}, {transform_indices = @transform_6, window_bounds = array<i64: 32, 128>}]} {
    %c0 = arith.constant 0 : index
    %c0_0 = arith.constant 0 : index
    %0 = vector.load %arg5[%c0, %c0_0] : memref<500x128xbf16, #tpu.memory_space<vmem>>, vector<500x128xbf16>
    %c0_1 = arith.constant 0 : index
    %c0_2 = arith.constant 0 : index
    %1 = vector.load %arg1[%c0_1, %c0_2] : memref<32x500xbf16, #tpu.memory_space<vmem>>, vector<32x500xbf16>
    %cst = arith.constant dense<0.000000e+00> : vector<32x128xf32>
    %2 = tpu.matmul %1, %0, %cst {dimension_numbers = #tpu.dot_dimension_numbers<[1], [0], [0], [1], [0, 0, 1, 1], [], []>} : vector<32x500xbf16>, vector<500x128xbf16>, vector<32x128xf32> -> vector<32x128xf32>
    %c0_3 = arith.constant 0 : index
    %c0_4 = arith.constant 0 : index
    %3 = vector.load %arg2[%c0_3, %c0_4] : memref<32x500xbf16, #tpu.memory_space<vmem>>, vector<32x500xbf16>
    %cst_5 = arith.constant dense<0.000000e+00> : vector<32x128xf32>
    %4 = tpu.matmul %3, %0, %cst_5 {dimension_numbers = #tpu.dot_dimension_numbers<[1], [0], [0], [1], [0, 0, 1, 1], [], []>} : vector<32x500xbf16>, vector<500x128xbf16>, vector<32x128xf32> -> vector<32x128xf32>
    %5 = arith.maximumf %2, %4 : vector<32x128xf32>
    %c0_6 = arith.constant 0 : index
    %c0_7 = arith.constant 0 : index
    %6 = vector.load %arg3[%c0_6, %c0_7] : memref<32x500xbf16, #tpu.memory_space<vmem>>, vector<32x500xbf16>
    %cst_8 = arith.constant dense<0.000000e+00> : vector<32x128xf32>
    %7 = tpu.matmul %6, %0, %cst_8 {dimension_numbers = #tpu.dot_dimension_numbers<[1], [0], [0], [1], [0, 0, 1, 1], [], []>} : vector<32x500xbf16>, vector<500x128xbf16>, vector<32x128xf32> -> vector<32x128xf32>
    %8 = arith.maximumf %5, %7 : vector<32x128xf32>
    %c0_9 = arith.constant 0 : index
    %c0_10 = arith.constant 0 : index
    %9 = vector.load %arg4[%c0_9, %c0_10] : memref<32x500xbf16, #tpu.memory_space<vmem>>, vector<32x500xbf16>
    %cst_11 = arith.constant dense<0.000000e+00> : vector<32x128xf32>
    %10 = tpu.matmul %9, %0, %cst_11 {dimension_numbers = #tpu.dot_dimension_numbers<[1], [0], [0], [1], [0, 0, 1, 1], [], []>} : vector<32x500xbf16>, vector<500x128xbf16>, vector<32x128xf32> -> vector<32x128xf32>
    %11 = arith.maximumf %8, %10 : vector<32x128xf32>
    %c0_12 = arith.constant 0 : index
    %c0_13 = arith.constant 0 : index
    %12 = vector.load %arg6[%c0_12, %c0_13] : memref<1x128xf32, #tpu.memory_space<vmem>>, vector<1x128xf32>
    %13 = vector.broadcast %12 : vector<1x128xf32> to vector<32x128xf32>
    %14 = arith.addf %11, %13 : vector<32x128xf32>
    %cst_14 = arith.constant 0.000000e+00 : f32
    %15 = vector.broadcast %cst_14 : f32 to vector<32x128xf32>
    %16 = arith.maximumf %14, %15 : vector<32x128xf32>
    %c0_15 = arith.constant 0 : index
    %c0_16 = arith.constant 0 : index
    %17 = vector.load %arg7[%c0_15, %c0_16] : memref<32x128xf32, #tpu.memory_space<vmem>>, vector<32x128xf32>
    tpu.vector_store %arg7[%c0_15, %c0_16], %16 {strides = array<i32>} : memref<32x128xf32, #tpu.memory_space<vmem>>, vector<32x128xf32>,
    return
  }
  func.func @transform_0(%arg0: i32) -> (i32, i32) {
    %c0_i32 = arith.constant 0 : i32
    %c0_i32_0 = arith.constant 0 : i32
    return %arg0, %c0_i32 : i32, i32
  }
  func.func @transform_1(%arg0: i32) -> (i32, i32) {
    %c0_i32 = arith.constant 0 : i32
    %c0_i32_0 = arith.constant 0 : i32
    return %arg0, %c0_i32 : i32, i32
  }
  func.func @transform_2(%arg0: i32) -> (i32, i32) {
    %c0_i32 = arith.constant 0 : i32
    %c0_i32_0 = arith.constant 0 : i32
    return %arg0, %c0_i32 : i32, i32
  }
  func.func @transform_3(%arg0: i32) -> (i32, i32) {
    %c0_i32 = arith.constant 0 : i32
    %c0_i32_0 = arith.constant 0 : i32
    return %arg0, %c0_i32 : i32, i32
  }
  func.func @transform_4(%arg0: i32) -> (i32, i32) {
    %c0_i32 = arith.constant 0 : i32
    %c0_i32_0 = arith.constant 0 : i32
    %c0_i32_1 = arith.constant 0 : i32
    return %c0_i32, %c0_i32_0 : i32, i32
  }
  func.func @transform_5(%arg0: i32) -> (i32, i32) {
    %c0_i32 = arith.constant 0 : i32
    %c0_i32_0 = arith.constant 0 : i32
    %c0_i32_1 = arith.constant 0 : i32
    return %c0_i32, %c0_i32_0 : i32, i32
  }
  func.func @transform_6(%arg0: i32) -> (i32, i32) {
    %c0_i32 = arith.constant 0 : i32
    %c0_i32_0 = arith.constant 0 : i32
    return %arg0, %c0_i32 : i32, i32
  }
}

module attributes {stable_mosaic.version = 11 : i64} {
  func.func @_fc_fused_kernel(%arg0: i32, %arg1: memref<2x2048xbf16, #tpu.memory_space<vmem>>, %arg2: memref<2048x512xbf16, #tpu.memory_space<vmem>>, %arg3: memref<1x512xf32, #tpu.memory_space<vmem>>, %arg4: memref<512x128xbf16, #tpu.memory_space<vmem>>, %arg5: memref<1x128xf32, #tpu.memory_space<vmem>>, %arg6: memref<2x128xf32, #tpu.memory_space<vmem>>) attributes {dimension_semantics = [#tpu.dimension_semantics<parallel>], iteration_bounds = array<i64: 1>, scalar_prefetch = 0 : i64, scratch_operands = 0 : i64, tpu.core_type = #tpu.core_type<tc>, window_params = [{transform_indices = @transform_0, window_bounds = array<i64: 2, 2048>}, {pipeline_mode = #tpu.pipeline_mode<synchronous>, transform_indices = @transform_1, window_bounds = array<i64: 2048, 512>}, {pipeline_mode = #tpu.pipeline_mode<synchronous>, transform_indices = @transform_2, window_bounds = array<i64: 1, 512>}, {pipeline_mode = #tpu.pipeline_mode<synchronous>, transform_indices = @transform_3, window_bounds = array<i64: 512, 128>}, {pipeline_mode = #tpu.pipeline_mode<synchronous>, transform_indices = @transform_4, window_bounds = array<i64: 1, 128>}, {transform_indices = @transform_5, window_bounds = array<i64: 2, 128>}]} {
    %c0 = arith.constant 0 : index
    %c0_0 = arith.constant 0 : index
    %0 = vector.load %arg1[%c0, %c0_0] : memref<2x2048xbf16, #tpu.memory_space<vmem>>, vector<2x2048xbf16>
    %c0_1 = arith.constant 0 : index
    %c0_2 = arith.constant 0 : index
    %1 = vector.load %arg2[%c0_1, %c0_2] : memref<2048x512xbf16, #tpu.memory_space<vmem>>, vector<2048x512xbf16>
    %cst = arith.constant dense<0.000000e+00> : vector<2x512xf32>
    %2 = tpu.matmul %0, %1, %cst {dimension_numbers = #tpu.dot_dimension_numbers<[1], [0], [0], [1], [0, 0, 1, 1], [], []>} : vector<2x2048xbf16>, vector<2048x512xbf16>, vector<2x512xf32> -> vector<2x512xf32>
    %c0_3 = arith.constant 0 : index
    %c0_4 = arith.constant 0 : index
    %3 = vector.load %arg3[%c0_3, %c0_4] : memref<1x512xf32, #tpu.memory_space<vmem>>, vector<1x512xf32>
    %4 = vector.broadcast %3 : vector<1x512xf32> to vector<2x512xf32>
    %5 = arith.addf %2, %4 : vector<2x512xf32>
    %cst_5 = arith.constant 0.000000e+00 : f32
    %6 = vector.broadcast %cst_5 : f32 to vector<2x512xf32>
    %7 = arith.maximumf %5, %6 : vector<2x512xf32>
    %8 = arith.truncf %7 : vector<2x512xf32> to vector<2x512xbf16>
    %c0_6 = arith.constant 0 : index
    %c0_7 = arith.constant 0 : index
    %9 = vector.load %arg4[%c0_6, %c0_7] : memref<512x128xbf16, #tpu.memory_space<vmem>>, vector<512x128xbf16>
    %cst_8 = arith.constant dense<0.000000e+00> : vector<2x128xf32>
    %10 = tpu.matmul %8, %9, %cst_8 {dimension_numbers = #tpu.dot_dimension_numbers<[1], [0], [0], [1], [0, 0, 1, 1], [], []>} : vector<2x512xbf16>, vector<512x128xbf16>, vector<2x128xf32> -> vector<2x128xf32>
    %c0_9 = arith.constant 0 : index
    %c0_10 = arith.constant 0 : index
    %11 = vector.load %arg5[%c0_9, %c0_10] : memref<1x128xf32, #tpu.memory_space<vmem>>, vector<1x128xf32>
    %12 = vector.broadcast %11 : vector<1x128xf32> to vector<2x128xf32>
    %13 = arith.addf %10, %12 : vector<2x128xf32>
    %c0_11 = arith.constant 0 : index
    %c0_12 = arith.constant 0 : index
    %14 = vector.load %arg6[%c0_11, %c0_12] : memref<2x128xf32, #tpu.memory_space<vmem>>, vector<2x128xf32>
    tpu.vector_store %arg6[%c0_11, %c0_12], %13 {strides = array<i32>} : memref<2x128xf32, #tpu.memory_space<vmem>>, vector<2x128xf32>,
    return
  }
  func.func @transform_0(%arg0: i32) -> (i32, i32) {
    %c0_i32 = arith.constant 0 : i32
    %c0_i32_0 = arith.constant 0 : i32
    return %arg0, %c0_i32 : i32, i32
  }
  func.func @transform_1(%arg0: i32) -> (i32, i32) {
    %c0_i32 = arith.constant 0 : i32
    %c0_i32_0 = arith.constant 0 : i32
    %c0_i32_1 = arith.constant 0 : i32
    return %c0_i32, %c0_i32_0 : i32, i32
  }
  func.func @transform_2(%arg0: i32) -> (i32, i32) {
    %c0_i32 = arith.constant 0 : i32
    %c0_i32_0 = arith.constant 0 : i32
    %c0_i32_1 = arith.constant 0 : i32
    return %c0_i32, %c0_i32_0 : i32, i32
  }
  func.func @transform_3(%arg0: i32) -> (i32, i32) {
    %c0_i32 = arith.constant 0 : i32
    %c0_i32_0 = arith.constant 0 : i32
    %c0_i32_1 = arith.constant 0 : i32
    return %c0_i32, %c0_i32_0 : i32, i32
  }
  func.func @transform_4(%arg0: i32) -> (i32, i32) {
    %c0_i32 = arith.constant 0 : i32
    %c0_i32_0 = arith.constant 0 : i32
    %c0_i32_1 = arith.constant 0 : i32
    return %c0_i32, %c0_i32_0 : i32, i32
  }
  func.func @transform_5(%arg0: i32) -> (i32, i32) {
    %c0_i32 = arith.constant 0 : i32
    %c0_i32_0 = arith.constant 0 : i32
    return %arg0, %c0_i32 : i32, i32
  }
}

</mosaic_0001>

<llo_original>
// kernel: lenet_forward.3
$region0: #{lenet_forward.3}
  #allocation0 [shape = 'u32[]', space=smem, size = 0x4, offset = 0x4, fixed_abs, tag = 'smem constant byte address 0x4 - core index']
  #allocation1 [shape = 'u32[144,128]{1,0:T(1,128)}', space=vmem, size = 0x12000, scoped, tag = 'internal scratch']
  %s0 = inlined_call_operand.vmem [shape: bf16[288,25], index: 0, kind: input, shape index: {}]
  %s1 = inlined_call_operand.vmem [shape: bf16[288,25], index: 1, kind: input, shape index: {}]
  %s2 = inlined_call_operand.vmem [shape: bf16[288,25], index: 2, kind: input, shape index: {}]
  %s3 = inlined_call_operand.vmem [shape: bf16[288,25], index: 3, kind: input, shape index: {}]
  %s4 = inlined_call_operand.vmem [shape: bf16[25,128], index: 4, kind: input, shape index: {}]
  %s5 = inlined_call_operand.vmem [shape: f32[1,128], index: 5, kind: input, shape index: {}]
  %s6 = inlined_call_operand.vmem [shape: f32[288,128], index: 6, kind: output, shape index: {}]
  %s7 = sld [smem:[#allocation0]]
  $region105: #{lenet_forward.3} parent=0
    _
  %s9 = ssub.s32 1, %s7
  %s10 = scalar_select 0, %s9, %s7
  $region1: #{lenet_forward.3} parent=0
    #allocation2 [shape = 'u8[262144]{0}', space=vmem, size = 0x40000, scoped, tag = 'output window, operand 0']
    loop: start=0, step=1, limit=4
    $region2: #{lenet_forward.3} parent=1 // loop_pre_header
      _
    $region3: #{lenet_forward.3} parent=1 // loop_header
      %s12 = sphi 0, %s16
      %p13 = scmp.ge.s32.totalorder %s12, 4
      %s22 = sphi 0, %s24
      %s25 = sphi 0, %s22
      %s26 = sphi 0, %s25
      %s42 = sphi 0, %s26
      %s48 = sphi 0, %s50
      %s51 = sphi 0, %s48
      %s52 = sphi 0, %s51
      %s68 = sphi 0, %s52
      %s74 = sphi 0, %s76
      %s77 = sphi 0, %s74
      %s78 = sphi 0, %s77
      %s94 = sphi 0, %s78
      %s100 = sphi 0, %s102
      %s103 = sphi 0, %s100
      %s104 = sphi 0, %s103
      %s120 = sphi 0, %s104
      %s124 = sphi 0, %s124
      %s126 = sphi 0, %s124
      %s127 = sphi 0, %s126
      %s141 = sphi 0, %s127
      %s145 = sphi 0, %s145
      %s147 = sphi 0, %s145
      %s148 = sphi 0, %s147
      %s162 = sphi 0, %s148
      %s168 = sphi 0, %s170
      %s171 = sphi 0, %s168
      %s172 = sphi 0, %s171
      %s188 = sphi 0, %s172
    $region4: #{lenet_forward.3} parent=1 // loop_header_branch
      %15 = sbr.rel (%p13) target = $region8
    $region5: #{lenet_forward.3} parent=1 // loop_body
      %s17 = ssub.s32 %s12, 1
      %s18 = ssub.s32 %s12, 2
      %s19 = sadd.s32 %s12, 1
      %s20 = ssub.s32 %s12, %s19
      %p21 = scmp.eq.s32.totalorder %s20, 0
      %s23 = sadd.s32 %s22, 1
      %s24 = scalar_select %p21, %s22, %s23
      %p27 = pneg %p21
      %p28 = scmp.eq.s32.totalorder %s12, 1
      %p29 = por %p27, %p28
      %p30 = scmp.ne.s32.totalorder %s22, %s25
      %p31 = scmp.eq.s32.totalorder %s12, 0
      %p32 = por %p30, %p31
      %p33 = scmp.ne.s32.totalorder %s22, %s25
      %p34 = scmp.eq.s32.totalorder %s17, 1
      %p35 = por %p33, %p34
      %p36 = scmp.ne.s32.totalorder %s25, %s26
      %p37 = scmp.eq.s32.totalorder %s17, 0
      %p38 = por %p36, %p37
      %p39 = scmp.ne.s32.totalorder %s25, %s26
      %p40 = scmp.eq.s32.totalorder %s18, 1
      %p41 = por %p39, %p40
      %p43 = scmp.ne.s32.totalorder %s26, %s42
      %p44 = scmp.eq.s32.totalorder %s18, 0
      %p45 = por %p43, %p44
      %s46 = ssub.s32 %s12, %s19
      %p47 = scmp.eq.s32.totalorder %s46, 0
      %s49 = sadd.s32 %s48, 1
      %s50 = scalar_select %p47, %s48, %s49
      %p53 = pneg %p47
      %p54 = scmp.eq.s32.totalorder %s12, 1
      %p55 = por %p53, %p54
      %p56 = scmp.ne.s32.totalorder %s48, %s51
      %p57 = scmp.eq.s32.totalorder %s12, 0
      %p58 = por %p56, %p57
      %p59 = scmp.ne.s32.totalorder %s48, %s51
      %p60 = scmp.eq.s32.totalorder %s17, 1
      %p61 = por %p59, %p60
      %p62 = scmp.ne.s32.totalorder %s51, %s52
      %p63 = scmp.eq.s32.totalorder %s17, 0
      %p64 = por %p62, %p63
      %p65 = scmp.ne.s32.totalorder %s51, %s52
      %p66 = scmp.eq.s32.totalorder %s18, 1
      %p67 = por %p65, %p66
      %p69 = scmp.ne.s32.totalorder %s52, %s68
      %p70 = scmp.eq.s32.totalorder %s18, 0
      %p71 = por %p69, %p70
      %s72 = ssub.s32 %s12, %s19
      %p73 = scmp.eq.s32.totalorder %s72, 0
      %s75 = sadd.s32 %s74, 1
      %s76 = scalar_select %p73, %s74, %s75
      %p79 = pneg %p73
      %p80 = scmp.eq.s32.totalorder %s12, 1
      %p81 = por %p79, %p80
      %p82 = scmp.ne.s32.totalorder %s74, %s77
      %p83 = scmp.eq.s32.totalorder %s12, 0
      %p84 = por %p82, %p83
      %p85 = scmp.ne.s32.totalorder %s74, %s77
      %p86 = scmp.eq.s32.totalorder %s17, 1
      %p87 = por %p85, %p86
      %p88 = scmp.ne.s32.totalorder %s77, %s78
      %p89 = scmp.eq.s32.totalorder %s17, 0
      %p90 = por %p88, %p89
      %p91 = scmp.ne.s32.totalorder %s77, %s78
      %p92 = scmp.eq.s32.totalorder %s18, 1
      %p93 = por %p91, %p92
      %p95 = scmp.ne.s32.totalorder %s78, %s94
      %p96 = scmp.eq.s32.totalorder %s18, 0
      %p97 = por %p95, %p96
      %s98 = ssub.s32 %s12, %s19
      %p99 = scmp.eq.s32.totalorder %s98, 0
      %s101 = sadd.s32 %s100, 1
      %s102 = scalar_select %p99, %s100, %s101
      %p105 = pneg %p99
      %p106 = scmp.eq.s32.totalorder %s12, 1
      %p107 = por %p105, %p106
      %p108 = scmp.ne.s32.totalorder %s100, %s103
      %p109 = scmp.eq.s32.totalorder %s12, 0
      %p110 = por %p108, %p109
      %p111 = scmp.ne.s32.totalorder %s100, %s103
      %p112 = scmp.eq.s32.totalorder %s17, 1
      %p113 = por %p111, %p112
      %p114 = scmp.ne.s32.totalorder %s103, %s104
      %p115 = scmp.eq.s32.totalorder %s17, 0
      %p116 = por %p114, %p115
      %p117 = scmp.ne.s32.totalorder %s103, %s104
      %p118 = scmp.eq.s32.totalorder %s18, 1
      %p119 = por %p117, %p118
      %p121 = scmp.ne.s32.totalorder %s104, %s120
      %p122 = scmp.eq.s32.totalorder %s18, 0
      %p123 = por %p121, %p122
      %s125 = sadd.s32 %s124, 1
      %p128 = scmp.eq.s32.totalorder %s12, 1
      %p129 = scmp.ne.s32.totalorder %s124, %s126
      %p130 = scmp.eq.s32.totalorder %s12, 0
      %p131 = por %p129, %p130
      %p132 = scmp.ne.s32.totalorder %s124, %s126
      %p133 = scmp.eq.s32.totalorder %s17, 1
      %p134 = por %p132, %p133
      %p135 = scmp.ne.s32.totalorder %s126, %s127
      %p136 = scmp.eq.s32.totalorder %s17, 0
      %p137 = por %p135, %p136
      %p138 = scmp.ne.s32.totalorder %s126, %s127
      %p139 = scmp.eq.s32.totalorder %s18, 1
      %p140 = por %p138, %p139
      %p142 = scmp.ne.s32.totalorder %s127, %s141
      %p143 = scmp.eq.s32.totalorder %s18, 0
      %p144 = por %p142, %p143
      %s146 = sadd.s32 %s145, 1
      %p149 = scmp.eq.s32.totalorder %s12, 1
      %p150 = scmp.ne.s32.totalorder %s145, %s147
      %p151 = scmp.eq.s32.totalorder %s12, 0
      %p152 = por %p150, %p151
      %p153 = scmp.ne.s32.totalorder %s145, %s147
      %p154 = scmp.eq.s32.totalorder %s17, 1
      %p155 = por %p153, %p154
      %p156 = scmp.ne.s32.totalorder %s147, %s148
      %p157 = scmp.eq.s32.totalorder %s17, 0
      %p158 = por %p156, %p157
      %p159 = scmp.ne.s32.totalorder %s147, %s148
      %p160 = scmp.eq.s32.totalorder %s18, 1
      %p161 = por %p159, %p160
      %p163 = scmp.ne.s32.totalorder %s148, %s162
      %p164 = scmp.eq.s32.totalorder %s18, 0
      %p165 = por %p163, %p164
      %s166 = ssub.s32 %s12, %s19
      %p167 = scmp.eq.s32.totalorder %s166, 0
      %s169 = sadd.s32 %s168, 1
      %s170 = scalar_select %p167, %s168, %s169
      %p173 = pneg %p167
      %p174 = scmp.eq.s32.totalorder %s12, 1
      %p175 = por %p173, %p174
      %p176 = scmp.ne.s32.totalorder %s168, %s171
      %p177 = scmp.eq.s32.totalorder %s12, 0
      %p178 = por %p176, %p177
      %p179 = scmp.ne.s32.totalorder %s168, %s171
      %p180 = scmp.eq.s32.totalorder %s17, 1
      %p181 = por %p179, %p180
      %p182 = scmp.ne.s32.totalorder %s171, %s172
      %p183 = scmp.eq.s32.totalorder %s17, 0
      %p184 = por %p182, %p183
      %p185 = scmp.ne.s32.totalorder %s171, %s172
      %p186 = scmp.eq.s32.totalorder %s18, 1
      %p187 = por %p185, %p186
      %p189 = scmp.ne.s32.totalorder %s172, %s188
      %p190 = scmp.eq.s32.totalorder %s18, 0
      %p191 = por %p189, %p190
      %p192 = scmp.le.s32.totalorder 1, %s12
      %p193 = scmp.lt.s32.totalorder %s12, 3
      %p194 = pnand %p192, %p193
      %p195 = pneg %p194
      // Predicated region
      $region9: #{lenet_forward.3} parent=5 // pred_check
        _
      $region10: #{lenet_forward.3} parent=5 // pred_check_branch
        %197 = sbr.rel (%p194) target = $region12
      $region11: #{lenet_forward.3} parent=5 // pred_region
        %s198 = ssub.s32 %s12, 1
        // Predicated region
        $region13: #{lenet_forward.3} parent=11 // pred_check
          %p199 = pneg %p137
        $region14: #{lenet_forward.3} parent=11 // pred_check_branch
          %201 = sbr.rel (%p199) target = $region16
        $region15: #{lenet_forward.3} parent=11 // pred_region
          _
        $region16: #{lenet_forward.3} parent=11 // pred_fallthru
          _
        // Predicated region
        $region17: #{lenet_forward.3} parent=11 // pred_check
          %p202 = pneg %p158
        $region18: #{lenet_forward.3} parent=11 // pred_check_branch
          %204 = sbr.rel (%p202) target = $region20
        $region19: #{lenet_forward.3} parent=11 // pred_region
          _
        $region20: #{lenet_forward.3} parent=11 // pred_fallthru
          _
      $region12: #{lenet_forward.3} parent=5 // pred_fallthru
        _
      %p205 = scmp.lt.s32.totalorder %s12, 2
      // Predicated region
      $region21: #{lenet_forward.3} parent=5 // pred_check
        %p206 = pneg %p205
      $region22: #{lenet_forward.3} parent=5 // pred_check_branch
        %208 = sbr.rel (%p206) target = $region24
      $region23: #{lenet_forward.3} parent=5 // pred_region
        // Predicated region
        $region25: #{lenet_forward.3} parent=23 // pred_check
          %p209 = pneg %p32
        $region26: #{lenet_forward.3} parent=23 // pred_check_branch
          %211 = sbr.rel (%p209) target = $region28
        $region27: #{lenet_forward.3} parent=23 // pred_region
          %s212 = smul.u32 32, %s12
          %s213 = ssub.s32 36, %s212
          %p214 = scmp.lt.s32.totalorder %s213, 32
          %s215 = scalar_select %p214, %s213, 32
          %s216 = smul.u32 64, %s215
          %p217 = scmp.lt.s32.totalorder %s212, 35
          %s218 = scalar_select %p217, %s212, 35
          %s219 = smul.addr %s218, 4
          %s220 = scalar_lea.vmem %s0, %s219
          %s221 = smul.u32 32, %s12
          %s222 = ssub.s32 36, %s221
          %p223 = scmp.lt.s32.totalorder %s222, 32
          %s224 = scalar_select %p223, %s222, 32
          %s225 = smul.u32 64, %s224
        $region28: #{lenet_forward.3} parent=23 // pred_fallthru
          _
        // Predicated region
        $region29: #{lenet_forward.3} parent=23 // pred_check
          %p226 = pneg %p58
        $region30: #{lenet_forward.3} parent=23 // pred_check_branch
          %228 = sbr.rel (%p226) target = $region32
        $region31: #{lenet_forward.3} parent=23 // pred_region
          %s229 = smul.u32 32, %s12
          %s230 = ssub.s32 36, %s229
          %p231 = scmp.lt.s32.totalorder %s230, 32
          %s232 = scalar_select %p231, %s230, 32
          %s233 = smul.u32 64, %s232
          %p234 = scmp.lt.s32.totalorder %s229, 35
          %s235 = scalar_select %p234, %s229, 35
          %s236 = smul.addr %s235, 4
          %s237 = scalar_lea.vmem %s1, %s236
          %s238 = smul.u32 32, %s12
          %s239 = ssub.s32 36, %s238
          %p240 = scmp.lt.s32.totalorder %s239, 32
          %s241 = scalar_select %p240, %s239, 32
          %s242 = smul.u32 64, %s241
        $region32: #{lenet_forward.3} parent=23 // pred_fallthru
          _
        // Predicated region
        $region33: #{lenet_forward.3} parent=23 // pred_check
          %p243 = pneg %p84
        $region34: #{lenet_forward.3} parent=23 // pred_check_branch
          %245 = sbr.rel (%p243) target = $region36
        $region35: #{lenet_forward.3} parent=23 // pred_region
          %s246 = smul.u32 32, %s12
          %s247 = ssub.s32 36, %s246
          %p248 = scmp.lt.s32.totalorder %s247, 32
          %s249 = scalar_select %p248, %s247, 32
          %s250 = smul.u32 64, %s249
          %p251 = scmp.lt.s32.totalorder %s246, 35
          %s252 = scalar_select %p251, %s246, 35
          %s253 = smul.addr %s252, 4
          %s254 = scalar_lea.vmem %s2, %s253
          %s255 = smul.u32 32, %s12
          %s256 = ssub.s32 36, %s255
          %p257 = scmp.lt.s32.totalorder %s256, 32
          %s258 = scalar_select %p257, %s256, 32
          %s259 = smul.u32 64, %s258
        $region36: #{lenet_forward.3} parent=23 // pred_fallthru
          _
        // Predicated region
        $region37: #{lenet_forward.3} parent=23 // pred_check
          %p260 = pneg %p110
        $region38: #{lenet_forward.3} parent=23 // pred_check_branch
          %262 = sbr.rel (%p260) target = $region40
        $region39: #{lenet_forward.3} parent=23 // pred_region
          %s263 = smul.u32 32, %s12
          %s264 = ssub.s32 36, %s263
          %p265 = scmp.lt.s32.totalorder %s264, 32
          %s266 = scalar_select %p265, %s264, 32
          %s267 = smul.u32 64, %s266
          %p268 = scmp.lt.s32.totalorder %s263, 35
          %s269 = scalar_select %p268, %s263, 35
          %s270 = smul.addr %s269, 4
          %s271 = scalar_lea.vmem %s3, %s270
          %s272 = smul.u32 32, %s12
          %s273 = ssub.s32 36, %s272
          %p274 = scmp.lt.s32.totalorder %s273, 32
          %s275 = scalar_select %p274, %s273, 32
          %s276 = smul.u32 64, %s275
        $region40: #{lenet_forward.3} parent=23 // pred_fallthru
          _
      $region24: #{lenet_forward.3} parent=5 // pred_fallthru
        _
      %p277 = scmp.le.s32.totalorder 1, %s12
      %p278 = scmp.lt.s32.totalorder %s12, 3
      %p279 = pnand %p277, %p278
      %p280 = pneg %p279
      // Predicated region
      $region41: #{lenet_forward.3} parent=5 // pred_check
        _
      $region42: #{lenet_forward.3} parent=5 // pred_check_branch
        %282 = sbr.rel (%p279) target = $region44
      $region43: #{lenet_forward.3} parent=5 // pred_region
        %s283 = ssub.s32 %s12, 1
        %s284 = smul.u32 32, %s17
        %s285 = ssub.s32 36, %s284
        %p286 = scmp.lt.s32.totalorder %s285, 32
        %s287 = scalar_select %p286, %s285, 32
        %s288 = smul.u32 64, %s287
        %p289 = scmp.lt.s32.totalorder %s284, 35
        %s290 = scalar_select %p289, %s284, 35
        %s291 = smul.addr %s290, 4
        %s292 = scalar_lea.vmem %s0, %s291
        %p293 = pneg %p38
        %p294 = pneg %p35
        %s295 = smul.u32 32, %s17
        %s296 = ssub.s32 36, %s295
        %p297 = scmp.lt.s32.totalorder %s296, 32
        %s298 = scalar_select %p297, %s296, 32
        %s299 = smul.u32 64, %s298
        %p300 = scmp.lt.s32.totalorder %s295, 35
        %s301 = scalar_select %p300, %s295, 35
        %s302 = smul.addr %s301, 4
        %s303 = scalar_lea.vmem %s1, %s302
        %p304 = pneg %p64
        %p305 = pneg %p61
        %s306 = smul.u32 32, %s17
        %s307 = ssub.s32 36, %s306
        %p308 = scmp.lt.s32.totalorder %s307, 32
        %s309 = scalar_select %p308, %s307, 32
        %s310 = smul.u32 64, %s309
        %p311 = scmp.lt.s32.totalorder %s306, 35
        %s312 = scalar_select %p311, %s306, 35
        %s313 = smul.addr %s312, 4
        %s314 = scalar_lea.vmem %s2, %s313
        %p315 = pneg %p90
        %p316 = pneg %p87
        %s317 = smul.u32 32, %s17
        %s318 = ssub.s32 36, %s317
        %p319 = scmp.lt.s32.totalorder %s318, 32
        %s320 = scalar_select %p319, %s318, 32
        %s321 = smul.u32 64, %s320
        %p322 = scmp.lt.s32.totalorder %s317, 35
        %s323 = scalar_select %p322, %s317, 35
        %s324 = smul.addr %s323, 4
        %s325 = scalar_lea.vmem %s3, %s324
        %p326 = pneg %p116
        %p327 = pneg %p113
        %p328 = pneg %p137
        %p329 = pneg %p134
        %p330 = pneg %p158
        %p331 = pneg %p155
        %p332 = pneg %p184
        %p333 = pneg %p181
        %s334 = sand.u32 %s171, 1
        %s335 = sand.u32 %s171, 1
        %s336 = smul.addr %s335, 256
        %s337 = scalar_lea.vmem [#allocation2], %s336
        %s338 = smul.u32 32, %s17
        %s339 = ssub.s32 36, %s338
        %p340 = scmp.lt.s32.totalorder %s339, 32
        %s341 = scalar_select %p340, %s339, 32
        %s342 = smul.u32 64, %s341
        %p343 = scmp.lt.s32.totalorder %s338, 35
        %s344 = scalar_select %p343, %s338, 35
        %s345 = smul.addr %s344, 4
        %s346 = scalar_lea.vmem %s0, %s345
        %s347 = smul.u32 32, %s17
        %s348 = ssub.s32 36, %s347
        %p349 = scmp.lt.s32.totalorder %s348, 32
        %s350 = scalar_select %p349, %s348, 32
        %s351 = smul.u32 64, %s350
        %s352 = smul.u32 32, %s17
        %s353 = ssub.s32 36, %s352
        %p354 = scmp.lt.s32.totalorder %s353, 32
        %s355 = scalar_select %p354, %s353, 32
        %s356 = smul.u32 64, %s355
        %p357 = scmp.lt.s32.totalorder %s352, 35
        %s358 = scalar_select %p357, %s352, 35
        %s359 = smul.addr %s358, 4
        %s360 = scalar_lea.vmem %s1, %s359
        %s361 = smul.u32 32, %s17
        %s362 = ssub.s32 36, %s361
        %p363 = scmp.lt.s32.totalorder %s362, 32
        %s364 = scalar_select %p363, %s362, 32
        %s365 = smul.u32 64, %s364
        %s366 = smul.u32 32, %s17
        %s367 = ssub.s32 36, %s366
        %p368 = scmp.lt.s32.totalorder %s367, 32
        %s369 = scalar_select %p368, %s367, 32
        %s370 = smul.u32 64, %s369
        %p371 = scmp.lt.s32.totalorder %s366, 35
        %s372 = scalar_select %p371, %s366, 35
        %s373 = smul.addr %s372, 4
        %s374 = scalar_lea.vmem %s2, %s373
        %s375 = smul.u32 32, %s17
        %s376 = ssub.s32 36, %s375
        %p377 = scmp.lt.s32.totalorder %s376, 32
        %s378 = scalar_select %p377, %s376, 32
        %s379 = smul.u32 64, %s378
        %s380 = smul.u32 32, %s17
        %s381 = ssub.s32 36, %s380
        %p382 = scmp.lt.s32.totalorder %s381, 32
        %s383 = scalar_select %p382, %s381, 32
        %s384 = smul.u32 64, %s383
        %p385 = scmp.lt.s32.totalorder %s380, 35
        %s386 = scalar_select %p385, %s380, 35
        %s387 = smul.addr %s386, 4
        %s388 = scalar_lea.vmem %s3, %s387
        %s389 = smul.u32 32, %s17
        %s390 = ssub.s32 36, %s389
        %p391 = scmp.lt.s32.totalorder %s390, 32
        %s392 = scalar_select %p391, %s390, 32
        %s393 = smul.u32 64, %s392
        %s394 = smul.u32 32, %s17
        %s395 = ssub.s32 36, %s394
        %p396 = scmp.lt.s32.totalorder %s395, 32
        %s397 = scalar_select %p396, %s395, 32
        %s398 = smul.u32 128, %s397
        %v400 = vld [vmem:[%s4] sm:$0xf]
        %v401 = vld [vmem:[%s4 + $0x4] sm:$0xf]
        %v402 = vld [vmem:[%s4 + $0x8] sm:$0xf]
        %v403 = vld [vmem:[%s4 + $0xc] sm:$0x1]
        %v404 = vld [vmem:[%s346] sm:$0xf]
        %v405 = vld [vmem:[%s346 + $0x4] sm:$0xf]
        %v406 = vld [vmem:[%s346 + $0x8] sm:$0xf]
        %v407 = vld [vmem:[%s346 + $0xc] sm:$0xf]
        %v408 = vld [vmem:[%s346 + $0x10] sm:$0xf]
        %v409 = vld [vmem:[%s346 + $0x14] sm:$0xf]
        %v410 = vld [vmem:[%s346 + $0x18] sm:$0xf]
        %v411 = vld [vmem:[%s346 + $0x1c] sm:$0xf]
        %v412 = vld [vmem:[%s346 + $0x20] sm:$0xf]
        %v413 = vld [vmem:[%s346 + $0x24] sm:$0xf]
        %v414 = vld [vmem:[%s346 + $0x28] sm:$0xf]
        %v415 = vld [vmem:[%s346 + $0x2c] sm:$0xf]
        %v416 = vld [vmem:[%s346 + $0x30] sm:$0xf]
        %v417 = vld [vmem:[%s346 + $0x34] sm:$0xf]
        %v418 = vld [vmem:[%s346 + $0x38] sm:$0xf]
        %v419 = vld [vmem:[%s346 + $0x3c] sm:$0xf]
        %v420 = vld [vmem:[%s346 + $0x40] sm:$0xf]
        %v421 = vld [vmem:[%s346 + $0x44] sm:$0xf]
        %v422 = vld [vmem:[%s346 + $0x48] sm:$0xf]
        %v423 = vld [vmem:[%s346 + $0x4c] sm:$0xf]
        %v424 = vld [vmem:[%s346 + $0x50] sm:$0xf]
        %v425 = vld [vmem:[%s346 + $0x54] sm:$0xf]
        %v426 = vld [vmem:[%s346 + $0x58] sm:$0xf]
        %v427 = vld [vmem:[%s346 + $0x5c] sm:$0xf]
        %v428 = vld [vmem:[%s346 + $0x60] sm:$0xf]
        %v429 = vld [vmem:[%s346 + $0x64] sm:$0xf]
        %v430 = vld [vmem:[%s346 + $0x68] sm:$0xf]
        %v431 = vld [vmem:[%s346 + $0x6c] sm:$0xf]
        %v432 = vld [vmem:[%s346 + $0x70] sm:$0xf]
        %v433 = vld [vmem:[%s346 + $0x74] sm:$0xf]
        %v434 = vld [vmem:[%s346 + $0x78] sm:$0xf]
        %v435 = vld [vmem:[%s346 + $0x7c] sm:$0xf]
        %v468 = vunpack.c.l.b16 %v404
        %v469 = vunpack.c.l.b16 %v405
        %v470 = vunpack.c.l.b16 %v406
        %v471 = vunpack.c.l.b16 %v407
        %v472 = vunpack.c.l.b16 %v408
        %v473 = vunpack.c.l.b16 %v409
        %v474 = vunpack.c.l.b16 %v410
        %v475 = vunpack.c.l.b16 %v411
        %v476 = vunpack.c.l.b16 %v412
        %v477 = vunpack.c.l.b16 %v413
        %v478 = vunpack.c.l.b16 %v414
        %v479 = vunpack.c.l.b16 %v415
        %v480 = vunpack.c.l.b16 %v416
        %v481 = vunpack.c.l.b16 %v417
        %v482 = vunpack.c.l.b16 %v418
        %v483 = vunpack.c.l.b16 %v419
        %v484 = vunpack.c.l.b16 %v420
        %v485 = vunpack.c.l.b16 %v421
        %v486 = vunpack.c.l.b16 %v422
        %v487 = vunpack.c.l.b16 %v423
        %v488 = vunpack.c.l.b16 %v424
        %v489 = vunpack.c.l.b16 %v425
        %v490 = vunpack.c.l.b16 %v426
        %v491 = vunpack.c.l.b16 %v427
        %v492 = vunpack.c.l.b16 %v428
        %v493 = vunpack.c.l.b16 %v429
        %v494 = vunpack.c.l.b16 %v430
        %v495 = vunpack.c.l.b16 %v431
        %v496 = vunpack.c.l.b16 %v432
        %v497 = vunpack.c.l.b16 %v433
        %v498 = vunpack.c.l.b16 %v434
        %v499 = vunpack.c.l.b16 %v435
        %v500 = vpack.c.b16 %v469, %v468
        %v501 = vpack.c.b16 %v471, %v470
        %v502 = vpack.c.b16 %v473, %v472
        %v503 = vpack.c.b16 %v475, %v474
        %v504 = vpack.c.b16 %v477, %v476
        %v505 = vpack.c.b16 %v479, %v478
        %v506 = vpack.c.b16 %v481, %v480
        %v507 = vpack.c.b16 %v483, %v482
        %v508 = vpack.c.b16 %v485, %v484
        %v509 = vpack.c.b16 %v487, %v486
        %v510 = vpack.c.b16 %v489, %v488
        %v511 = vpack.c.b16 %v491, %v490
        %v512 = vpack.c.b16 %v493, %v492
        %v513 = vpack.c.b16 %v495, %v494
        %v514 = vpack.c.b16 %v497, %v496
        %v515 = vpack.c.b16 %v499, %v498
        %v520 = vunpack.c.l.b16 %v400
        %v521 = vunpack.c.l.b16 %v401
        %v522 = vunpack.c.l.b16 %v402
        %v523 = vunpack.c.l.b16 %v403
        %v524 = vpack.c.b16 %v521, %v520
        %v525 = vpack.c.b16 %v523, %v522
        %vm527 = vcmask 203776
        %v529 = vsel %vm527, %v500, 0
        %v532 = vsel %vm527, %v501, 0
        %v535 = vsel %vm527, %v502, 0
        %v538 = vsel %vm527, %v503, 0
        %v541 = vsel %vm527, %v504, 0
        %v544 = vsel %vm527, %v505, 0
        %v547 = vsel %vm527, %v506, 0
        %v550 = vsel %vm527, %v507, 0
        %v553 = vsel %vm527, %v508, 0
        %v556 = vsel %vm527, %v509, 0
        %v559 = vsel %vm527, %v510, 0
        %v562 = vsel %vm527, %v511, 0
        %v565 = vsel %vm527, %v512, 0
        %v568 = vsel %vm527, %v513, 0
        %v571 = vsel %vm527, %v514, 0
        %v574 = vsel %vm527, %v515, 0
        %vm576 = vcmask 1043456
        %vm577 = vcmask 1044480
        %v578 = vsel %vm576, 4294967295, 65535
        %v579 = vsel %vm577, %v578, 0
        %v581 = vand.u32 %v525, %v579
        %583 = vmatprep.subr.bf16.mxu0 0
        %584 = vmatpush1.bf16.msra.mxu0 %v524
        %585 = vmatprep.subr.bf16.mxu0 0
        %586 = vmatpush1.bf16.msra.mxu0 %v581
        %587 = vmatprep.subr.bf16.mxu0 0
        %588 = vmatpush1.bf16.msra.mxu0 0
        %589 = vmatprep.subr.bf16.mxu0 0
        %590 = vmatpush1.bf16.msra.mxu0 0
        %591 = vmatprep.subr.bf16.mxu0 0
        %592 = vmatpush1.bf16.msra.mxu0 0
        %593 = vmatprep.subr.bf16.mxu0 0
        %594 = vmatpush1.bf16.msra.mxu0 0
        %595 = vmatprep.subr.bf16.mxu0 0
        %596 = vmatpush1.bf16.msra.mxu0 0
        %597 = vmatprep.subr.bf16.mxu0 0
        %598 = vmatpush1.bf16.msra.mxu0 0
        %599 = vmatprep.subr.bf16.mxu0 0
        %600 = vmatpush1.bf16.msra.mxu0 0
        %601 = vmatprep.subr.bf16.mxu0 0
        %602 = vmatpush1.bf16.msra.mxu0 0
        %603 = vmatprep.subr.bf16.mxu0 0
        %604 = vmatpush1.bf16.msra.mxu0 0
        %605 = vmatprep.subr.bf16.mxu0 0
        %606 = vmatpush1.bf16.msra.mxu0 0
        %607 = vmatprep.subr.bf16.mxu0 0
        %608 = vmatpush1.bf16.msra.mxu0 0
        %609 = vmatprep.subr.bf16.mxu0 0
        %610 = vmatpush1.bf16.msra.mxu0 0
        %611 = vmatprep.subr.bf16.mxu0 0
        %612 = vmatpush1.bf16.msra.mxu0 0
        %613 = vmatprep.subr.bf16.mxu0 0
        %614 = vmatpush1.bf16.msra.mxu0 0
        %615 = vmatprep.mubr.bf16.mxu0 0
        %616 = vmatmul.mubr.bf16.gmra.mrb[0].mxu0 %v529
        %v617 = vpop.f32.mrb[0].mxu0
        %v618 = vadd.f32 0.0, %v617
        %v619 = vpop.f32.mrb[0].mxu0
        %v620 = vpop.f32.mrb[0].mxu0
        %v621 = vadd.f32 0.0, %v620
        %v622 = vpop.f32.mrb[0].mxu0
        %623 = vmatprep.mubr.bf16.mxu0 0
        %624 = vmatmul.mubr.bf16.gmra.mrb[0].mxu0 %v532
        %v625 = vpop.f32.mrb[0].mxu0
        %v626 = vadd.f32 0.0, %v625
        %v627 = vpop.f32.mrb[0].mxu0
        %v628 = vpop.f32.mrb[0].mxu0
        %v629 = vadd.f32 0.0, %v628
        %v630 = vpop.f32.mrb[0].mxu0
        %631 = vmatprep.mubr.bf16.mxu0 0
        %632 = vmatmul.mubr.bf16.gmra.mrb[0].mxu0 %v535
        %v633 = vpop.f32.mrb[0].mxu0
        %v634 = vadd.f32 0.0, %v633
        %v635 = vpop.f32.mrb[0].mxu0
        %v636 = vpop.f32.mrb[0].mxu0
        %v637 = vadd.f32 0.0, %v636
        %v638 = vpop.f32.mrb[0].mxu0
        %639 = vmatprep.mubr.bf16.mxu0 0
        %640 = vmatmul.mubr.bf16.gmra.mrb[0].mxu0 %v538
        %v641 = vpop.f32.mrb[0].mxu0
        %v642 = vadd.f32 0.0, %v641
        %v643 = vpop.f32.mrb[0].mxu0
        %v644 = vpop.f32.mrb[0].mxu0
        %v645 = vadd.f32 0.0, %v644
        %v646 = vpop.f32.mrb[0].mxu0
        %647 = vmatprep.mubr.bf16.mxu0 0
        %648 = vmatmul.mubr.bf16.gmra.mrb[0].mxu0 %v541
        %v649 = vpop.f32.mrb[0].mxu0
        %v650 = vadd.f32 0.0, %v649
        %v651 = vpop.f32.mrb[0].mxu0
        %v652 = vpop.f32.mrb[0].mxu0
        %v653 = vadd.f32 0.0, %v652
        %v654 = vpop.f32.mrb[0].mxu0
        %655 = vmatprep.mubr.bf16.mxu0 0
        %656 = vmatmul.mubr.bf16.gmra.mrb[0].mxu0 %v544
        %v657 = vpop.f32.mrb[0].mxu0
        %v658 = vadd.f32 0.0, %v657
        %v659 = vpop.f32.mrb[0].mxu0
        %v660 = vpop.f32.mrb[0].mxu0
        %v661 = vadd.f32 0.0, %v660
        %v662 = vpop.f32.mrb[0].mxu0
        %663 = vmatprep.mubr.bf16.mxu0 0
        %664 = vmatmul.mubr.bf16.gmra.mrb[0].mxu0 %v547
        %v665 = vpop.f32.mrb[0].mxu0
        %v666 = vadd.f32 0.0, %v665
        %v667 = vpop.f32.mrb[0].mxu0
        %v668 = vpop.f32.mrb[0].mxu0
        %v669 = vadd.f32 0.0, %v668
        %v670 = vpop.f32.mrb[0].mxu0
        %671 = vmatprep.mubr.bf16.mxu0 0
        %672 = vmatmul.mubr.bf16.gmra.mrb[0].mxu0 %v550
        %v673 = vpop.f32.mrb[0].mxu0
        %v674 = vadd.f32 0.0, %v673
        %v675 = vpop.f32.mrb[0].mxu0
        %v676 = vpop.f32.mrb[0].mxu0
        %v677 = vadd.f32 0.0, %v676
        %v678 = vpop.f32.mrb[0].mxu0
        %679 = vmatprep.mubr.bf16.mxu0 0
        %680 = vmatmul.mubr.bf16.gmra.mrb[0].mxu0 %v553
        %v681 = vpop.f32.mrb[0].mxu0
        %v682 = vadd.f32 0.0, %v681
        %v683 = vpop.f32.mrb[0].mxu0
        %v684 = vpop.f32.mrb[0].mxu0
        %v685 = vadd.f32 0.0, %v684
        %v686 = vpop.f32.mrb[0].mxu0
        %687 = vmatprep.mubr.bf16.mxu0 0
        %688 = vmatmul.mubr.bf16.gmra.mrb[0].mxu0 %v556
        %v689 = vpop.f32.mrb[0].mxu0
        %v690 = vadd.f32 0.0, %v689
        %v691 = vpop.f32.mrb[0].mxu0
        %v692 = vpop.f32.mrb[0].mxu0
        %v693 = vadd.f32 0.0, %v692
        %v694 = vpop.f32.mrb[0].mxu0
        %695 = vmatprep.mubr.bf16.mxu0 0
        %696 = vmatmul.mubr.bf16.gmra.mrb[0].mxu0 %v559
        %v697 = vpop.f32.mrb[0].mxu0
        %v698 = vadd.f32 0.0, %v697
        %v699 = vpop.f32.mrb[0].mxu0
        %v700 = vpop.f32.mrb[0].mxu0
        %v701 = vadd.f32 0.0, %v700
        %v702 = vpop.f32.mrb[0].mxu0
        %703 = vmatprep.mubr.bf16.mxu0 0
        %704 = vmatmul.mubr.bf16.gmra.mrb[0].mxu0 %v562
        %v705 = vpop.f32.mrb[0].mxu0
        %v706 = vadd.f32 0.0, %v705
        %v707 = vpop.f32.mrb[0].mxu0
        %v708 = vpop.f32.mrb[0].mxu0
        %v709 = vadd.f32 0.0, %v708
        %v710 = vpop.f32.mrb[0].mxu0
        %711 = vmatprep.mubr.bf16.mxu0 0
        %712 = vmatmul.mubr.bf16.gmra.mrb[0].mxu0 %v565
        %v713 = vpop.f32.mrb[0].mxu0
        %v714 = vadd.f32 0.0, %v713
        %v715 = vpop.f32.mrb[0].mxu0
        %v716 = vpop.f32.mrb[0].mxu0
        %v717 = vadd.f32 0.0, %v716
        %v718 = vpop.f32.mrb[0].mxu0
        %719 = vmatprep.mubr.bf16.mxu0 0
        %720 = vmatmul.mubr.bf16.gmra.mrb[0].mxu0 %v568
        %v721 = vpop.f32.mrb[0].mxu0
        %v722 = vadd.f32 0.0, %v721
        %v723 = vpop.f32.mrb[0].mxu0
        %v724 = vpop.f32.mrb[0].mxu0
        %v725 = vadd.f32 0.0, %v724
        %v726 = vpop.f32.mrb[0].mxu0
        %727 = vmatprep.mubr.bf16.mxu0 0
        %728 = vmatmul.mubr.bf16.gmra.mrb[0].mxu0 %v571
        %v729 = vpop.f32.mrb[0].mxu0
        %v730 = vadd.f32 0.0, %v729
        %v731 = vpop.f32.mrb[0].mxu0
        %v732 = vpop.f32.mrb[0].mxu0
        %v733 = vadd.f32 0.0, %v732
        %v734 = vpop.f32.mrb[0].mxu0
        %735 = vmatprep.mubr.bf16.mxu0 0
        %736 = vmatmul.mubr.bf16.gmra.mrb[0].mxu0 %v574
        %v737 = vpop.f32.mrb[0].mxu0
        %v738 = vadd.f32 0.0, %v737
        %v739 = vpop.f32.mrb[0].mxu0
        %v740 = vpop.f32.mrb[0].mxu0
        %v741 = vadd.f32 0.0, %v740
        %v742 = vpop.f32.mrb[0].mxu0
        %743 = vdwg.mxu0
        %v744 = vld [vmem:[%s360] sm:$0xf]
        %v745 = vld [vmem:[%s360 + $0x4] sm:$0xf]
        %v746 = vld [vmem:[%s360 + $0x8] sm:$0xf]
        %v747 = vld [vmem:[%s360 + $0xc] sm:$0xf]
        %v748 = vld [vmem:[%s360 + $0x10] sm:$0xf]
        %v749 = vld [vmem:[%s360 + $0x14] sm:$0xf]
        %v750 = vld [vmem:[%s360 + $0x18] sm:$0xf]
        %v751 = vld [vmem:[%s360 + $0x1c] sm:$0xf]
        %v752 = vld [vmem:[%s360 + $0x20] sm:$0xf]
        %v753 = vld [vmem:[%s360 + $0x24] sm:$0xf]
        %v754 = vld [vmem:[%s360 + $0x28] sm:$0xf]
        %v755 = vld [vmem:[%s360 + $0x2c] sm:$0xf]
        %v756 = vld [vmem:[%s360 + $0x30] sm:$0xf]
        %v757 = vld [vmem:[%s360 + $0x34] sm:$0xf]
        %v758 = vld [vmem:[%s360 + $0x38] sm:$0xf]
        %v759 = vld [vmem:[%s360 + $0x3c] sm:$0xf]
        %v760 = vld [vmem:[%s360 + $0x40] sm:$0xf]
        %v761 = vld [vmem:[%s360 + $0x44] sm:$0xf]
        %v762 = vld [vmem:[%s360 + $0x48] sm:$0xf]
        %v763 = vld [vmem:[%s360 + $0x4c] sm:$0xf]
        %v764 = vld [vmem:[%s360 + $0x50] sm:$0xf]
        %v765 = vld [vmem:[%s360 + $0x54] sm:$0xf]
        %v766 = vld [vmem:[%s360 + $0x58] sm:$0xf]
        %v767 = vld [vmem:[%s360 + $0x5c] sm:$0xf]
        %v768 = vld [vmem:[%s360 + $0x60] sm:$0xf]
        %v769 = vld [vmem:[%s360 + $0x64] sm:$0xf]
        %v770 = vld [vmem:[%s360 + $0x68] sm:$0xf]
        %v771 = vld [vmem:[%s360 + $0x6c] sm:$0xf]
        %v772 = vld [vmem:[%s360 + $0x70] sm:$0xf]
        %v773 = vld [vmem:[%s360 + $0x74] sm:$0xf]
        %v774 = vld [vmem:[%s360 + $0x78] sm:$0xf]
        %v775 = vld [vmem:[%s360 + $0x7c] sm:$0xf]
        %v808 = vunpack.c.l.b16 %v744
        %v809 = vunpack.c.l.b16 %v745
        %v810 = vunpack.c.l.b16 %v746
        %v811 = vunpack.c.l.b16 %v747
        %v812 = vunpack.c.l.b16 %v748
        %v813 = vunpack.c.l.b16 %v749
        %v814 = vunpack.c.l.b16 %v750
        %v815 = vunpack.c.l.b16 %v751
        %v816 = vunpack.c.l.b16 %v752
        %v817 = vunpack.c.l.b16 %v753
        %v818 = vunpack.c.l.b16 %v754
        %v819 = vunpack.c.l.b16 %v755
        %v820 = vunpack.c.l.b16 %v756
        %v821 = vunpack.c.l.b16 %v757
        %v822 = vunpack.c.l.b16 %v758
        %v823 = vunpack.c.l.b16 %v759
        %v824 = vunpack.c.l.b16 %v760
        %v825 = vunpack.c.l.b16 %v761
        %v826 = vunpack.c.l.b16 %v762
        %v827 = vunpack.c.l.b16 %v763
        %v828 = vunpack.c.l.b16 %v764
        %v829 = vunpack.c.l.b16 %v765
        %v830 = vunpack.c.l.b16 %v766
        %v831 = vunpack.c.l.b16 %v767
        %v832 = vunpack.c.l.b16 %v768
        %v833 = vunpack.c.l.b16 %v769
        %v834 = vunpack.c.l.b16 %v770
        %v835 = vunpack.c.l.b16 %v771
        %v836 = vunpack.c.l.b16 %v772
        %v837 = vunpack.c.l.b16 %v773
        %v838 = vunpack.c.l.b16 %v774
        %v839 = vunpack.c.l.b16 %v775
        %v840 = vpack.c.b16 %v809, %v808
        %v841 = vpack.c.b16 %v811, %v810
        %v842 = vpack.c.b16 %v813, %v812
        %v843 = vpack.c.b16 %v815, %v814
        %v844 = vpack.c.b16 %v817, %v816
        %v845 = vpack.c.b16 %v819, %v818
        %v846 = vpack.c.b16 %v821, %v820
        %v847 = vpack.c.b16 %v823, %v822
        %v848 = vpack.c.b16 %v825, %v824
        %v849 = vpack.c.b16 %v827, %v826
        %v850 = vpack.c.b16 %v829, %v828
        %v851 = vpack.c.b16 %v831, %v830
        %v852 = vpack.c.b16 %v833, %v832
        %v853 = vpack.c.b16 %v835, %v834
        %v854 = vpack.c.b16 %v837, %v836
        %v855 = vpack.c.b16 %v839, %v838
        %v857 = vsel %vm527, %v840, 0
        %v860 = vsel %vm527, %v841, 0
        %v863 = vsel %vm527, %v842, 0
        %v866 = vsel %vm527, %v843, 0
        %v869 = vsel %vm527, %v844, 0
        %v872 = vsel %vm527, %v845, 0
        %v875 = vsel %vm527, %v846, 0
        %v878 = vsel %vm527, %v847, 0
        %v881 = vsel %vm527, %v848, 0
        %v884 = vsel %vm527, %v849, 0
        %v887 = vsel %vm527, %v850, 0
        %v890 = vsel %vm527, %v851, 0
        %v893 = vsel %vm527, %v852, 0
        %v896 = vsel %vm527, %v853, 0
        %v899 = vsel %vm527, %v854, 0
        %v902 = vsel %vm527, %v855, 0
        %904 = vmatprep.subr.bf16.mxu0 0
        %905 = vmatpush1.bf16.msra.mxu0 %v524
        %906 = vmatprep.subr.bf16.mxu0 0
        %907 = vmatpush1.bf16.msra.mxu0 %v581
        %908 = vmatprep.subr.bf16.mxu0 0
        %909 = vmatpush1.bf16.msra.mxu0 0
        %910 = vmatprep.subr.bf16.mxu0 0
        %911 = vmatpush1.bf16.msra.mxu0 0
        %912 = vmatprep.subr.bf16.mxu0 0
        %913 = vmatpush1.bf16.msra.mxu0 0
        %914 = vmatprep.subr.bf16.mxu0 0
        %915 = vmatpush1.bf16.msra.mxu0 0
        %916 = vmatprep.subr.bf16.mxu0 0
        %917 = vmatpush1.bf16.msra.mxu0 0
        %918 = vmatprep.subr.bf16.mxu0 0
        %919 = vmatpush1.bf16.msra.mxu0 0
        %920 = vmatprep.subr.bf16.mxu0 0
        %921 = vmatpush1.bf16.msra.mxu0 0
        %922 = vmatprep.subr.bf16.mxu0 0
        %923 = vmatpush1.bf16.msra.mxu0 0
        %924 = vmatprep.subr.bf16.mxu0 0
        %925 = vmatpush1.bf16.msra.mxu0 0
        %926 = vmatprep.subr.bf16.mxu0 0
        %927 = vmatpush1.bf16.msra.mxu0 0
        %928 = vmatprep.subr.bf16.mxu0 0
        %929 = vmatpush1.bf16.msra.mxu0 0
        %930 = vmatprep.subr.bf16.mxu0 0
        %931 = vmatpush1.bf16.msra.mxu0 0
        %932 = vmatprep.subr.bf16.mxu0 0
        %933 = vmatpush1.bf16.msra.mxu0 0
        %934 = vmatprep.subr.bf16.mxu0 0
        %935 = vmatpush1.bf16.msra.mxu0 0
        %936 = vmatprep.mubr.bf16.mxu0 0
        %937 = vmatmul.mubr.bf16.gmra.mrb[0].mxu0 %v857
        %v938 = vpop.f32.mrb[0].mxu0
        %v939 = vadd.f32 0.0, %v938
        %v940 = vpop.f32.mrb[0].mxu0
        %v941 = vpop.f32.mrb[0].mxu0
        %v942 = vadd.f32 0.0, %v941
        %v943 = vpop.f32.mrb[0].mxu0
        %944 = vmatprep.mubr.bf16.mxu0 0
        %945 = vmatmul.mubr.bf16.gmra.mrb[0].mxu0 %v860
        %v946 = vpop.f32.mrb[0].mxu0
        %v947 = vadd.f32 0.0, %v946
        %v948 = vpop.f32.mrb[0].mxu0
        %v949 = vpop.f32.mrb[0].mxu0
        %v950 = vadd.f32 0.0, %v949
        %v951 = vpop.f32.mrb[0].mxu0
        %952 = vmatprep.mubr.bf16.mxu0 0
        %953 = vmatmul.mubr.bf16.gmra.mrb[0].mxu0 %v863
        %v954 = vpop.f32.mrb[0].mxu0
        %v955 = vadd.f32 0.0, %v954
        %v956 = vpop.f32.mrb[0].mxu0
        %v957 = vpop.f32.mrb[0].mxu0
        %v958 = vadd.f32 0.0, %v957
        %v959 = vpop.f32.mrb[0].mxu0
        %960 = vmatprep.mubr.bf16.mxu0 0
        %961 = vmatmul.mubr.bf16.gmra.mrb[0].mxu0 %v866
        %v962 = vpop.f32.mrb[0].mxu0
        %v963 = vadd.f32 0.0, %v962
        %v964 = vpop.f32.mrb[0].mxu0
        %v965 = vpop.f32.mrb[0].mxu0
        %v966 = vadd.f32 0.0, %v965
        %v967 = vpop.f32.mrb[0].mxu0
        %968 = vmatprep.mubr.bf16.mxu0 0
        %969 = vmatmul.mubr.bf16.gmra.mrb[0].mxu0 %v869
        %v970 = vpop.f32.mrb[0].mxu0
        %v971 = vadd.f32 0.0, %v970
        %v972 = vpop.f32.mrb[0].mxu0
        %v973 = vpop.f32.mrb[0].mxu0
        %v974 = vadd.f32 0.0, %v973
        %v975 = vpop.f32.mrb[0].mxu0
        %976 = vmatprep.mubr.bf16.mxu0 0
        %977 = vmatmul.mubr.bf16.gmra.mrb[0].mxu0 %v872
        %v978 = vpop.f32.mrb[0].mxu0
        %v979 = vadd.f32 0.0, %v978
        %v980 = vpop.f32.mrb[0].mxu0
        %v981 = vpop.f32.mrb[0].mxu0
        %v982 = vadd.f32 0.0, %v981
        %v983 = vpop.f32.mrb[0].mxu0
        %984 = vmatprep.mubr.bf16.mxu0 0
        %985 = vmatmul.mubr.bf16.gmra.mrb[0].mxu0 %v875
        %v986 = vpop.f32.mrb[0].mxu0
        %v987 = vadd.f32 0.0, %v986
        %v988 = vpop.f32.mrb[0].mxu0
        %v989 = vpop.f32.mrb[0].mxu0
        %v990 = vadd.f32 0.0, %v989
        %v991 = vpop.f32.mrb[0].mxu0
        %992 = vmatprep.mubr.bf16.mxu0 0
        %993 = vmatmul.mubr.bf16.gmra.mrb[0].mxu0 %v878
        %v994 = vpop.f32.mrb[0].mxu0
        %v995 = vadd.f32 0.0, %v994
        %v996 = vpop.f32.mrb[0].mxu0
        %v997 = vpop.f32.mrb[0].mxu0
        %v998 = vadd.f32 0.0, %v997
        %v999 = vpop.f32.mrb[0].mxu0
        %1000 = vmatprep.mubr.bf16.mxu0 0
        %1001 = vmatmul.mubr.bf16.gmra.mrb[0].mxu0 %v881
        %v1002 = vpop.f32.mrb[0].mxu0
        %v1003 = vadd.f32 0.0, %v1002
        %v1004 = vpop.f32.mrb[0].mxu0
        %v1005 = vpop.f32.mrb[0].mxu0
        %v1006 = vadd.f32 0.0, %v1005
        %v1007 = vpop.f32.mrb[0].mxu0
        %1008 = vmatprep.mubr.bf16.mxu0 0
        %1009 = vmatmul.mubr.bf16.gmra.mrb[0].mxu0 %v884
        %v1010 = vpop.f32.mrb[0].mxu0
        %v1011 = vadd.f32 0.0, %v1010
        %v1012 = vpop.f32.mrb[0].mxu0
        %v1013 = vpop.f32.mrb[0].mxu0
        %v1014 = vadd.f32 0.0, %v1013
        %v1015 = vpop.f32.mrb[0].mxu0
        %1016 = vmatprep.mubr.bf16.mxu0 0
        %1017 = vmatmul.mubr.bf16.gmra.mrb[0].mxu0 %v887
        %v1018 = vpop.f32.mrb[0].mxu0
        %v1019 = vadd.f32 0.0, %v1018
        %v1020 = vpop.f32.mrb[0].mxu0
        %v1021 = vpop.f32.mrb[0].mxu0
        %v1022 = vadd.f32 0.0, %v1021
        %v1023 = vpop.f32.mrb[0].mxu0
        %1024 = vmatprep.mubr.bf16.mxu0 0
        %1025 = vmatmul.mubr.bf16.gmra.mrb[0].mxu0 %v890
        %v1026 = vpop.f32.mrb[0].mxu0
        %v1027 = vadd.f32 0.0, %v1026
        %v1028 = vpop.f32.mrb[0].mxu0
        %v1029 = vpop.f32.mrb[0].mxu0
        %v1030 = vadd.f32 0.0, %v1029
        %v1031 = vpop.f32.mrb[0].mxu0
        %1032 = vmatprep.mubr.bf16.mxu0 0
        %1033 = vmatmul.mubr.bf16.gmra.mrb[0].mxu0 %v893
        %v1034 = vpop.f32.mrb[0].mxu0
        %v1035 = vadd.f32 0.0, %v1034
        %v1036 = vpop.f32.mrb[0].mxu0
        %v1037 = vpop.f32.mrb[0].mxu0
        %v1038 = vadd.f32 0.0, %v1037
        %v1039 = vpop.f32.mrb[0].mxu0
        %1040 = vmatprep.mubr.bf16.mxu0 0
        %1041 = vmatmul.mubr.bf16.gmra.mrb[0].mxu0 %v896
        %v1042 = vpop.f32.mrb[0].mxu0
        %v1043 = vadd.f32 0.0, %v1042
        %v1044 = vpop.f32.mrb[0].mxu0
        %v1045 = vpop.f32.mrb[0].mxu0
        %v1046 = vadd.f32 0.0, %v1045
        %v1047 = vpop.f32.mrb[0].mxu0
        %1048 = vmatprep.mubr.bf16.mxu0 0
        %1049 = vmatmul.mubr.bf16.gmra.mrb[0].mxu0 %v899
        %v1050 = vpop.f32.mrb[0].mxu0
        %v1051 = vadd.f32 0.0, %v1050
        %v1052 = vpop.f32.mrb[0].mxu0
        %v1053 = vpop.f32.mrb[0].mxu0
        %v1054 = vadd.f32 0.0, %v1053
        %v1055 = vpop.f32.mrb[0].mxu0
        %1056 = vmatprep.mubr.bf16.mxu0 0
        %1057 = vmatmul.mubr.bf16.gmra.mrb[0].mxu0 %v902
        %v1058 = vpop.f32.mrb[0].mxu0
        %v1059 = vadd.f32 0.0, %v1058
        %v1060 = vpop.f32.mrb[0].mxu0
        %v1061 = vpop.f32.mrb[0].mxu0
        %v1062 = vadd.f32 0.0, %v1061
        %v1063 = vpop.f32.mrb[0].mxu0
        %1064 = vdwg.mxu0
        %v1065 = vmax.f32 %v618, %v939
        %v1066 = vmax.f32 %v621, %v942
        %v1067 = vmax.f32 %v626, %v947
        %v1068 = vmax.f32 %v629, %v950
        %v1069 = vmax.f32 %v634, %v955
        %v1070 = vmax.f32 %v637, %v958
        %v1071 = vmax.f32 %v642, %v963
        %v1072 = vmax.f32 %v645, %v966
        %v1073 = vmax.f32 %v650, %v971
        %v1074 = vmax.f32 %v653, %v974
        %v1075 = vmax.f32 %v658, %v979
        %v1076 = vmax.f32 %v661, %v982
        %v1077 = vmax.f32 %v666, %v987
        %v1078 = vmax.f32 %v669, %v990
        %v1079 = vmax.f32 %v674, %v995
        %v1080 = vmax.f32 %v677, %v998
        %v1081 = vmax.f32 %v682, %v1003
        %v1082 = vmax.f32 %v685, %v1006
        %v1083 = vmax.f32 %v690, %v1011
        %v1084 = vmax.f32 %v693, %v1014
        %v1085 = vmax.f32 %v698, %v1019
        %v1086 = vmax.f32 %v701, %v1022
        %v1087 = vmax.f32 %v706, %v1027
        %v1088 = vmax.f32 %v709, %v1030
        %v1089 = vmax.f32 %v714, %v1035
        %v1090 = vmax.f32 %v717, %v1038
        %v1091 = vmax.f32 %v722, %v1043
        %v1092 = vmax.f32 %v725, %v1046
        %v1093 = vmax.f32 %v730, %v1051
        %v1094 = vmax.f32 %v733, %v1054
        %v1095 = vmax.f32 %v738, %v1059
        %v1096 = vmax.f32 %v741, %v1062
        %v1097 = vld [vmem:[%s374] sm:$0xf]
        %v1098 = vld [vmem:[%s374 + $0x4] sm:$0xf]
        %v1099 = vld [vmem:[%s374 + $0x8] sm:$0xf]
        %v1100 = vld [vmem:[%s374 + $0xc] sm:$0xf]
        %v1101 = vld [vmem:[%s374 + $0x10] sm:$0xf]
        %v1102 = vld [vmem:[%s374 + $0x14] sm:$0xf]
        %v1103 = vld [vmem:[%s374 + $0x18] sm:$0xf]
        %v1104 = vld [vmem:[%s374 + $0x1c] sm:$0xf]
        %v1105 = vld [vmem:[%s374 + $0x20] sm:$0xf]
        %v1106 = vld [vmem:[%s374 + $0x24] sm:$0xf]
        %v1107 = vld [vmem:[%s374 + $0x28] sm:$0xf]
        %v1108 = vld [vmem:[%s374 + $0x2c] sm:$0xf]
        %v1109 = vld [vmem:[%s374 + $0x30] sm:$0xf]
        %v1110 = vld [vmem:[%s374 + $0x34] sm:$0xf]
        %v1111 = vld [vmem:[%s374 + $0x38] sm:$0xf]
        %v1112 = vld [vmem:[%s374 + $0x3c] sm:$0xf]
        %v1113 = vld [vmem:[%s374 + $0x40] sm:$0xf]
        %v1114 = vld [vmem:[%s374 + $0x44] sm:$0xf]
        %v1115 = vld [vmem:[%s374 + $0x48] sm:$0xf]
        %v1116 = vld [vmem:[%s374 + $0x4c] sm:$0xf]
        %v1117 = vld [vmem:[%s374 + $0x50] sm:$0xf]
        %v1118 = vld [vmem:[%s374 + $0x54] sm:$0xf]
        %v1119 = vld [vmem:[%s374 + $0x58] sm:$0xf]
        %v1120 = vld [vmem:[%s374 + $0x5c] sm:$0xf]
        %v1121 = vld [vmem:[%s374 + $0x60] sm:$0xf]
        %v1122 = vld [vmem:[%s374 + $0x64] sm:$0xf]
        %v1123 = vld [vmem:[%s374 + $0x68] sm:$0xf]
        %v1124 = vld [vmem:[%s374 + $0x6c] sm:$0xf]
        %v1125 = vld [vmem:[%s374 + $0x70] sm:$0xf]
        %v1126 = vld [vmem:[%s374 + $0x74] sm:$0xf]
        %v1127 = vld [vmem:[%s374 + $0x78] sm:$0xf]
        %v1128 = vld [vmem:[%s374 + $0x7c] sm:$0xf]
        %v1161 = vunpack.c.l.b16 %v1097
        %v1162 = vunpack.c.l.b16 %v1098
        %v1163 = vunpack.c.l.b16 %v1099
        %v1164 = vunpack.c.l.b16 %v1100
        %v1165 = vunpack.c.l.b16 %v1101
        %v1166 = vunpack.c.l.b16 %v1102
        %v1167 = vunpack.c.l.b16 %v1103
        %v1168 = vunpack.c.l.b16 %v1104
        %v1169 = vunpack.c.l.b16 %v1105
        %v1170 = vunpack.c.l.b16 %v1106
        %v1171 = vunpack.c.l.b16 %v1107
        %v1172 = vunpack.c.l.b16 %v1108
        %v1173 = vunpack.c.l.b16 %v1109
        %v1174 = vunpack.c.l.b16 %v1110
        %v1175 = vunpack.c.l.b16 %v1111
        %v1176 = vunpack.c.l.b16 %v1112
        %v1177 = vunpack.c.l.b16 %v1113
        %v1178 = vunpack.c.l.b16 %v1114
        %v1179 = vunpack.c.l.b16 %v1115
        %v1180 = vunpack.c.l.b16 %v1116
        %v1181 = vunpack.c.l.b16 %v1117
        %v1182 = vunpack.c.l.b16 %v1118
        %v1183 = vunpack.c.l.b16 %v1119
        %v1184 = vunpack.c.l.b16 %v1120
        %v1185 = vunpack.c.l.b16 %v1121
        %v1186 = vunpack.c.l.b16 %v1122
        %v1187 = vunpack.c.l.b16 %v1123
        %v1188 = vunpack.c.l.b16 %v1124
        %v1189 = vunpack.c.l.b16 %v1125
        %v1190 = vunpack.c.l.b16 %v1126
        %v1191 = vunpack.c.l.b16 %v1127
        %v1192 = vunpack.c.l.b16 %v1128
        %v1193 = vpack.c.b16 %v1162, %v1161
        %v1194 = vpack.c.b16 %v1164, %v1163
        %v1195 = vpack.c.b16 %v1166, %v1165
        %v1196 = vpack.c.b16 %v1168, %v1167
        %v1197 = vpack.c.b16 %v1170, %v1169
        %v1198 = vpack.c.b16 %v1172, %v1171
        %v1199 = vpack.c.b16 %v1174, %v1173
        %v1200 = vpack.c.b16 %v1176, %v1175
        %v1201 = vpack.c.b16 %v1178, %v1177
        %v1202 = vpack.c.b16 %v1180, %v1179
        %v1203 = vpack.c.b16 %v1182, %v1181
        %v1204 = vpack.c.b16 %v1184, %v1183
        %v1205 = vpack.c.b16 %v1186, %v1185
        %v1206 = vpack.c.b16 %v1188, %v1187
        %v1207 = vpack.c.b16 %v1190, %v1189
        %v1208 = vpack.c.b16 %v1192, %v1191
        %v1210 = vsel %vm527, %v1193, 0
        %v1213 = vsel %vm527, %v1194, 0
        %v1216 = vsel %vm527, %v1195, 0
        %v1219 = vsel %vm527, %v1196, 0
        %v1222 = vsel %vm527, %v1197, 0
        %v1225 = vsel %vm527, %v1198, 0
        %v1228 = vsel %vm527, %v1199, 0
        %v1231 = vsel %vm527, %v1200, 0
        %v1234 = vsel %vm527, %v1201, 0
        %v1237 = vsel %vm527, %v1202, 0
        %v1240 = vsel %vm527, %v1203, 0
        %v1243 = vsel %vm527, %v1204, 0
        %v1246 = vsel %vm527, %v1205, 0
        %v1249 = vsel %vm527, %v1206, 0
        %v1252 = vsel %vm527, %v1207, 0
        %v1255 = vsel %vm527, %v1208, 0
        %1257 = vmatprep.subr.bf16.mxu0 0
        %1258 = vmatpush1.bf16.msra.mxu0 %v524
        %1259 = vmatprep.subr.bf16.mxu0 0
        %1260 = vmatpush1.bf16.msra.mxu0 %v581
        %1261 = vmatprep.subr.bf16.mxu0 0
        %1262 = vmatpush1.bf16.msra.mxu0 0
        %1263 = vmatprep.subr.bf16.mxu0 0
        %1264 = vmatpush1.bf16.msra.mxu0 0
        %1265 = vmatprep.subr.bf16.mxu0 0
        %1266 = vmatpush1.bf16.msra.mxu0 0
        %1267 = vmatprep.subr.bf16.mxu0 0
        %1268 = vmatpush1.bf16.msra.mxu0 0
        %1269 = vmatprep.subr.bf16.mxu0 0
        %1270 = vmatpush1.bf16.msra.mxu0 0
        %1271 = vmatprep.subr.bf16.mxu0 0
        %1272 = vmatpush1.bf16.msra.mxu0 0
        %1273 = vmatprep.subr.bf16.mxu0 0
        %1274 = vmatpush1.bf16.msra.mxu0 0
        %1275 = vmatprep.subr.bf16.mxu0 0
        %1276 = vmatpush1.bf16.msra.mxu0 0
        %1277 = vmatprep.subr.bf16.mxu0 0
        %1278 = vmatpush1.bf16.msra.mxu0 0
        %1279 = vmatprep.subr.bf16.mxu0 0
        %1280 = vmatpush1.bf16.msra.mxu0 0
        %1281 = vmatprep.subr.bf16.mxu0 0
        %1282 = vmatpush1.bf16.msra.mxu0 0
        %1283 = vmatprep.subr.bf16.mxu0 0
        %1284 = vmatpush1.bf16.msra.mxu0 0
        %1285 = vmatprep.subr.bf16.mxu0 0
        %1286 = vmatpush1.bf16.msra.mxu0 0
        %1287 = vmatprep.subr.bf16.mxu0 0
        %1288 = vmatpush1.bf16.msra.mxu0 0
        %1289 = vmatprep.mubr.bf16.mxu0 0
        %1290 = vmatmul.mubr.bf16.gmra.mrb[0].mxu0 %v1210
        %v1291 = vpop.f32.mrb[0].mxu0
        %v1292 = vadd.f32 0.0, %v1291
        %v1293 = vpop.f32.mrb[0].mxu0
        %v1294 = vpop.f32.mrb[0].mxu0
        %v1295 = vadd.f32 0.0, %v1294
        %v1296 = vpop.f32.mrb[0].mxu0
        %1297 = vmatprep.mubr.bf16.mxu0 0
        %1298 = vmatmul.mubr.bf16.gmra.mrb[0].mxu0 %v1213
        %v1299 = vpop.f32.mrb[0].mxu0
        %v1300 = vadd.f32 0.0, %v1299
        %v1301 = vpop.f32.mrb[0].mxu0
        %v1302 = vpop.f32.mrb[0].mxu0
        %v1303 = vadd.f32 0.0, %v1302
        %v1304 = vpop.f32.mrb[0].mxu0
        %1305 = vmatprep.mubr.bf16.mxu0 0
        %1306 = vmatmul.mubr.bf16.gmra.mrb[0].mxu0 %v1216
        %v1307 = vpop.f32.mrb[0].mxu0
        %v1308 = vadd.f32 0.0, %v1307
        %v1309 = vpop.f32.mrb[0].mxu0
        %v1310 = vpop.f32.mrb[0].mxu0
        %v1311 = vadd.f32 0.0, %v1310
        %v1312 = vpop.f32.mrb[0].mxu0
        %1313 = vmatprep.mubr.bf16.mxu0 0
        %1314 = vmatmul.mubr.bf16.gmra.mrb[0].mxu0 %v1219
        %v1315 = vpop.f32.mrb[0].mxu0
        %v1316 = vadd.f32 0.0, %v1315
        %v1317 = vpop.f32.mrb[0].mxu0
        %v1318 = vpop.f32.mrb[0].mxu0
        %v1319 = vadd.f32 0.0, %v1318
        %v1320 = vpop.f32.mrb[0].mxu0
        %1321 = vmatprep.mubr.bf16.mxu0 0
        %1322 = vmatmul.mubr.bf16.gmra.mrb[0].mxu0 %v1222
        %v1323 = vpop.f32.mrb[0].mxu0
        %v1324 = vadd.f32 0.0, %v1323
        %v1325 = vpop.f32.mrb[0].mxu0
        %v1326 = vpop.f32.mrb[0].mxu0
        %v1327 = vadd.f32 0.0, %v1326
        %v1328 = vpop.f32.mrb[0].mxu0
        %1329 = vmatprep.mubr.bf16.mxu0 0
        %1330 = vmatmul.mubr.bf16.gmra.mrb[0].mxu0 %v1225
        %v1331 = vpop.f32.mrb[0].mxu0
        %v1332 = vadd.f32 0.0, %v1331
        %v1333 = vpop.f32.mrb[0].mxu0
        %v1334 = vpop.f32.mrb[0].mxu0
        %v1335 = vadd.f32 0.0, %v1334
        %v1336 = vpop.f32.mrb[0].mxu0
        %1337 = vmatprep.mubr.bf16.mxu0 0
        %1338 = vmatmul.mubr.bf16.gmra.mrb[0].mxu0 %v1228
        %v1339 = vpop.f32.mrb[0].mxu0
        %v1340 = vadd.f32 0.0, %v1339
        %v1341 = vpop.f32.mrb[0].mxu0
        %v1342 = vpop.f32.mrb[0].mxu0
        %v1343 = vadd.f32 0.0, %v1342
        %v1344 = vpop.f32.mrb[0].mxu0
        %1345 = vmatprep.mubr.bf16.mxu0 0
        %1346 = vmatmul.mubr.bf16.gmra.mrb[0].mxu0 %v1231
        %v1347 = vpop.f32.mrb[0].mxu0
        %v1348 = vadd.f32 0.0, %v1347
        %v1349 = vpop.f32.mrb[0].mxu0
        %v1350 = vpop.f32.mrb[0].mxu0
        %v1351 = vadd.f32 0.0, %v1350
        %v1352 = vpop.f32.mrb[0].mxu0
        %1353 = vmatprep.mubr.bf16.mxu0 0
        %1354 = vmatmul.mubr.bf16.gmra.mrb[0].mxu0 %v1234
        %v1355 = vpop.f32.mrb[0].mxu0
        %v1356 = vadd.f32 0.0, %v1355
        %v1357 = vpop.f32.mrb[0].mxu0
        %v1358 = vpop.f32.mrb[0].mxu0
        %v1359 = vadd.f32 0.0, %v1358
        %v1360 = vpop.f32.mrb[0].mxu0
        %1361 = vmatprep.mubr.bf16.mxu0 0
        %1362 = vmatmul.mubr.bf16.gmra.mrb[0].mxu0 %v1237
        %v1363 = vpop.f32.mrb[0].mxu0
        %v1364 = vadd.f32 0.0, %v1363
        %v1365 = vpop.f32.mrb[0].mxu0
        %v1366 = vpop.f32.mrb[0].mxu0
        %v1367 = vadd.f32 0.0, %v1366
        %v1368 = vpop.f32.mrb[0].mxu0
        %1369 = vmatprep.mubr.bf16.mxu0 0
        %1370 = vmatmul.mubr.bf16.gmra.mrb[0].mxu0 %v1240
        %v1371 = vpop.f32.mrb[0].mxu0
        %v1372 = vadd.f32 0.0, %v1371
        %v1373 = vpop.f32.mrb[0].mxu0
        %v1374 = vpop.f32.mrb[0].mxu0
        %v1375 = vadd.f32 0.0, %v1374
        %v1376 = vpop.f32.mrb[0].mxu0
        %1377 = vmatprep.mubr.bf16.mxu0 0
        %1378 = vmatmul.mubr.bf16.gmra.mrb[0].mxu0 %v1243
        %v1379 = vpop.f32.mrb[0].mxu0
        %v1380 = vadd.f32 0.0, %v1379
        %v1381 = vpop.f32.mrb[0].mxu0
        %v1382 = vpop.f32.mrb[0].mxu0
        %v1383 = vadd.f32 0.0, %v1382
        %v1384 = vpop.f32.mrb[0].mxu0
        %1385 = vmatprep.mubr.bf16.mxu0 0
        %1386 = vmatmul.mubr.bf16.gmra.mrb[0].mxu0 %v1246
        %v1387 = vpop.f32.mrb[0].mxu0
        %v1388 = vadd.f32 0.0, %v1387
        %v1389 = vpop.f32.mrb[0].mxu0
        %v1390 = vpop.f32.mrb[0].mxu0
        %v1391 = vadd.f32 0.0, %v1390
        %v1392 = vpop.f32.mrb[0].mxu0
        %1393 = vmatprep.mubr.bf16.mxu0 0
        %1394 = vmatmul.mubr.bf16.gmra.mrb[0].mxu0 %v1249
        %v1395 = vpop.f32.mrb[0].mxu0
        %v1396 = vadd.f32 0.0, %v1395
        %v1397 = vpop.f32.mrb[0].mxu0
        %v1398 = vpop.f32.mrb[0].mxu0
        %v1399 = vadd.f32 0.0, %v1398
        %v1400 = vpop.f32.mrb[0].mxu0
        %1401 = vmatprep.mubr.bf16.mxu0 0
        %1402 = vmatmul.mubr.bf16.gmra.mrb[0].mxu0 %v1252
        %v1403 = vpop.f32.mrb[0].mxu0
        %v1404 = vadd.f32 0.0, %v1403
        %v1405 = vpop.f32.mrb[0].mxu0
        %v1406 = vpop.f32.mrb[0].mxu0
        %v1407 = vadd.f32 0.0, %v1406
        %v1408 = vpop.f32.mrb[0].mxu0
        %1409 = vmatprep.mubr.bf16.mxu0 0
        %1410 = vmatmul.mubr.bf16.gmra.mrb[0].mxu0 %v1255
        %v1411 = vpop.f32.mrb[0].mxu0
        %v1412 = vadd.f32 0.0, %v1411
        %v1413 = vpop.f32.mrb[0].mxu0
        %v1414 = vpop.f32.mrb[0].mxu0
        %v1415 = vadd.f32 0.0, %v1414
        %v1416 = vpop.f32.mrb[0].mxu0
        %1417 = vdwg.mxu0
        %v1418 = vmax.f32 %v1065, %v1292
        %v1419 = vmax.f32 %v1066, %v1295
        %v1420 = vmax.f32 %v1067, %v1300
        %v1421 = vmax.f32 %v1068, %v1303
        %v1422 = vmax.f32 %v1069, %v1308
        %v1423 = vmax.f32 %v1070, %v1311
        %v1424 = vmax.f32 %v1071, %v1316
        %v1425 = vmax.f32 %v1072, %v1319
        %v1426 = vmax.f32 %v1073, %v1324
        %v1427 = vmax.f32 %v1074, %v1327
        %v1428 = vmax.f32 %v1075, %v1332
        %v1429 = vmax.f32 %v1076, %v1335
        %v1430 = vmax.f32 %v1077, %v1340
        %v1431 = vmax.f32 %v1078, %v1343
        %v1432 = vmax.f32 %v1079, %v1348
        %v1433 = vmax.f32 %v1080, %v1351
        %v1434 = vmax.f32 %v1081, %v1356
        %v1435 = vmax.f32 %v1082, %v1359
        %v1436 = vmax.f32 %v1083, %v1364
        %v1437 = vmax.f32 %v1084, %v1367
        %v1438 = vmax.f32 %v1085, %v1372
        %v1439 = vmax.f32 %v1086, %v1375
        %v1440 = vmax.f32 %v1087, %v1380
        %v1441 = vmax.f32 %v1088, %v1383
        %v1442 = vmax.f32 %v1089, %v1388
        %v1443 = vmax.f32 %v1090, %v1391
        %v1444 = vmax.f32 %v1091, %v1396
        %v1445 = vmax.f32 %v1092, %v1399
        %v1446 = vmax.f32 %v1093, %v1404
        %v1447 = vmax.f32 %v1094, %v1407
        %v1448 = vmax.f32 %v1095, %v1412
        %v1449 = vmax.f32 %v1096, %v1415
        %v1450 = vld [vmem:[%s388] sm:$0xf]
        %v1451 = vld [vmem:[%s388 + $0x4] sm:$0xf]
        %v1452 = vld [vmem:[%s388 + $0x8] sm:$0xf]
        %v1453 = vld [vmem:[%s388 + $0xc] sm:$0xf]
        %v1454 = vld [vmem:[%s388 + $0x10] sm:$0xf]
        %v1455 = vld [vmem:[%s388 + $0x14] sm:$0xf]
        %v1456 = vld [vmem:[%s388 + $0x18] sm:$0xf]
        %v1457 = vld [vmem:[%s388 + $0x1c] sm:$0xf]
        %v1458 = vld [vmem:[%s388 + $0x20] sm:$0xf]
        %v1459 = vld [vmem:[%s388 + $0x24] sm:$0xf]
        %v1460 = vld [vmem:[%s388 + $0x28] sm:$0xf]
        %v1461 = vld [vmem:[%s388 + $0x2c] sm:$0xf]
        %v1462 = vld [vmem:[%s388 + $0x30] sm:$0xf]
        %v1463 = vld [vmem:[%s388 + $0x34] sm:$0xf]
        %v1464 = vld [vmem:[%s388 + $0x38] sm:$0xf]
        %v1465 = vld [vmem:[%s388 + $0x3c] sm:$0xf]
        %v1466 = vld [vmem:[%s388 + $0x40] sm:$0xf]
        %v1467 = vld [vmem:[%s388 + $0x44] sm:$0xf]
        %v1468 = vld [vmem:[%s388 + $0x48] sm:$0xf]
        %v1469 = vld [vmem:[%s388 + $0x4c] sm:$0xf]
        %v1470 = vld [vmem:[%s388 + $0x50] sm:$0xf]
        %v1471 = vld [vmem:[%s388 + $0x54] sm:$0xf]
        %v1472 = vld [vmem:[%s388 + $0x58] sm:$0xf]
        %v1473 = vld [vmem:[%s388 + $0x5c] sm:$0xf]
        %v1474 = vld [vmem:[%s388 + $0x60] sm:$0xf]
        %v1475 = vld [vmem:[%s388 + $0x64] sm:$0xf]
        %v1476 = vld [vmem:[%s388 + $0x68] sm:$0xf]
        %v1477 = vld [vmem:[%s388 + $0x6c] sm:$0xf]
        %v1478 = vld [vmem:[%s388 + $0x70] sm:$0xf]
        %v1479 = vld [vmem:[%s388 + $0x74] sm:$0xf]
        %v1480 = vld [vmem:[%s388 + $0x78] sm:$0xf]
        %v1481 = vld [vmem:[%s388 + $0x7c] sm:$0xf]
        %v1514 = vunpack.c.l.b16 %v1450
        %v1515 = vunpack.c.l.b16 %v1451
        %v1516 = vunpack.c.l.b16 %v1452
        %v1517 = vunpack.c.l.b16 %v1453
        %v1518 = vunpack.c.l.b16 %v1454
        %v1519 = vunpack.c.l.b16 %v1455
        %v1520 = vunpack.c.l.b16 %v1456
        %v1521 = vunpack.c.l.b16 %v1457
        %v1522 = vunpack.c.l.b16 %v1458
        %v1523 = vunpack.c.l.b16 %v1459
        %v1524 = vunpack.c.l.b16 %v1460
        %v1525 = vunpack.c.l.b16 %v1461
        %v1526 = vunpack.c.l.b16 %v1462
        %v1527 = vunpack.c.l.b16 %v1463
        %v1528 = vunpack.c.l.b16 %v1464
        %v1529 = vunpack.c.l.b16 %v1465
        %v1530 = vunpack.c.l.b16 %v1466
        %v1531 = vunpack.c.l.b16 %v1467
        %v1532 = vunpack.c.l.b16 %v1468
        %v1533 = vunpack.c.l.b16 %v1469
        %v1534 = vunpack.c.l.b16 %v1470
        %v1535 = vunpack.c.l.b16 %v1471
        %v1536 = vunpack.c.l.b16 %v1472
        %v1537 = vunpack.c.l.b16 %v1473
        %v1538 = vunpack.c.l.b16 %v1474
        %v1539 = vunpack.c.l.b16 %v1475
        %v1540 = vunpack.c.l.b16 %v1476
        %v1541 = vunpack.c.l.b16 %v1477
        %v1542 = vunpack.c.l.b16 %v1478
        %v1543 = vunpack.c.l.b16 %v1479
        %v1544 = vunpack.c.l.b16 %v1480
        %v1545 = vunpack.c.l.b16 %v1481
        %v1546 = vpack.c.b16 %v1515, %v1514
        %v1547 = vpack.c.b16 %v1517, %v1516
        %v1548 = vpack.c.b16 %v1519, %v1518
        %v1549 = vpack.c.b16 %v1521, %v1520
        %v1550 = vpack.c.b16 %v1523, %v1522
        %v1551 = vpack.c.b16 %v1525, %v1524
        %v1552 = vpack.c.b16 %v1527, %v1526
        %v1553 = vpack.c.b16 %v1529, %v1528
        %v1554 = vpack.c.b16 %v1531, %v1530
        %v1555 = vpack.c.b16 %v1533, %v1532
        %v1556 = vpack.c.b16 %v1535, %v1534
        %v1557 = vpack.c.b16 %v1537, %v1536
        %v1558 = vpack.c.b16 %v1539, %v1538
        %v1559 = vpack.c.b16 %v1541, %v1540
        %v1560 = vpack.c.b16 %v1543, %v1542
        %v1561 = vpack.c.b16 %v1545, %v1544
        %v1563 = vsel %vm527, %v1546, 0
        %v1566 = vsel %vm527, %v1547, 0
        %v1569 = vsel %vm527, %v1548, 0
        %v1572 = vsel %vm527, %v1549, 0
        %v1575 = vsel %vm527, %v1550, 0
        %v1578 = vsel %vm527, %v1551, 0
        %v1581 = vsel %vm527, %v1552, 0
        %v1584 = vsel %vm527, %v1553, 0
        %v1587 = vsel %vm527, %v1554, 0
        %v1590 = vsel %vm527, %v1555, 0
        %v1593 = vsel %vm527, %v1556, 0
        %v1596 = vsel %vm527, %v1557, 0
        %v1599 = vsel %vm527, %v1558, 0
        %v1602 = vsel %vm527, %v1559, 0
        %v1605 = vsel %vm527, %v1560, 0
        %v1608 = vsel %vm527, %v1561, 0
        %1610 = vmatprep.subr.bf16.mxu0 0
        %1611 = vmatpush1.bf16.msra.mxu0 %v524
        %1612 = vmatprep.subr.bf16.mxu0 0
        %1613 = vmatpush1.bf16.msra.mxu0 %v581
        %1614 = vmatprep.subr.bf16.mxu0 0
        %1615 = vmatpush1.bf16.msra.mxu0 0
        %1616 = vmatprep.subr.bf16.mxu0 0
        %1617 = vmatpush1.bf16.msra.mxu0 0
        %1618 = vmatprep.subr.bf16.mxu0 0
        %1619 = vmatpush1.bf16.msra.mxu0 0
        %1620 = vmatprep.subr.bf16.mxu0 0
        %1621 = vmatpush1.bf16.msra.mxu0 0
        %1622 = vmatprep.subr.bf16.mxu0 0
        %1623 = vmatpush1.bf16.msra.mxu0 0
        %1624 = vmatprep.subr.bf16.mxu0 0
        %1625 = vmatpush1.bf16.msra.mxu0 0
        %1626 = vmatprep.subr.bf16.mxu0 0
        %1627 = vmatpush1.bf16.msra.mxu0 0
        %1628 = vmatprep.subr.bf16.mxu0 0
        %1629 = vmatpush1.bf16.msra.mxu0 0
        %1630 = vmatprep.subr.bf16.mxu0 0
        %1631 = vmatpush1.bf16.msra.mxu0 0
        %1632 = vmatprep.subr.bf16.mxu0 0
        %1633 = vmatpush1.bf16.msra.mxu0 0
        %1634 = vmatprep.subr.bf16.mxu0 0
        %1635 = vmatpush1.bf16.msra.mxu0 0
        %1636 = vmatprep.subr.bf16.mxu0 0
        %1637 = vmatpush1.bf16.msra.mxu0 0
        %1638 = vmatprep.subr.bf16.mxu0 0
        %1639 = vmatpush1.bf16.msra.mxu0 0
        %1640 = vmatprep.subr.bf16.mxu0 0
        %1641 = vmatpush1.bf16.msra.mxu0 0
        %1642 = vmatprep.mubr.bf16.mxu0 0
        %1643 = vmatmul.mubr.bf16.gmra.mrb[0].mxu0 %v1563
        %v1644 = vpop.f32.mrb[0].mxu0
        %v1645 = vadd.f32 0.0, %v1644
        %v1646 = vpop.f32.mrb[0].mxu0
        %v1647 = vpop.f32.mrb[0].mxu0
        %v1648 = vadd.f32 0.0, %v1647
        %v1649 = vpop.f32.mrb[0].mxu0
        %1650 = vmatprep.mubr.bf16.mxu0 0
        %1651 = vmatmul.mubr.bf16.gmra.mrb[0].mxu0 %v1566
        %v1652 = vpop.f32.mrb[0].mxu0
        %v1653 = vadd.f32 0.0, %v1652
        %v1654 = vpop.f32.mrb[0].mxu0
        %v1655 = vpop.f32.mrb[0].mxu0
        %v1656 = vadd.f32 0.0, %v1655
        %v1657 = vpop.f32.mrb[0].mxu0
        %1658 = vmatprep.mubr.bf16.mxu0 0
        %1659 = vmatmul.mubr.bf16.gmra.mrb[0].mxu0 %v1569
        %v1660 = vpop.f32.mrb[0].mxu0
        %v1661 = vadd.f32 0.0, %v1660
        %v1662 = vpop.f32.mrb[0].mxu0
        %v1663 = vpop.f32.mrb[0].mxu0
        %v1664 = vadd.f32 0.0, %v1663
        %v1665 = vpop.f32.mrb[0].mxu0
        %1666 = vmatprep.mubr.bf16.mxu0 0
        %1667 = vmatmul.mubr.bf16.gmra.mrb[0].mxu0 %v1572
        %v1668 = vpop.f32.mrb[0].mxu0
        %v1669 = vadd.f32 0.0, %v1668
        %v1670 = vpop.f32.mrb[0].mxu0
        %v1671 = vpop.f32.mrb[0].mxu0
        %v1672 = vadd.f32 0.0, %v1671
        %v1673 = vpop.f32.mrb[0].mxu0
        %1674 = vmatprep.mubr.bf16.mxu0 0
        %1675 = vmatmul.mubr.bf16.gmra.mrb[0].mxu0 %v1575
        %v1676 = vpop.f32.mrb[0].mxu0
        %v1677 = vadd.f32 0.0, %v1676
        %v1678 = vpop.f32.mrb[0].mxu0
        %v1679 = vpop.f32.mrb[0].mxu0
        %v1680 = vadd.f32 0.0, %v1679
        %v1681 = vpop.f32.mrb[0].mxu0
        %1682 = vmatprep.mubr.bf16.mxu0 0
        %1683 = vmatmul.mubr.bf16.gmra.mrb[0].mxu0 %v1578
        %v1684 = vpop.f32.mrb[0].mxu0
        %v1685 = vadd.f32 0.0, %v1684
        %v1686 = vpop.f32.mrb[0].mxu0
        %v1687 = vpop.f32.mrb[0].mxu0
        %v1688 = vadd.f32 0.0, %v1687
        %v1689 = vpop.f32.mrb[0].mxu0
        %1690 = vmatprep.mubr.bf16.mxu0 0
        %1691 = vmatmul.mubr.bf16.gmra.mrb[0].mxu0 %v1581
        %v1692 = vpop.f32.mrb[0].mxu0
        %v1693 = vadd.f32 0.0, %v1692
        %v1694 = vpop.f32.mrb[0].mxu0
        %v1695 = vpop.f32.mrb[0].mxu0
        %v1696 = vadd.f32 0.0, %v1695
        %v1697 = vpop.f32.mrb[0].mxu0
        %1698 = vmatprep.mubr.bf16.mxu0 0
        %1699 = vmatmul.mubr.bf16.gmra.mrb[0].mxu0 %v1584
        %v1700 = vpop.f32.mrb[0].mxu0
        %v1701 = vadd.f32 0.0, %v1700
        %v1702 = vpop.f32.mrb[0].mxu0
        %v1703 = vpop.f32.mrb[0].mxu0
        %v1704 = vadd.f32 0.0, %v1703
        %v1705 = vpop.f32.mrb[0].mxu0
        %1706 = vmatprep.mubr.bf16.mxu0 0
        %1707 = vmatmul.mubr.bf16.gmra.mrb[0].mxu0 %v1587
        %v1708 = vpop.f32.mrb[0].mxu0
        %v1709 = vadd.f32 0.0, %v1708
        %v1710 = vpop.f32.mrb[0].mxu0
        %v1711 = vpop.f32.mrb[0].mxu0
        %v1712 = vadd.f32 0.0, %v1711
        %v1713 = vpop.f32.mrb[0].mxu0
        %1714 = vmatprep.mubr.bf16.mxu0 0
        %1715 = vmatmul.mubr.bf16.gmra.mrb[0].mxu0 %v1590
        %v1716 = vpop.f32.mrb[0].mxu0
        %v1717 = vadd.f32 0.0, %v1716
        %v1718 = vpop.f32.mrb[0].mxu0
        %v1719 = vpop.f32.mrb[0].mxu0
        %v1720 = vadd.f32 0.0, %v1719
        %v1721 = vpop.f32.mrb[0].mxu0
        %1722 = vmatprep.mubr.bf16.mxu0 0
        %1723 = vmatmul.mubr.bf16.gmra.mrb[0].mxu0 %v1593
        %v1724 = vpop.f32.mrb[0].mxu0
        %v1725 = vadd.f32 0.0, %v1724
        %v1726 = vpop.f32.mrb[0].mxu0
        %v1727 = vpop.f32.mrb[0].mxu0
        %v1728 = vadd.f32 0.0, %v1727
        %v1729 = vpop.f32.mrb[0].mxu0
        %1730 = vmatprep.mubr.bf16.mxu0 0
        %1731 = vmatmul.mubr.bf16.gmra.mrb[0].mxu0 %v1596
        %v1732 = vpop.f32.mrb[0].mxu0
        %v1733 = vadd.f32 0.0, %v1732
        %v1734 = vpop.f32.mrb[0].mxu0
        %v1735 = vpop.f32.mrb[0].mxu0
        %v1736 = vadd.f32 0.0, %v1735
        %v1737 = vpop.f32.mrb[0].mxu0
        %1738 = vmatprep.mubr.bf16.mxu0 0
        %1739 = vmatmul.mubr.bf16.gmra.mrb[0].mxu0 %v1599
        %v1740 = vpop.f32.mrb[0].mxu0
        %v1741 = vadd.f32 0.0, %v1740
        %v1742 = vpop.f32.mrb[0].mxu0
        %v1743 = vpop.f32.mrb[0].mxu0
        %v1744 = vadd.f32 0.0, %v1743
        %v1745 = vpop.f32.mrb[0].mxu0
        %1746 = vmatprep.mubr.bf16.mxu0 0
        %1747 = vmatmul.mubr.bf16.gmra.mrb[0].mxu0 %v1602
        %v1748 = vpop.f32.mrb[0].mxu0
        %v1749 = vadd.f32 0.0, %v1748
        %v1750 = vpop.f32.mrb[0].mxu0
        %v1751 = vpop.f32.mrb[0].mxu0
        %v1752 = vadd.f32 0.0, %v1751
        %v1753 = vpop.f32.mrb[0].mxu0
        %1754 = vmatprep.mubr.bf16.mxu0 0
        %1755 = vmatmul.mubr.bf16.gmra.mrb[0].mxu0 %v1605
        %v1756 = vpop.f32.mrb[0].mxu0
        %v1757 = vadd.f32 0.0, %v1756
        %v1758 = vpop.f32.mrb[0].mxu0
        %v1759 = vpop.f32.mrb[0].mxu0
        %v1760 = vadd.f32 0.0, %v1759
        %v1761 = vpop.f32.mrb[0].mxu0
        %1762 = vmatprep.mubr.bf16.mxu0 0
        %1763 = vmatmul.mubr.bf16.gmra.mrb[0].mxu0 %v1608
        %v1764 = vpop.f32.mrb[0].mxu0
        %v1765 = vadd.f32 0.0, %v1764
        %v1766 = vpop.f32.mrb[0].mxu0
        %v1767 = vpop.f32.mrb[0].mxu0
        %v1768 = vadd.f32 0.0, %v1767
        %v1769 = vpop.f32.mrb[0].mxu0
        %1770 = vdwg.mxu0
        %v1771 = vmax.f32 %v1418, %v1645
        %v1772 = vmax.f32 %v1419, %v1648
        %v1773 = vmax.f32 %v1420, %v1653
        %v1774 = vmax.f32 %v1421, %v1656
        %v1775 = vmax.f32 %v1422, %v1661
        %v1776 = vmax.f32 %v1423, %v1664
        %v1777 = vmax.f32 %v1424, %v1669
        %v1778 = vmax.f32 %v1425, %v1672
        %v1779 = vmax.f32 %v1426, %v1677
        %v1780 = vmax.f32 %v1427, %v1680
        %v1781 = vmax.f32 %v1428, %v1685
        %v1782 = vmax.f32 %v1429, %v1688
        %v1783 = vmax.f32 %v1430, %v1693
        %v1784 = vmax.f32 %v1431, %v1696
        %v1785 = vmax.f32 %v1432, %v1701
        %v1786 = vmax.f32 %v1433, %v1704
        %v1787 = vmax.f32 %v1434, %v1709
        %v1788 = vmax.f32 %v1435, %v1712
        %v1789 = vmax.f32 %v1436, %v1717
        %v1790 = vmax.f32 %v1437, %v1720
        %v1791 = vmax.f32 %v1438, %v1725
        %v1792 = vmax.f32 %v1439, %v1728
        %v1793 = vmax.f32 %v1440, %v1733
        %v1794 = vmax.f32 %v1441, %v1736
        %v1795 = vmax.f32 %v1442, %v1741
        %v1796 = vmax.f32 %v1443, %v1744
        %v1797 = vmax.f32 %v1444, %v1749
        %v1798 = vmax.f32 %v1445, %v1752
        %v1799 = vmax.f32 %v1446, %v1757
        %v1800 = vmax.f32 %v1447, %v1760
        %v1801 = vmax.f32 %v1448, %v1765
        %v1802 = vmax.f32 %v1449, %v1768
        %v1803 = vld [vmem:[%s5] sm:$0x1]
        %v1805 = vlaneseq
        %v1806 = vshrl.u32 %v1805, 7
        %v1807 = vsub.s32 0, %v1806
        %v1808 = vrot.slane %v1803, %v1807
        %v1810 = vadd.f32 %v1771, %v1808
        %v1811 = vadd.f32 %v1772, %v1808
        %v1812 = vadd.f32 %v1773, %v1808
        %v1813 = vadd.f32 %v1774, %v1808
        %v1814 = vadd.f32 %v1775, %v1808
        %v1815 = vadd.f32 %v1776, %v1808
        %v1816 = vadd.f32 %v1777, %v1808
        %v1817 = vadd.f32 %v1778, %v1808
        %v1818 = vadd.f32 %v1779, %v1808
        %v1819 = vadd.f32 %v1780, %v1808
        %v1820 = vadd.f32 %v1781, %v1808
        %v1821 = vadd.f32 %v1782, %v1808
        %v1822 = vadd.f32 %v1783, %v1808
        %v1823 = vadd.f32 %v1784, %v1808
        %v1824 = vadd.f32 %v1785, %v1808
        %v1825 = vadd.f32 %v1786, %v1808
        %v1826 = vadd.f32 %v1787, %v1808
        %v1827 = vadd.f32 %v1788, %v1808
        %v1828 = vadd.f32 %v1789, %v1808
        %v1829 = vadd.f32 %v1790, %v1808
        %v1830 = vadd.f32 %v1791, %v1808
        %v1831 = vadd.f32 %v1792, %v1808
        %v1832 = vadd.f32 %v1793, %v1808
        %v1833 = vadd.f32 %v1794, %v1808
        %v1834 = vadd.f32 %v1795, %v1808
        %v1835 = vadd.f32 %v1796, %v1808
        %v1836 = vadd.f32 %v1797, %v1808
        %v1837 = vadd.f32 %v1798, %v1808
        %v1838 = vadd.f32 %v1799, %v1808
        %v1839 = vadd.f32 %v1800, %v1808
        %v1840 = vadd.f32 %v1801, %v1808
        %v1841 = vadd.f32 %v1802, %v1808
        %v1842 = vmax.f32 %v1810, 0.0
        %v1843 = vmax.f32 %v1811, 0.0
        %v1844 = vmax.f32 %v1812, 0.0
        %v1845 = vmax.f32 %v1813, 0.0
        %v1846 = vmax.f32 %v1814, 0.0
        %v1847 = vmax.f32 %v1815, 0.0
        %v1848 = vmax.f32 %v1816, 0.0
        %v1849 = vmax.f32 %v1817, 0.0
        %v1850 = vmax.f32 %v1818, 0.0
        %v1851 = vmax.f32 %v1819, 0.0
        %v1852 = vmax.f32 %v1820, 0.0
        %v1853 = vmax.f32 %v1821, 0.0
        %v1854 = vmax.f32 %v1822, 0.0
        %v1855 = vmax.f32 %v1823, 0.0
        %v1856 = vmax.f32 %v1824, 0.0
        %v1857 = vmax.f32 %v1825, 0.0
        %v1858 = vmax.f32 %v1826, 0.0
        %v1859 = vmax.f32 %v1827, 0.0
        %v1860 = vmax.f32 %v1828, 0.0
        %v1861 = vmax.f32 %v1829, 0.0
        %v1862 = vmax.f32 %v1830, 0.0
        %v1863 = vmax.f32 %v1831, 0.0
        %v1864 = vmax.f32 %v1832, 0.0
        %v1865 = vmax.f32 %v1833, 0.0
        %v1866 = vmax.f32 %v1834, 0.0
        %v1867 = vmax.f32 %v1835, 0.0
        %v1868 = vmax.f32 %v1836, 0.0
        %v1869 = vmax.f32 %v1837, 0.0
        %v1870 = vmax.f32 %v1838, 0.0
        %v1871 = vmax.f32 %v1839, 0.0
        %v1872 = vmax.f32 %v1840, 0.0
        %v1873 = vmax.f32 %v1841, 0.0
        %1874 = vst [vmem:[%s337] sm:$0xff] %v1842
        %1875 = vst [vmem:[%s337 + $0x8] sm:$0xff] %v1843
        %1876 = vst [vmem:[%s337 + $0x10] sm:$0xff] %v1844
        %1877 = vst [vmem:[%s337 + $0x18] sm:$0xff] %v1845
        %1878 = vst [vmem:[%s337 + $0x20] sm:$0xff] %v1846
        %1879 = vst [vmem:[%s337 + $0x28] sm:$0xff] %v1847
        %1880 = vst [vmem:[%s337 + $0x30] sm:$0xff] %v1848
        %1881 = vst [vmem:[%s337 + $0x38] sm:$0xff] %v1849
        %1882 = vst [vmem:[%s337 + $0x40] sm:$0xff] %v1850
        %1883 = vst [vmem:[%s337 + $0x48] sm:$0xff] %v1851
        %1884 = vst [vmem:[%s337 + $0x50] sm:$0xff] %v1852
        %1885 = vst [vmem:[%s337 + $0x58] sm:$0xff] %v1853
        %1886 = vst [vmem:[%s337 + $0x60] sm:$0xff] %v1854
        %1887 = vst [vmem:[%s337 + $0x68] sm:$0xff] %v1855
        %1888 = vst [vmem:[%s337 + $0x70] sm:$0xff] %v1856
        %1889 = vst [vmem:[%s337 + $0x78] sm:$0xff] %v1857
        %1890 = vst [vmem:[%s337 + $0x80] sm:$0xff] %v1858
        %1891 = vst [vmem:[%s337 + $0x88] sm:$0xff] %v1859
        %1892 = vst [vmem:[%s337 + $0x90] sm:$0xff] %v1860
        %1893 = vst [vmem:[%s337 + $0x98] sm:$0xff] %v1861
        %1894 = vst [vmem:[%s337 + $0xa0] sm:$0xff] %v1862
        %1895 = vst [vmem:[%s337 + $0xa8] sm:$0xff] %v1863
        %1896 = vst [vmem:[%s337 + $0xb0] sm:$0xff] %v1864
        %1897 = vst [vmem:[%s337 + $0xb8] sm:$0xff] %v1865
        %1898 = vst [vmem:[%s337 + $0xc0] sm:$0xff] %v1866
        %1899 = vst [vmem:[%s337 + $0xc8] sm:$0xff] %v1867
        %1900 = vst [vmem:[%s337 + $0xd0] sm:$0xff] %v1868
        %1901 = vst [vmem:[%s337 + $0xd8] sm:$0xff] %v1869
        %1902 = vst [vmem:[%s337 + $0xe0] sm:$0xff] %v1870
        %1903 = vst [vmem:[%s337 + $0xe8] sm:$0xff] %v1871
        %1904 = vst [vmem:[%s337 + $0xf0] sm:$0xff] %v1872
        %1905 = vst [vmem:[%s337 + $0xf8] sm:$0xff] %v1873
        %s1906 = sand.u32 %s171, 1
        %s1907 = sand.u32 %s171, 1
        %s1908 = smul.addr %s1907, 256
        %s1909 = scalar_lea.vmem [#allocation2], %s1908
        // Predicated region
        $region45: #{lenet_forward.3} parent=43 // pred_check
          %p1910 = pneg %p181
        $region46: #{lenet_forward.3} parent=43 // pred_check_branch
          %1912 = sbr.rel (%p1910) target = $region48
        $region47: #{lenet_forward.3} parent=43 // pred_region
          %s1913 = smul.u32 32, %s17
          %s1914 = ssub.s32 36, %s1913
          %p1915 = scmp.lt.s32.totalorder %s1914, 32
          %s1916 = scalar_select %p1915, %s1914, 32
          %s1917 = smul.u32 128, %s1916
          %p1918 = scmp.ne.s32.totalorder 0, %s1917
          %s1919 = smul.addr %s1913, 8
          %s1920 = scalar_lea.vmem %s6, %s1919
          // Predicated region
          $region49: #{lenet_forward.3} parent=47 // pred_check
            %p1921 = pneg %p1918
          $region50: #{lenet_forward.3} parent=47 // pred_check_branch
            %1923 = sbr.rel (%p1921) target = $region52
          $region51: #{lenet_forward.3} parent=47 // pred_region
            // Predicated region
            $region53: #{lenet_forward.3} parent=51 // pred_check
              _
            $region54: #{lenet_forward.3} parent=51 // pred_check_branch
              %1925 = sbr.rel (0) target = $region56
            $region55: #{lenet_forward.3} parent=51 // pred_region
              // Predicated region
              $region75: #{lenet_forward.3} parent=55 // pred_check
                _
              $region76: #{lenet_forward.3} parent=55 // pred_check_branch
                %2036 = sbr.rel (0) target = $region78
              $region77: #{lenet_forward.3} parent=55 // pred_region
                %s2037 = sshrl.u32 %s1916, 5
                // While loop
                $region79: #{lenet_forward.3} parent=77 // loop_pre_header
                  _
                $region80: #{lenet_forward.3} parent=77 // loop_header
                  %s2039 = sphi 0, %s2041
                  %p2040 = scmp.ge.s32.totalorder %s2039, %s2037
                  %s2044 = sphi 0, %s2113
                  %s2045 = sphi %s1909, %s2116
                  %s2046 = sphi %s1920, %s2117
                $region81: #{lenet_forward.3} parent=77 // loop_header_branch
                  %2043 = sbr.rel (%p2040) target = $region85
                $region82: #{lenet_forward.3} parent=77 // loop_body
                  %v2047 = vld [vmem:[%s2045] sm:$0xff]
                  %2048 = vst [vmem:[%s2046] sm:$0xff] %v2047
                  %v2049 = vld [vmem:[%s2045 + $0x8] sm:$0xff]
                  %2050 = vst [vmem:[%s2046 + $0x8] sm:$0xff] %v2049
                  %v2051 = vld [vmem:[%s2045 + $0x10] sm:$0xff]
                  %2052 = vst [vmem:[%s2046 + $0x10] sm:$0xff] %v2051
                  %v2053 = vld [vmem:[%s2045 + $0x18] sm:$0xff]
                  %2054 = vst [vmem:[%s2046 + $0x18] sm:$0xff] %v2053
                  %v2055 = vld [vmem:[%s2045 + $0x20] sm:$0xff]
                  %2056 = vst [vmem:[%s2046 + $0x20] sm:$0xff] %v2055
                  %v2057 = vld [vmem:[%s2045 + $0x28] sm:$0xff]
                  %2058 = vst [vmem:[%s2046 + $0x28] sm:$0xff] %v2057
                  %v2059 = vld [vmem:[%s2045 + $0x30] sm:$0xff]
                  %2060 = vst [vmem:[%s2046 + $0x30] sm:$0xff] %v2059
                  %v2061 = vld [vmem:[%s2045 + $0x38] sm:$0xff]
                  %2062 = vst [vmem:[%s2046 + $0x38] sm:$0xff] %v2061
                  %v2063 = vld [vmem:[%s2045 + $0x40] sm:$0xff]
                  %2064 = vst [vmem:[%s2046 + $0x40] sm:$0xff] %v2063
                  %v2065 = vld [vmem:[%s2045 + $0x48] sm:$0xff]
                  %2066 = vst [vmem:[%s2046 + $0x48] sm:$0xff] %v2065
                  %v2067 = vld [vmem:[%s2045 + $0x50] sm:$0xff]
                  %2068 = vst [vmem:[%s2046 + $0x50] sm:$0xff] %v2067
                  %v2069 = vld [vmem:[%s2045 + $0x58] sm:$0xff]
                  %2070 = vst [vmem:[%s2046 + $0x58] sm:$0xff] %v2069
                  %v2071 = vld [vmem:[%s2045 + $0x60] sm:$0xff]
                  %2072 = vst [vmem:[%s2046 + $0x60] sm:$0xff] %v2071
                  %v2073 = vld [vmem:[%s2045 + $0x68] sm:$0xff]
                  %2074 = vst [vmem:[%s2046 + $0x68] sm:$0xff] %v2073
                  %v2075 = vld [vmem:[%s2045 + $0x70] sm:$0xff]
                  %2076 = vst [vmem:[%s2046 + $0x70] sm:$0xff] %v2075
                  %v2077 = vld [vmem:[%s2045 + $0x78] sm:$0xff]
                  %2078 = vst [vmem:[%s2046 + $0x78] sm:$0xff] %v2077
                  %v2079 = vld [vmem:[%s2045 + $0x80] sm:$0xff]
                  %2080 = vst [vmem:[%s2046 + $0x80] sm:$0xff] %v2079
                  %v2081 = vld [vmem:[%s2045 + $0x88] sm:$0xff]
                  %2082 = vst [vmem:[%s2046 + $0x88] sm:$0xff] %v2081
                  %v2083 = vld [vmem:[%s2045 + $0x90] sm:$0xff]
                  %2084 = vst [vmem:[%s2046 + $0x90] sm:$0xff] %v2083
                  %v2085 = vld [vmem:[%s2045 + $0x98] sm:$0xff]
                  %2086 = vst [vmem:[%s2046 + $0x98] sm:$0xff] %v2085
                  %v2087 = vld [vmem:[%s2045 + $0xa0] sm:$0xff]
                  %2088 = vst [vmem:[%s2046 + $0xa0] sm:$0xff] %v2087
                  %v2089 = vld [vmem:[%s2045 + $0xa8] sm:$0xff]
                  %2090 = vst [vmem:[%s2046 + $0xa8] sm:$0xff] %v2089
                  %v2091 = vld [vmem:[%s2045 + $0xb0] sm:$0xff]
                  %2092 = vst [vmem:[%s2046 + $0xb0] sm:$0xff] %v2091
                  %v2093 = vld [vmem:[%s2045 + $0xb8] sm:$0xff]
                  %2094 = vst [vmem:[%s2046 + $0xb8] sm:$0xff] %v2093
                  %v2095 = vld [vmem:[%s2045 + $0xc0] sm:$0xff]
                  %2096 = vst [vmem:[%s2046 + $0xc0] sm:$0xff] %v2095
                  %v2097 = vld [vmem:[%s2045 + $0xc8] sm:$0xff]
                  %2098 = vst [vmem:[%s2046 + $0xc8] sm:$0xff] %v2097
                  %v2099 = vld [vmem:[%s2045 + $0xd0] sm:$0xff]
                  %2100 = vst [vmem:[%s2046 + $0xd0] sm:$0xff] %v2099
                  %v2101 = vld [vmem:[%s2045 + $0xd8] sm:$0xff]
                  %2102 = vst [vmem:[%s2046 + $0xd8] sm:$0xff] %v2101
                  %v2103 = vld [vmem:[%s2045 + $0xe0] sm:$0xff]
                  %2104 = vst [vmem:[%s2046 + $0xe0] sm:$0xff] %v2103
                  %v2105 = vld [vmem:[%s2045 + $0xe8] sm:$0xff]
                  %2106 = vst [vmem:[%s2046 + $0xe8] sm:$0xff] %v2105
                  %v2107 = vld [vmem:[%s2045 + $0xf0] sm:$0xff]
                  %2108 = vst [vmem:[%s2046 + $0xf0] sm:$0xff] %v2107
                  %v2109 = vld [vmem:[%s2045 + $0xf8] sm:$0xff]
                  %2110 = vst [vmem:[%s2046 + $0xf8] sm:$0xff] %v2109
                  %s2111 = sadd.s32 1, %s2044
                  %p2112 = scmp.ge.s32.totalorder %s2111, %s2037
                  %s2113 = scalar_select %p2112, 0, %s2111
                  %s2114 = smul.u32 %s2113, 256
                  %s2115 = smul.u32 %s2113, 256
                  %s2116 = scalar_lea.vmem %s1909, %s2114 [#allocation2]
                  %s2117 = scalar_lea.vmem %s1920, %s2115
                $region83: #{lenet_forward.3} parent=77 // loop_footer
                  %s2041 = sadd.s32 %s2039, 1
                $region84: #{lenet_forward.3} parent=77 // loop_footer_branch
                  %2038 = sbr.rel target = $region80
                $region85: #{lenet_forward.3} parent=77 // loop_exit
                  _
                %s2118 = sshrl.u32 %s1916, 5
                %s2119 = sand.u32 %s1916, 31
                %s2120 = smul.u32 %s2118, 32
                %s2121 = smul.u32 8, %s2120
                %s2122 = scalar_lea.vmem %s1909, %s2121 [#allocation2]
                %s2123 = smul.u32 8, %s2120
                %s2124 = scalar_lea.vmem %s1920, %s2123
                // While loop
                $region86: #{lenet_forward.3} parent=77 // loop_pre_header
                  _
                $region87: #{lenet_forward.3} parent=77 // loop_header
                  %s2126 = sphi 0, %s2128
                  %p2127 = scmp.ge.s32.totalorder %s2126, %s2119
                  %s2131 = sphi 0, %s2138
                  %s2132 = sphi %s2122, %s2141
                  %s2133 = sphi %s2124, %s2142
                $region88: #{lenet_forward.3} parent=77 // loop_header_branch
                  %2130 = sbr.rel (%p2127) target = $region92
                $region89: #{lenet_forward.3} parent=77 // loop_body
                  %v2134 = vld [vmem:[%s2132] sm:$0xff]
                  %2135 = vst [vmem:[%s2133] sm:$0xff] %v2134
                  %s2136 = sadd.s32 1, %s2131
                  %p2137 = scmp.ge.s32.totalorder %s2136, %s2119
                  %s2138 = scalar_select %p2137, 0, %s2136
                  %s2139 = smul.u32 %s2138, 8
                  %s2140 = smul.u32 %s2138, 8
                  %s2141 = scalar_lea.vmem %s2122, %s2139 [#allocation2]
                  %s2142 = scalar_lea.vmem %s2124, %s2140
                $region90: #{lenet_forward.3} parent=77 // loop_footer
                  %s2128 = sadd.s32 %s2126, 1
                $region91: #{lenet_forward.3} parent=77 // loop_footer_branch
                  %2125 = sbr.rel target = $region87
                $region92: #{lenet_forward.3} parent=77 // loop_exit
                  _
              $region78: #{lenet_forward.3} parent=55 // pred_fallthru
                _
              // Predicated region
              $region93: #{lenet_forward.3} parent=55 // pred_check
                _
              $region94: #{lenet_forward.3} parent=55 // pred_check_branch
                %2144 = sbr.rel target = $region96
              $region95: #{lenet_forward.3} parent=55 // pred_region
                _
              $region96: #{lenet_forward.3} parent=55 // pred_fallthru
                _
            $region56: #{lenet_forward.3} parent=51 // pred_fallthru
              _
            // Predicated region
            $region57: #{lenet_forward.3} parent=51 // pred_check
              _
            $region58: #{lenet_forward.3} parent=51 // pred_check_branch
              %1927 = sbr.rel target = $region60
            $region59: #{lenet_forward.3} parent=51 // pred_region
              %s1929 = sshrl.u32 %s1916, 5
              // While loop
              $region61: #{lenet_forward.3} parent=59 // loop_pre_header
                _
              $region62: #{lenet_forward.3} parent=59 // loop_header
                %s1931 = sphi 0, %s1933
                %p1932 = scmp.ge.s32.totalorder %s1931, %s1929
                %s1936 = sphi 0, %s2005
                %s1937 = sphi %s1909, %s2008
                %s1938 = sphi %s1920, %s2009
              $region63: #{lenet_forward.3} parent=59 // loop_header_branch
                %1935 = sbr.rel (%p1932) target = $region67
              $region64: #{lenet_forward.3} parent=59 // loop_body
                %v1939 = vld [vmem:[%s1937] sm:$0xff]
                %1940 = vst [vmem:[%s1938] sm:$0xff] %v1939
                %v1941 = vld [vmem:[%s1937 + $0x8] sm:$0xff]
                %1942 = vst [vmem:[%s1938 + $0x8] sm:$0xff] %v1941
                %v1943 = vld [vmem:[%s1937 + $0x10] sm:$0xff]
                %1944 = vst [vmem:[%s1938 + $0x10] sm:$0xff] %v1943
                %v1945 = vld [vmem:[%s1937 + $0x18] sm:$0xff]
                %1946 = vst [vmem:[%s1938 + $0x18] sm:$0xff] %v1945
                %v1947 = vld [vmem:[%s1937 + $0x20] sm:$0xff]
                %1948 = vst [vmem:[%s1938 + $0x20] sm:$0xff] %v1947
                %v1949 = vld [vmem:[%s1937 + $0x28] sm:$0xff]
                %1950 = vst [vmem:[%s1938 + $0x28] sm:$0xff] %v1949
                %v1951 = vld [vmem:[%s1937 + $0x30] sm:$0xff]
                %1952 = vst [vmem:[%s1938 + $0x30] sm:$0xff] %v1951
                %v1953 = vld [vmem:[%s1937 + $0x38] sm:$0xff]
                %1954 = vst [vmem:[%s1938 + $0x38] sm:$0xff] %v1953
                %v1955 = vld [vmem:[%s1937 + $0x40] sm:$0xff]
                %1956 = vst [vmem:[%s1938 + $0x40] sm:$0xff] %v1955
                %v1957 = vld [vmem:[%s1937 + $0x48] sm:$0xff]
                %1958 = vst [vmem:[%s1938 + $0x48] sm:$0xff] %v1957
                %v1959 = vld [vmem:[%s1937 + $0x50] sm:$0xff]
                %1960 = vst [vmem:[%s1938 + $0x50] sm:$0xff] %v1959
                %v1961 = vld [vmem:[%s1937 + $0x58] sm:$0xff]
                %1962 = vst [vmem:[%s1938 + $0x58] sm:$0xff] %v1961
                %v1963 = vld [vmem:[%s1937 + $0x60] sm:$0xff]
                %1964 = vst [vmem:[%s1938 + $0x60] sm:$0xff] %v1963
                %v1965 = vld [vmem:[%s1937 + $0x68] sm:$0xff]
                %1966 = vst [vmem:[%s1938 + $0x68] sm:$0xff] %v1965
                %v1967 = vld [vmem:[%s1937 + $0x70] sm:$0xff]
                %1968 = vst [vmem:[%s1938 + $0x70] sm:$0xff] %v1967
                %v1969 = vld [vmem:[%s1937 + $0x78] sm:$0xff]
                %1970 = vst [vmem:[%s1938 + $0x78] sm:$0xff] %v1969
                %v1971 = vld [vmem:[%s1937 + $0x80] sm:$0xff]
                %1972 = vst [vmem:[%s1938 + $0x80] sm:$0xff] %v1971
                %v1973 = vld [vmem:[%s1937 + $0x88] sm:$0xff]
                %1974 = vst [vmem:[%s1938 + $0x88] sm:$0xff] %v1973
                %v1975 = vld [vmem:[%s1937 + $0x90] sm:$0xff]
                %1976 = vst [vmem:[%s1938 + $0x90] sm:$0xff] %v1975
                %v1977 = vld [vmem:[%s1937 + $0x98] sm:$0xff]
                %1978 = vst [vmem:[%s1938 + $0x98] sm:$0xff] %v1977
                %v1979 = vld [vmem:[%s1937 + $0xa0] sm:$0xff]
                %1980 = vst [vmem:[%s1938 + $0xa0] sm:$0xff] %v1979
                %v1981 = vld [vmem:[%s1937 + $0xa8] sm:$0xff]
                %1982 = vst [vmem:[%s1938 + $0xa8] sm:$0xff] %v1981
                %v1983 = vld [vmem:[%s1937 + $0xb0] sm:$0xff]
                %1984 = vst [vmem:[%s1938 + $0xb0] sm:$0xff] %v1983
                %v1985 = vld [vmem:[%s1937 + $0xb8] sm:$0xff]
                %1986 = vst [vmem:[%s1938 + $0xb8] sm:$0xff] %v1985
                %v1987 = vld [vmem:[%s1937 + $0xc0] sm:$0xff]
                %1988 = vst [vmem:[%s1938 + $0xc0] sm:$0xff] %v1987
                %v1989 = vld [vmem:[%s1937 + $0xc8] sm:$0xff]
                %1990 = vst [vmem:[%s1938 + $0xc8] sm:$0xff] %v1989
                %v1991 = vld [vmem:[%s1937 + $0xd0] sm:$0xff]
                %1992 = vst [vmem:[%s1938 + $0xd0] sm:$0xff] %v1991
                %v1993 = vld [vmem:[%s1937 + $0xd8] sm:$0xff]
                %1994 = vst [vmem:[%s1938 + $0xd8] sm:$0xff] %v1993
                %v1995 = vld [vmem:[%s1937 + $0xe0] sm:$0xff]
                %1996 = vst [vmem:[%s1938 + $0xe0] sm:$0xff] %v1995
                %v1997 = vld [vmem:[%s1937 + $0xe8] sm:$0xff]
                %1998 = vst [vmem:[%s1938 + $0xe8] sm:$0xff] %v1997
                %v1999 = vld [vmem:[%s1937 + $0xf0] sm:$0xff]
                %2000 = vst [vmem:[%s1938 + $0xf0] sm:$0xff] %v1999
                %v2001 = vld [vmem:[%s1937 + $0xf8] sm:$0xff]
                %2002 = vst [vmem:[%s1938 + $0xf8] sm:$0xff] %v2001
                %s2003 = sadd.s32 1, %s1936
                %p2004 = scmp.ge.s32.totalorder %s2003, %s1929
                %s2005 = scalar_select %p2004, 0, %s2003
                %s2006 = smul.u32 %s2005, 256
                %s2007 = smul.u32 %s2005, 256
                %s2008 = scalar_lea.vmem %s1909, %s2006 [#allocation2]
                %s2009 = scalar_lea.vmem %s1920, %s2007
              $region65: #{lenet_forward.3} parent=59 // loop_footer
                %s1933 = sadd.s32 %s1931, 1
              $region66: #{lenet_forward.3} parent=59 // loop_footer_branch
                %1930 = sbr.rel target = $region62
              $region67: #{lenet_forward.3} parent=59 // loop_exit
                _
              %s2010 = sshrl.u32 %s1916, 5
              %s2011 = sand.u32 %s1916, 31
              %s2012 = smul.u32 %s2010, 32
              %s2013 = smul.u32 8, %s2012
              %s2014 = scalar_lea.vmem %s1909, %s2013 [#allocation2]
              %s2015 = smul.u32 8, %s2012
              %s2016 = scalar_lea.vmem %s1920, %s2015
              // While loop
              $region68: #{lenet_forward.3} parent=59 // loop_pre_header
                _
              $region69: #{lenet_forward.3} parent=59 // loop_header
                %s2018 = sphi 0, %s2020
                %p2019 = scmp.ge.s32.totalorder %s2018, %s2011
                %s2023 = sphi 0, %s2030
                %s2024 = sphi %s2014, %s2033
                %s2025 = sphi %s2016, %s2034
              $region70: #{lenet_forward.3} parent=59 // loop_header_branch
                %2022 = sbr.rel (%p2019) target = $region74
              $region71: #{lenet_forward.3} parent=59 // loop_body
                %v2026 = vld [vmem:[%s2024] sm:$0xff]
                %2027 = vst [vmem:[%s2025] sm:$0xff] %v2026
                %s2028 = sadd.s32 1, %s2023
                %p2029 = scmp.ge.s32.totalorder %s2028, %s2011
                %s2030 = scalar_select %p2029, 0, %s2028
                %s2031 = smul.u32 %s2030, 8
                %s2032 = smul.u32 %s2030, 8
                %s2033 = scalar_lea.vmem %s2014, %s2031 [#allocation2]
                %s2034 = scalar_lea.vmem %s2016, %s2032
              $region72: #{lenet_forward.3} parent=59 // loop_footer
                %s2020 = sadd.s32 %s2018, 1
              $region73: #{lenet_forward.3} parent=59 // loop_footer_branch
                %2017 = sbr.rel target = $region69
              $region74: #{lenet_forward.3} parent=59 // loop_exit
                _
            $region60: #{lenet_forward.3} parent=51 // pred_fallthru
              _
          $region52: #{lenet_forward.3} parent=47 // pred_fallthru
            _
          %2145 = vnop
        $region48: #{lenet_forward.3} parent=43 // pred_fallthru
          _
      $region44: #{lenet_forward.3} parent=5 // pred_fallthru
        _
      %p2146 = scmp.le.s32.totalorder 2, %s12
      // Predicated region
      $region97: #{lenet_forward.3} parent=5 // pred_check
        %p2147 = pneg %p2146
      $region98: #{lenet_forward.3} parent=5 // pred_check_branch
        %2149 = sbr.rel (%p2147) target = $region100
      $region99: #{lenet_forward.3} parent=5 // pred_region
        %s2150 = ssub.s32 %s12, 2
        // Predicated region
        $region101: #{lenet_forward.3} parent=99 // pred_check
          %p2151 = pneg %p187
        $region102: #{lenet_forward.3} parent=99 // pred_check_branch
          %2153 = sbr.rel (%p2151) target = $region104
        $region103: #{lenet_forward.3} parent=99 // pred_region
          %s2154 = sand.u32 %s172, 1
          %s2155 = sand.u32 %s172, 1
          %s2156 = smul.addr %s2155, 256
          %s2157 = scalar_lea.vmem [#allocation2], %s2156
        $region104: #{lenet_forward.3} parent=99 // pred_fallthru
          _
      $region100: #{lenet_forward.3} parent=5 // pred_fallthru
        _
    $region6: #{lenet_forward.3} parent=1 // loop_footer
      %s16 = sadd.s32 1, %s12
    $region7: #{lenet_forward.3} parent=1 // loop_footer_branch
      %11 = sbr.rel target = $region3
    $region8: #{lenet_forward.3} parent=1 // loop_exit
      _

// kernel: lenet_forward.4
$region0: #{lenet_forward.4}
  #allocation0 [shape = 'u32[]', space=smem, size = 0x4, offset = 0x4, fixed_abs, tag = 'smem constant byte address 0x4 - core index']
  #allocation1 [shape = 'u32[144,128]{1,0:T(1,128)}', space=vmem, size = 0x12000, scoped, tag = 'internal scratch']
  %s0 = inlined_call_operand.vmem [shape: bf16[32,500], index: 0, kind: input, shape index: {}]
  %s1 = inlined_call_operand.vmem [shape: bf16[32,500], index: 1, kind: input, shape index: {}]
  %s2 = inlined_call_operand.vmem [shape: bf16[32,500], index: 2, kind: input, shape index: {}]
  %s3 = inlined_call_operand.vmem [shape: bf16[32,500], index: 3, kind: input, shape index: {}]
  %s4 = inlined_call_operand.vmem [shape: bf16[500,128], index: 4, kind: input, shape index: {}]
  %s5 = inlined_call_operand.vmem [shape: f32[1,128], index: 5, kind: input, shape index: {}]
  %s6 = inlined_call_operand.vmem [shape: f32[32,128], index: 6, kind: output, shape index: {}]
  %s7 = sld [smem:[#allocation0]]
  $region34: #{lenet_forward.4} parent=0
    _
  %s9 = ssub.s32 1, %s7
  %s10 = scalar_select 0, %s9, %s7
  // Predicated region
  $region2: #{lenet_forward.4} parent=0 // pred_check
    _
  $region3: #{lenet_forward.4} parent=0 // pred_check_branch
    %12 = sbr.rel (0) target = $region5
  $region4: #{lenet_forward.4} parent=0 // pred_region
    _
  $region5: #{lenet_forward.4} parent=0 // pred_fallthru
    _
  // Predicated region
  $region6: #{lenet_forward.4} parent=0 // pred_check
    _
  $region7: #{lenet_forward.4} parent=0 // pred_check_branch
    %14 = sbr.rel (0) target = $region9
  $region8: #{lenet_forward.4} parent=0 // pred_region
    _
  $region9: #{lenet_forward.4} parent=0 // pred_fallthru
    _
  // Predicated region
  $region10: #{lenet_forward.4} parent=0 // pred_check
    _
  $region11: #{lenet_forward.4} parent=0 // pred_check_branch
    %16 = sbr.rel (0) target = $region13
  $region12: #{lenet_forward.4} parent=0 // pred_region
    _
  $region13: #{lenet_forward.4} parent=0 // pred_fallthru
    _
  // Predicated region
  $region14: #{lenet_forward.4} parent=0 // pred_check
    _
  $region15: #{lenet_forward.4} parent=0 // pred_check_branch
    %18 = sbr.rel (0) target = $region17
  $region16: #{lenet_forward.4} parent=0 // pred_region
    _
  $region17: #{lenet_forward.4} parent=0 // pred_fallthru
    _
  // Predicated region
  $region18: #{lenet_forward.4} parent=0 // pred_check
    _
  $region19: #{lenet_forward.4} parent=0 // pred_check_branch
    %20 = sbr.rel (0) target = $region21
  $region20: #{lenet_forward.4} parent=0 // pred_region
    _
  $region21: #{lenet_forward.4} parent=0 // pred_fallthru
    _
  // Predicated region
  $region22: #{lenet_forward.4} parent=0 // pred_check
    _
  $region23: #{lenet_forward.4} parent=0 // pred_check_branch
    %22 = sbr.rel (0) target = $region25
  $region24: #{lenet_forward.4} parent=0 // pred_region
    _
  $region25: #{lenet_forward.4} parent=0 // pred_fallthru
    _
  %v24 = vld [vmem:[%s4] sm:$0xf]
  %v25 = vld [vmem:[%s4 + $0x4] sm:$0xf]
  %v26 = vld [vmem:[%s4 + $0x8] sm:$0xf]
  %v27 = vld [vmem:[%s4 + $0xc] sm:$0xf]
  %v28 = vld [vmem:[%s4 + $0x10] sm:$0xf]
  %v29 = vld [vmem:[%s4 + $0x14] sm:$0xf]
  %v30 = vld [vmem:[%s4 + $0x18] sm:$0xf]
  %v31 = vld [vmem:[%s4 + $0x1c] sm:$0xf]
  %v32 = vld [vmem:[%s4 + $0x20] sm:$0xf]
  %v33 = vld [vmem:[%s4 + $0x24] sm:$0xf]
  %v34 = vld [vmem:[%s4 + $0x28] sm:$0xf]
  %v35 = vld [vmem:[%s4 + $0x2c] sm:$0xf]
  %v36 = vld [vmem:[%s4 + $0x30] sm:$0xf]
  %v37 = vld [vmem:[%s4 + $0x34] sm:$0xf]
  %v38 = vld [vmem:[%s4 + $0x38] sm:$0xf]
  %v39 = vld [vmem:[%s4 + $0x3c] sm:$0xf]
  %v40 = vld [vmem:[%s4 + $0x40] sm:$0xf]
  %v41 = vld [vmem:[%s4 + $0x44] sm:$0xf]
  %v42 = vld [vmem:[%s4 + $0x48] sm:$0xf]
  %v43 = vld [vmem:[%s4 + $0x4c] sm:$0xf]
  %v44 = vld [vmem:[%s4 + $0x50] sm:$0xf]
  %v45 = vld [vmem:[%s4 + $0x54] sm:$0xf]
  %v46 = vld [vmem:[%s4 + $0x58] sm:$0xf]
  %v47 = vld [vmem:[%s4 + $0x5c] sm:$0xf]
  %v48 = vld [vmem:[%s4 + $0x60] sm:$0xf]
  %v49 = vld [vmem:[%s4 + $0x64] sm:$0xf]
  %v50 = vld [vmem:[%s4 + $0x68] sm:$0xf]
  %v51 = vld [vmem:[%s4 + $0x6c] sm:$0xf]
  %v52 = vld [vmem:[%s4 + $0x70] sm:$0xf]
  %v53 = vld [vmem:[%s4 + $0x74] sm:$0xf]
  %v54 = vld [vmem:[%s4 + $0x78] sm:$0xf]
  %v55 = vld [vmem:[%s4 + $0x7c] sm:$0xf]
  %v56 = vld [vmem:[%s4 + $0x80] sm:$0xf]
  %v57 = vld [vmem:[%s4 + $0x84] sm:$0xf]
  %v58 = vld [vmem:[%s4 + $0x88] sm:$0xf]
  %v59 = vld [vmem:[%s4 + $0x8c] sm:$0xf]
  %v60 = vld [vmem:[%s4 + $0x90] sm:$0xf]
  %v61 = vld [vmem:[%s4 + $0x94] sm:$0xf]
  %v62 = vld [vmem:[%s4 + $0x98] sm:$0xf]
  %v63 = vld [vmem:[%s4 + $0x9c] sm:$0xf]
  %v64 = vld [vmem:[%s4 + $0xa0] sm:$0xf]
  %v65 = vld [vmem:[%s4 + $0xa4] sm:$0xf]
  %v66 = vld [vmem:[%s4 + $0xa8] sm:$0xf]
  %v67 = vld [vmem:[%s4 + $0xac] sm:$0xf]
  %v68 = vld [vmem:[%s4 + $0xb0] sm:$0xf]
  %v69 = vld [vmem:[%s4 + $0xb4] sm:$0xf]
  %v70 = vld [vmem:[%s4 + $0xb8] sm:$0xf]
  %v71 = vld [vmem:[%s4 + $0xbc] sm:$0xf]
  %v72 = vld [vmem:[%s4 + $0xc0] sm:$0xf]
  %v73 = vld [vmem:[%s4 + $0xc4] sm:$0xf]
  %v74 = vld [vmem:[%s4 + $0xc8] sm:$0xf]
  %v75 = vld [vmem:[%s4 + $0xcc] sm:$0xf]
  %v76 = vld [vmem:[%s4 + $0xd0] sm:$0xf]
  %v77 = vld [vmem:[%s4 + $0xd4] sm:$0xf]
  %v78 = vld [vmem:[%s4 + $0xd8] sm:$0xf]
  %v79 = vld [vmem:[%s4 + $0xdc] sm:$0xf]
  %v80 = vld [vmem:[%s4 + $0xe0] sm:$0xf]
  %v81 = vld [vmem:[%s4 + $0xe4] sm:$0xf]
  %v82 = vld [vmem:[%s4 + $0xe8] sm:$0xf]
  %v83 = vld [vmem:[%s4 + $0xec] sm:$0xf]
  %v84 = vld [vmem:[%s4 + $0xf0] sm:$0xf]
  %v85 = vld [vmem:[%s4 + $0xf4] sm:$0xf]
  %v86 = vld [vmem:[%s4 + $0xf8] sm:$0x3]
  %v87 = vld [vmem:[%s0] sm:$0xff]
  %v88 = vld [vmem:[%s0 + $0x8] sm:$0xff]
  %v89 = vld [vmem:[%s0 + $0x10] sm:$0xff]
  %v90 = vld [vmem:[%s0 + $0x18] sm:$0xff]
  %v91 = vld [vmem:[%s0 + $0x20] sm:$0xff]
  %v92 = vld [vmem:[%s0 + $0x28] sm:$0xff]
  %v93 = vld [vmem:[%s0 + $0x30] sm:$0xff]
  %v94 = vld [vmem:[%s0 + $0x38] sm:$0xff]
  %v103 = vunpack.c.l.b16 %v87
  %v104 = vunpack.c.h.b16 %v87
  %v105 = vunpack.c.l.b16 %v88
  %v106 = vunpack.c.h.b16 %v88
  %v107 = vunpack.c.l.b16 %v89
  %v108 = vunpack.c.h.b16 %v89
  %v109 = vunpack.c.l.b16 %v90
  %v110 = vunpack.c.h.b16 %v90
  %v111 = vunpack.c.l.b16 %v91
  %v112 = vunpack.c.h.b16 %v91
  %v113 = vunpack.c.l.b16 %v92
  %v114 = vunpack.c.h.b16 %v92
  %v115 = vunpack.c.l.b16 %v93
  %v116 = vunpack.c.h.b16 %v93
  %v117 = vunpack.c.l.b16 %v94
  %v118 = vunpack.c.h.b16 %v94
  %v119 = vpack.c.b16 %v107, %v103
  %v120 = vpack.c.b16 %v108, %v104
  %v121 = vpack.c.b16 %v109, %v105
  %v122 = vpack.c.b16 %v110, %v106
  %v123 = vpack.c.b16 %v115, %v111
  %v124 = vpack.c.b16 %v116, %v112
  %v125 = vpack.c.b16 %v117, %v113
  %v126 = vpack.c.b16 %v118, %v114
  %v196 = vunpack.c.l.b16 %v24
  %v197 = vunpack.c.l.b16 %v25
  %v198 = vunpack.c.l.b16 %v26
  %v199 = vunpack.c.l.b16 %v27
  %v200 = vunpack.c.l.b16 %v28
  %v201 = vunpack.c.l.b16 %v29
  %v202 = vunpack.c.l.b16 %v30
  %v203 = vunpack.c.l.b16 %v31
  %v204 = vunpack.c.l.b16 %v32
  %v205 = vunpack.c.l.b16 %v33
  %v206 = vunpack.c.l.b16 %v34
  %v207 = vunpack.c.l.b16 %v35
  %v208 = vunpack.c.l.b16 %v36
  %v209 = vunpack.c.l.b16 %v37
  %v210 = vunpack.c.l.b16 %v38
  %v211 = vunpack.c.l.b16 %v39
  %v212 = vunpack.c.l.b16 %v40
  %v213 = vunpack.c.l.b16 %v41
  %v214 = vunpack.c.l.b16 %v42
  %v215 = vunpack.c.l.b16 %v43
  %v216 = vunpack.c.l.b16 %v44
  %v217 = vunpack.c.l.b16 %v45
  %v218 = vunpack.c.l.b16 %v46
  %v219 = vunpack.c.l.b16 %v47
  %v220 = vunpack.c.l.b16 %v48
  %v221 = vunpack.c.l.b16 %v49
  %v222 = vunpack.c.l.b16 %v50
  %v223 = vunpack.c.l.b16 %v51
  %v224 = vunpack.c.l.b16 %v52
  %v225 = vunpack.c.l.b16 %v53
  %v226 = vunpack.c.l.b16 %v54
  %v227 = vunpack.c.l.b16 %v55
  %v228 = vunpack.c.l.b16 %v56
  %v229 = vunpack.c.l.b16 %v57
  %v230 = vunpack.c.l.b16 %v58
  %v231 = vunpack.c.l.b16 %v59
  %v232 = vunpack.c.l.b16 %v60
  %v233 = vunpack.c.l.b16 %v61
  %v234 = vunpack.c.l.b16 %v62
  %v235 = vunpack.c.l.b16 %v63
  %v236 = vunpack.c.l.b16 %v64
  %v237 = vunpack.c.l.b16 %v65
  %v238 = vunpack.c.l.b16 %v66
  %v239 = vunpack.c.l.b16 %v67
  %v240 = vunpack.c.l.b16 %v68
  %v241 = vunpack.c.l.b16 %v69
  %v242 = vunpack.c.l.b16 %v70
  %v243 = vunpack.c.l.b16 %v71
  %v244 = vunpack.c.l.b16 %v72
  %v245 = vunpack.c.l.b16 %v73
  %v246 = vunpack.c.l.b16 %v74
  %v247 = vunpack.c.l.b16 %v75
  %v248 = vunpack.c.l.b16 %v76
  %v249 = vunpack.c.l.b16 %v77
  %v250 = vunpack.c.l.b16 %v78
  %v251 = vunpack.c.l.b16 %v79
  %v252 = vunpack.c.l.b16 %v80
  %v253 = vunpack.c.l.b16 %v81
  %v254 = vunpack.c.l.b16 %v82
  %v255 = vunpack.c.l.b16 %v83
  %v256 = vunpack.c.l.b16 %v84
  %v257 = vunpack.c.l.b16 %v85
  %v258 = vunpack.c.l.b16 %v86
  %v259 = vpack.c.b16 %v197, %v196
  %v260 = vpack.c.b16 %v199, %v198
  %v261 = vpack.c.b16 %v201, %v200
  %v262 = vpack.c.b16 %v203, %v202
  %v263 = vpack.c.b16 %v205, %v204
  %v264 = vpack.c.b16 %v207, %v206
  %v265 = vpack.c.b16 %v209, %v208
  %v266 = vpack.c.b16 %v211, %v210
  %v267 = vpack.c.b16 %v213, %v212
  %v268 = vpack.c.b16 %v215, %v214
  %v269 = vpack.c.b16 %v217, %v216
  %v270 = vpack.c.b16 %v219, %v218
  %v271 = vpack.c.b16 %v221, %v220
  %v272 = vpack.c.b16 %v223, %v222
  %v273 = vpack.c.b16 %v225, %v224
  %v274 = vpack.c.b16 %v227, %v226
  %v275 = vpack.c.b16 %v229, %v228
  %v276 = vpack.c.b16 %v231, %v230
  %v277 = vpack.c.b16 %v233, %v232
  %v278 = vpack.c.b16 %v235, %v234
  %v279 = vpack.c.b16 %v237, %v236
  %v280 = vpack.c.b16 %v239, %v238
  %v281 = vpack.c.b16 %v241, %v240
  %v282 = vpack.c.b16 %v243, %v242
  %v283 = vpack.c.b16 %v245, %v244
  %v284 = vpack.c.b16 %v247, %v246
  %v285 = vpack.c.b16 %v249, %v248
  %v286 = vpack.c.b16 %v251, %v250
  %v287 = vpack.c.b16 %v253, %v252
  %v288 = vpack.c.b16 %v255, %v254
  %v289 = vpack.c.b16 %v257, %v256
  %v290 = vpack.c.b16 %v258, %v258
  %vm322 = vcmask 949248
  %v324 = vsel %vm322, %v122, 0
  %v327 = vsel %vm322, %v126, 0
  %vm329 = vcmask 1041408
  %v331 = vsel %vm329, %v290, 0
  %333 = vmatprep.subr.bf16.mxu0 0
  %334 = vmatpush1.bf16.msra.mxu0 %v259
  %335 = vmatprep.subr.bf16.mxu0 0
  %336 = vmatpush1.bf16.msra.mxu0 %v260
  %337 = vmatprep.subr.bf16.mxu0 0
  %338 = vmatpush1.bf16.msra.mxu0 %v261
  %339 = vmatprep.subr.bf16.mxu0 0
  %340 = vmatpush1.bf16.msra.mxu0 %v262
  %341 = vmatprep.subr.bf16.mxu0 0
  %342 = vmatpush1.bf16.msra.mxu0 %v263
  %343 = vmatprep.subr.bf16.mxu0 0
  %344 = vmatpush1.bf16.msra.mxu0 %v264
  %345 = vmatprep.subr.bf16.mxu0 0
  %346 = vmatpush1.bf16.msra.mxu0 %v265
  %347 = vmatprep.subr.bf16.mxu0 0
  %348 = vmatpush1.bf16.msra.mxu0 %v266
  %349 = vmatprep.subr.bf16.mxu0 0
  %350 = vmatpush1.bf16.msra.mxu0 %v267
  %351 = vmatprep.subr.bf16.mxu0 0
  %352 = vmatpush1.bf16.msra.mxu0 %v268
  %353 = vmatprep.subr.bf16.mxu0 0
  %354 = vmatpush1.bf16.msra.mxu0 %v269
  %355 = vmatprep.subr.bf16.mxu0 0
  %356 = vmatpush1.bf16.msra.mxu0 %v270
  %357 = vmatprep.subr.bf16.mxu0 0
  %358 = vmatpush1.bf16.msra.mxu0 %v271
  %359 = vmatprep.subr.bf16.mxu0 0
  %360 = vmatpush1.bf16.msra.mxu0 %v272
  %361 = vmatprep.subr.bf16.mxu0 0
  %362 = vmatpush1.bf16.msra.mxu0 %v273
  %363 = vmatprep.subr.bf16.mxu0 0
  %364 = vmatpush1.bf16.msra.mxu0 %v274
  %365 = vmatprep.mubr.bf16.mxu0 %v120
  %366 = vmatmul.mubr.bf16.gmra.mrb[0].mxu0 %v119
  %v367 = vpop.f32.mrb[0].mxu0
  %v368 = vadd.f32 0.0, %v367
  %v369 = vpop.f32.mrb[0].mxu0
  %v370 = vpop.f32.mrb[0].mxu0
  %v371 = vadd.f32 0.0, %v370
  %v372 = vpop.f32.mrb[0].mxu0
  %373 = vmatprep.mubr.bf16.mxu0 %v124
  %374 = vmatmul.mubr.bf16.gmra.mrb[0].mxu0 %v123
  %v375 = vpop.f32.mrb[0].mxu0
  %v376 = vadd.f32 0.0, %v375
  %v377 = vpop.f32.mrb[0].mxu0
  %v378 = vpop.f32.mrb[0].mxu0
  %v379 = vadd.f32 0.0, %v378
  %v380 = vpop.f32.mrb[0].mxu0
  %381 = vdwg.mxu0
  %382 = vmatprep.subr.bf16.mxu0 0
  %383 = vmatpush1.bf16.msra.mxu0 %v275
  %384 = vmatprep.subr.bf16.mxu0 0
  %385 = vmatpush1.bf16.msra.mxu0 %v276
  %386 = vmatprep.subr.bf16.mxu0 0
  %387 = vmatpush1.bf16.msra.mxu0 %v277
  %388 = vmatprep.subr.bf16.mxu0 0
  %389 = vmatpush1.bf16.msra.mxu0 %v278
  %390 = vmatprep.subr.bf16.mxu0 0
  %391 = vmatpush1.bf16.msra.mxu0 %v279
  %392 = vmatprep.subr.bf16.mxu0 0
  %393 = vmatpush1.bf16.msra.mxu0 %v280
  %394 = vmatprep.subr.bf16.mxu0 0
  %395 = vmatpush1.bf16.msra.mxu0 %v281
  %396 = vmatprep.subr.bf16.mxu0 0
  %397 = vmatpush1.bf16.msra.mxu0 %v282
  %398 = vmatprep.subr.bf16.mxu0 0
  %399 = vmatpush1.bf16.msra.mxu0 %v283
  %400 = vmatprep.subr.bf16.mxu0 0
  %401 = vmatpush1.bf16.msra.mxu0 %v284
  %402 = vmatprep.subr.bf16.mxu0 0
  %403 = vmatpush1.bf16.msra.mxu0 %v285
  %404 = vmatprep.subr.bf16.mxu0 0
  %405 = vmatpush1.bf16.msra.mxu0 %v286
  %406 = vmatprep.subr.bf16.mxu0 0
  %407 = vmatpush1.bf16.msra.mxu0 %v287
  %408 = vmatprep.subr.bf16.mxu0 0
  %409 = vmatpush1.bf16.msra.mxu0 %v288
  %410 = vmatprep.subr.bf16.mxu0 0
  %411 = vmatpush1.bf16.msra.mxu0 %v289
  %412 = vmatprep.subr.bf16.mxu0 0
  %413 = vmatpush1.bf16.msra.mxu0 %v331
  %414 = vmatprep.mubr.bf16.mxu0 %v324
  %415 = vmatmul.mubr.bf16.gmra.mrb[0].mxu0 %v121
  %v416 = vpop.f32.mrb[0].mxu0
  %v417 = vadd.f32 %v368, %v416
  %v418 = vpop.f32.mrb[0].mxu0
  %v419 = vpop.f32.mrb[0].mxu0
  %v420 = vadd.f32 %v371, %v419
  %v421 = vpop.f32.mrb[0].mxu0
  %422 = vmatprep.mubr.bf16.mxu0 %v327
  %423 = vmatmul.mubr.bf16.gmra.mrb[0].mxu0 %v125
  %v424 = vpop.f32.mrb[0].mxu0
  %v425 = vadd.f32 %v376, %v424
  %v426 = vpop.f32.mrb[0].mxu0
  %v427 = vpop.f32.mrb[0].mxu0
  %v428 = vadd.f32 %v379, %v427
  %v429 = vpop.f32.mrb[0].mxu0
  %430 = vdwg.mxu0
  %v431 = vld [vmem:[%s1] sm:$0xff]
  %v432 = vld [vmem:[%s1 + $0x8] sm:$0xff]
  %v433 = vld [vmem:[%s1 + $0x10] sm:$0xff]
  %v434 = vld [vmem:[%s1 + $0x18] sm:$0xff]
  %v435 = vld [vmem:[%s1 + $0x20] sm:$0xff]
  %v436 = vld [vmem:[%s1 + $0x28] sm:$0xff]
  %v437 = vld [vmem:[%s1 + $0x30] sm:$0xff]
  %v438 = vld [vmem:[%s1 + $0x38] sm:$0xff]
  %v447 = vunpack.c.l.b16 %v431
  %v448 = vunpack.c.h.b16 %v431
  %v449 = vunpack.c.l.b16 %v432
  %v450 = vunpack.c.h.b16 %v432
  %v451 = vunpack.c.l.b16 %v433
  %v452 = vunpack.c.h.b16 %v433
  %v453 = vunpack.c.l.b16 %v434
  %v454 = vunpack.c.h.b16 %v434
  %v455 = vunpack.c.l.b16 %v435
  %v456 = vunpack.c.h.b16 %v435
  %v457 = vunpack.c.l.b16 %v436
  %v458 = vunpack.c.h.b16 %v436
  %v459 = vunpack.c.l.b16 %v437
  %v460 = vunpack.c.h.b16 %v437
  %v461 = vunpack.c.l.b16 %v438
  %v462 = vunpack.c.h.b16 %v438
  %v463 = vpack.c.b16 %v451, %v447
  %v464 = vpack.c.b16 %v452, %v448
  %v465 = vpack.c.b16 %v453, %v449
  %v466 = vpack.c.b16 %v454, %v450
  %v467 = vpack.c.b16 %v459, %v455
  %v468 = vpack.c.b16 %v460, %v456
  %v469 = vpack.c.b16 %v461, %v457
  %v470 = vpack.c.b16 %v462, %v458
  %v478 = vsel %vm322, %v466, 0
  %v481 = vsel %vm322, %v470, 0
  %483 = vmatprep.subr.bf16.mxu0 0
  %484 = vmatpush1.bf16.msra.mxu0 %v259
  %485 = vmatprep.subr.bf16.mxu0 0
  %486 = vmatpush1.bf16.msra.mxu0 %v260
  %487 = vmatprep.subr.bf16.mxu0 0
  %488 = vmatpush1.bf16.msra.mxu0 %v261
  %489 = vmatprep.subr.bf16.mxu0 0
  %490 = vmatpush1.bf16.msra.mxu0 %v262
  %491 = vmatprep.subr.bf16.mxu0 0
  %492 = vmatpush1.bf16.msra.mxu0 %v263
  %493 = vmatprep.subr.bf16.mxu0 0
  %494 = vmatpush1.bf16.msra.mxu0 %v264
  %495 = vmatprep.subr.bf16.mxu0 0
  %496 = vmatpush1.bf16.msra.mxu0 %v265
  %497 = vmatprep.subr.bf16.mxu0 0
  %498 = vmatpush1.bf16.msra.mxu0 %v266
  %499 = vmatprep.subr.bf16.mxu0 0
  %500 = vmatpush1.bf16.msra.mxu0 %v267
  %501 = vmatprep.subr.bf16.mxu0 0
  %502 = vmatpush1.bf16.msra.mxu0 %v268
  %503 = vmatprep.subr.bf16.mxu0 0
  %504 = vmatpush1.bf16.msra.mxu0 %v269
  %505 = vmatprep.subr.bf16.mxu0 0
  %506 = vmatpush1.bf16.msra.mxu0 %v270
  %507 = vmatprep.subr.bf16.mxu0 0
  %508 = vmatpush1.bf16.msra.mxu0 %v271
  %509 = vmatprep.subr.bf16.mxu0 0
  %510 = vmatpush1.bf16.msra.mxu0 %v272
  %511 = vmatprep.subr.bf16.mxu0 0
  %512 = vmatpush1.bf16.msra.mxu0 %v273
  %513 = vmatprep.subr.bf16.mxu0 0
  %514 = vmatpush1.bf16.msra.mxu0 %v274
  %515 = vmatprep.mubr.bf16.mxu0 %v464
  %516 = vmatmul.mubr.bf16.gmra.mrb[0].mxu0 %v463
  %v517 = vpop.f32.mrb[0].mxu0
  %v518 = vadd.f32 0.0, %v517
  %v519 = vpop.f32.mrb[0].mxu0
  %v520 = vpop.f32.mrb[0].mxu0
  %v521 = vadd.f32 0.0, %v520
  %v522 = vpop.f32.mrb[0].mxu0
  %523 = vmatprep.mubr.bf16.mxu0 %v468
  %524 = vmatmul.mubr.bf16.gmra.mrb[0].mxu0 %v467
  %v525 = vpop.f32.mrb[0].mxu0
  %v526 = vadd.f32 0.0, %v525
  %v527 = vpop.f32.mrb[0].mxu0
  %v528 = vpop.f32.mrb[0].mxu0
  %v529 = vadd.f32 0.0, %v528
  %v530 = vpop.f32.mrb[0].mxu0
  %531 = vdwg.mxu0
  %532 = vmatprep.subr.bf16.mxu0 0
  %533 = vmatpush1.bf16.msra.mxu0 %v275
  %534 = vmatprep.subr.bf16.mxu0 0
  %535 = vmatpush1.bf16.msra.mxu0 %v276
  %536 = vmatprep.subr.bf16.mxu0 0
  %537 = vmatpush1.bf16.msra.mxu0 %v277
  %538 = vmatprep.subr.bf16.mxu0 0
  %539 = vmatpush1.bf16.msra.mxu0 %v278
  %540 = vmatprep.subr.bf16.mxu0 0
  %541 = vmatpush1.bf16.msra.mxu0 %v279
  %542 = vmatprep.subr.bf16.mxu0 0
  %543 = vmatpush1.bf16.msra.mxu0 %v280
  %544 = vmatprep.subr.bf16.mxu0 0
  %545 = vmatpush1.bf16.msra.mxu0 %v281
  %546 = vmatprep.subr.bf16.mxu0 0
  %547 = vmatpush1.bf16.msra.mxu0 %v282
  %548 = vmatprep.subr.bf16.mxu0 0
  %549 = vmatpush1.bf16.msra.mxu0 %v283
  %550 = vmatprep.subr.bf16.mxu0 0
  %551 = vmatpush1.bf16.msra.mxu0 %v284
  %552 = vmatprep.subr.bf16.mxu0 0
  %553 = vmatpush1.bf16.msra.mxu0 %v285
  %554 = vmatprep.subr.bf16.mxu0 0
  %555 = vmatpush1.bf16.msra.mxu0 %v286
  %556 = vmatprep.subr.bf16.mxu0 0
  %557 = vmatpush1.bf16.msra.mxu0 %v287
  %558 = vmatprep.subr.bf16.mxu0 0
  %559 = vmatpush1.bf16.msra.mxu0 %v288
  %560 = vmatprep.subr.bf16.mxu0 0
  %561 = vmatpush1.bf16.msra.mxu0 %v289
  %562 = vmatprep.subr.bf16.mxu0 0
  %563 = vmatpush1.bf16.msra.mxu0 %v331
  %564 = vmatprep.mubr.bf16.mxu0 %v478
  %565 = vmatmul.mubr.bf16.gmra.mrb[0].mxu0 %v465
  %v566 = vpop.f32.mrb[0].mxu0
  %v567 = vadd.f32 %v518, %v566
  %v568 = vpop.f32.mrb[0].mxu0
  %v569 = vpop.f32.mrb[0].mxu0
  %v570 = vadd.f32 %v521, %v569
  %v571 = vpop.f32.mrb[0].mxu0
  %572 = vmatprep.mubr.bf16.mxu0 %v481
  %573 = vmatmul.mubr.bf16.gmra.mrb[0].mxu0 %v469
  %v574 = vpop.f32.mrb[0].mxu0
  %v575 = vadd.f32 %v526, %v574
  %v576 = vpop.f32.mrb[0].mxu0
  %v577 = vpop.f32.mrb[0].mxu0
  %v578 = vadd.f32 %v529, %v577
  %v579 = vpop.f32.mrb[0].mxu0
  %580 = vdwg.mxu0
  %v581 = vmax.f32 %v417, %v567
  %v582 = vmax.f32 %v420, %v570
  %v583 = vmax.f32 %v425, %v575
  %v584 = vmax.f32 %v428, %v578
  %v585 = vld [vmem:[%s2] sm:$0xff]
  %v586 = vld [vmem:[%s2 + $0x8] sm:$0xff]
  %v587 = vld [vmem:[%s2 + $0x10] sm:$0xff]
  %v588 = vld [vmem:[%s2 + $0x18] sm:$0xff]
  %v589 = vld [vmem:[%s2 + $0x20] sm:$0xff]
  %v590 = vld [vmem:[%s2 + $0x28] sm:$0xff]
  %v591 = vld [vmem:[%s2 + $0x30] sm:$0xff]
  %v592 = vld [vmem:[%s2 + $0x38] sm:$0xff]
  %v601 = vunpack.c.l.b16 %v585
  %v602 = vunpack.c.h.b16 %v585
  %v603 = vunpack.c.l.b16 %v586
  %v604 = vunpack.c.h.b16 %v586
  %v605 = vunpack.c.l.b16 %v587
  %v606 = vunpack.c.h.b16 %v587
  %v607 = vunpack.c.l.b16 %v588
  %v608 = vunpack.c.h.b16 %v588
  %v609 = vunpack.c.l.b16 %v589
  %v610 = vunpack.c.h.b16 %v589
  %v611 = vunpack.c.l.b16 %v590
  %v612 = vunpack.c.h.b16 %v590
  %v613 = vunpack.c.l.b16 %v591
  %v614 = vunpack.c.h.b16 %v591
  %v615 = vunpack.c.l.b16 %v592
  %v616 = vunpack.c.h.b16 %v592
  %v617 = vpack.c.b16 %v605, %v601
  %v618 = vpack.c.b16 %v606, %v602
  %v619 = vpack.c.b16 %v607, %v603
  %v620 = vpack.c.b16 %v608, %v604
  %v621 = vpack.c.b16 %v613, %v609
  %v622 = vpack.c.b16 %v614, %v610
  %v623 = vpack.c.b16 %v615, %v611
  %v624 = vpack.c.b16 %v616, %v612
  %v632 = vsel %vm322, %v620, 0
  %v635 = vsel %vm322, %v624, 0
  %637 = vmatprep.subr.bf16.mxu0 0
  %638 = vmatpush1.bf16.msra.mxu0 %v259
  %639 = vmatprep.subr.bf16.mxu0 0
  %640 = vmatpush1.bf16.msra.mxu0 %v260
  %641 = vmatprep.subr.bf16.mxu0 0
  %642 = vmatpush1.bf16.msra.mxu0 %v261
  %643 = vmatprep.subr.bf16.mxu0 0
  %644 = vmatpush1.bf16.msra.mxu0 %v262
  %645 = vmatprep.subr.bf16.mxu0 0
  %646 = vmatpush1.bf16.msra.mxu0 %v263
  %647 = vmatprep.subr.bf16.mxu0 0
  %648 = vmatpush1.bf16.msra.mxu0 %v264
  %649 = vmatprep.subr.bf16.mxu0 0
  %650 = vmatpush1.bf16.msra.mxu0 %v265
  %651 = vmatprep.subr.bf16.mxu0 0
  %652 = vmatpush1.bf16.msra.mxu0 %v266
  %653 = vmatprep.subr.bf16.mxu0 0
  %654 = vmatpush1.bf16.msra.mxu0 %v267
  %655 = vmatprep.subr.bf16.mxu0 0
  %656 = vmatpush1.bf16.msra.mxu0 %v268
  %657 = vmatprep.subr.bf16.mxu0 0
  %658 = vmatpush1.bf16.msra.mxu0 %v269
  %659 = vmatprep.subr.bf16.mxu0 0
  %660 = vmatpush1.bf16.msra.mxu0 %v270
  %661 = vmatprep.subr.bf16.mxu0 0
  %662 = vmatpush1.bf16.msra.mxu0 %v271
  %663 = vmatprep.subr.bf16.mxu0 0
  %664 = vmatpush1.bf16.msra.mxu0 %v272
  %665 = vmatprep.subr.bf16.mxu0 0
  %666 = vmatpush1.bf16.msra.mxu0 %v273
  %667 = vmatprep.subr.bf16.mxu0 0
  %668 = vmatpush1.bf16.msra.mxu0 %v274
  %669 = vmatprep.mubr.bf16.mxu0 %v618
  %670 = vmatmul.mubr.bf16.gmra.mrb[0].mxu0 %v617
  %v671 = vpop.f32.mrb[0].mxu0
  %v672 = vadd.f32 0.0, %v671
  %v673 = vpop.f32.mrb[0].mxu0
  %v674 = vpop.f32.mrb[0].mxu0
  %v675 = vadd.f32 0.0, %v674
  %v676 = vpop.f32.mrb[0].mxu0
  %677 = vmatprep.mubr.bf16.mxu0 %v622
  %678 = vmatmul.mubr.bf16.gmra.mrb[0].mxu0 %v621
  %v679 = vpop.f32.mrb[0].mxu0
  %v680 = vadd.f32 0.0, %v679
  %v681 = vpop.f32.mrb[0].mxu0
  %v682 = vpop.f32.mrb[0].mxu0
  %v683 = vadd.f32 0.0, %v682
  %v684 = vpop.f32.mrb[0].mxu0
  %685 = vdwg.mxu0
  %686 = vmatprep.subr.bf16.mxu0 0
  %687 = vmatpush1.bf16.msra.mxu0 %v275
  %688 = vmatprep.subr.bf16.mxu0 0
  %689 = vmatpush1.bf16.msra.mxu0 %v276
  %690 = vmatprep.subr.bf16.mxu0 0
  %691 = vmatpush1.bf16.msra.mxu0 %v277
  %692 = vmatprep.subr.bf16.mxu0 0
  %693 = vmatpush1.bf16.msra.mxu0 %v278
  %694 = vmatprep.subr.bf16.mxu0 0
  %695 = vmatpush1.bf16.msra.mxu0 %v279
  %696 = vmatprep.subr.bf16.mxu0 0
  %697 = vmatpush1.bf16.msra.mxu0 %v280
  %698 = vmatprep.subr.bf16.mxu0 0
  %699 = vmatpush1.bf16.msra.mxu0 %v281
  %700 = vmatprep.subr.bf16.mxu0 0
  %701 = vmatpush1.bf16.msra.mxu0 %v282
  %702 = vmatprep.subr.bf16.mxu0 0
  %703 = vmatpush1.bf16.msra.mxu0 %v283
  %704 = vmatprep.subr.bf16.mxu0 0
  %705 = vmatpush1.bf16.msra.mxu0 %v284
  %706 = vmatprep.subr.bf16.mxu0 0
  %707 = vmatpush1.bf16.msra.mxu0 %v285
  %708 = vmatprep.subr.bf16.mxu0 0
  %709 = vmatpush1.bf16.msra.mxu0 %v286
  %710 = vmatprep.subr.bf16.mxu0 0
  %711 = vmatpush1.bf16.msra.mxu0 %v287
  %712 = vmatprep.subr.bf16.mxu0 0
  %713 = vmatpush1.bf16.msra.mxu0 %v288
  %714 = vmatprep.subr.bf16.mxu0 0
  %715 = vmatpush1.bf16.msra.mxu0 %v289
  %716 = vmatprep.subr.bf16.mxu0 0
  %717 = vmatpush1.bf16.msra.mxu0 %v331
  %718 = vmatprep.mubr.bf16.mxu0 %v632
  %719 = vmatmul.mubr.bf16.gmra.mrb[0].mxu0 %v619
  %v720 = vpop.f32.mrb[0].mxu0
  %v721 = vadd.f32 %v672, %v720
  %v722 = vpop.f32.mrb[0].mxu0
  %v723 = vpop.f32.mrb[0].mxu0
  %v724 = vadd.f32 %v675, %v723
  %v725 = vpop.f32.mrb[0].mxu0
  %726 = vmatprep.mubr.bf16.mxu0 %v635
  %727 = vmatmul.mubr.bf16.gmra.mrb[0].mxu0 %v623
  %v728 = vpop.f32.mrb[0].mxu0
  %v729 = vadd.f32 %v680, %v728
  %v730 = vpop.f32.mrb[0].mxu0
  %v731 = vpop.f32.mrb[0].mxu0
  %v732 = vadd.f32 %v683, %v731
  %v733 = vpop.f32.mrb[0].mxu0
  %734 = vdwg.mxu0
  %v735 = vmax.f32 %v581, %v721
  %v736 = vmax.f32 %v582, %v724
  %v737 = vmax.f32 %v583, %v729
  %v738 = vmax.f32 %v584, %v732
  %v739 = vld [vmem:[%s3] sm:$0xff]
  %v740 = vld [vmem:[%s3 + $0x8] sm:$0xff]
  %v741 = vld [vmem:[%s3 + $0x10] sm:$0xff]
  %v742 = vld [vmem:[%s3 + $0x18] sm:$0xff]
  %v743 = vld [vmem:[%s3 + $0x20] sm:$0xff]
  %v744 = vld [vmem:[%s3 + $0x28] sm:$0xff]
  %v745 = vld [vmem:[%s3 + $0x30] sm:$0xff]
  %v746 = vld [vmem:[%s3 + $0x38] sm:$0xff]
  %v755 = vunpack.c.l.b16 %v739
  %v756 = vunpack.c.h.b16 %v739
  %v757 = vunpack.c.l.b16 %v740
  %v758 = vunpack.c.h.b16 %v740
  %v759 = vunpack.c.l.b16 %v741
  %v760 = vunpack.c.h.b16 %v741
  %v761 = vunpack.c.l.b16 %v742
  %v762 = vunpack.c.h.b16 %v742
  %v763 = vunpack.c.l.b16 %v743
  %v764 = vunpack.c.h.b16 %v743
  %v765 = vunpack.c.l.b16 %v744
  %v766 = vunpack.c.h.b16 %v744
  %v767 = vunpack.c.l.b16 %v745
  %v768 = vunpack.c.h.b16 %v745
  %v769 = vunpack.c.l.b16 %v746
  %v770 = vunpack.c.h.b16 %v746
  %v771 = vpack.c.b16 %v759, %v755
  %v772 = vpack.c.b16 %v760, %v756
  %v773 = vpack.c.b16 %v761, %v757
  %v774 = vpack.c.b16 %v762, %v758
  %v775 = vpack.c.b16 %v767, %v763
  %v776 = vpack.c.b16 %v768, %v764
  %v777 = vpack.c.b16 %v769, %v765
  %v778 = vpack.c.b16 %v770, %v766
  %v786 = vsel %vm322, %v774, 0
  %v789 = vsel %vm322, %v778, 0
  %791 = vmatprep.subr.bf16.mxu0 0
  %792 = vmatpush1.bf16.msra.mxu0 %v259
  %793 = vmatprep.subr.bf16.mxu0 0
  %794 = vmatpush1.bf16.msra.mxu0 %v260
  %795 = vmatprep.subr.bf16.mxu0 0
  %796 = vmatpush1.bf16.msra.mxu0 %v261
  %797 = vmatprep.subr.bf16.mxu0 0
  %798 = vmatpush1.bf16.msra.mxu0 %v262
  %799 = vmatprep.subr.bf16.mxu0 0
  %800 = vmatpush1.bf16.msra.mxu0 %v263
  %801 = vmatprep.subr.bf16.mxu0 0
  %802 = vmatpush1.bf16.msra.mxu0 %v264
  %803 = vmatprep.subr.bf16.mxu0 0
  %804 = vmatpush1.bf16.msra.mxu0 %v265
  %805 = vmatprep.subr.bf16.mxu0 0
  %806 = vmatpush1.bf16.msra.mxu0 %v266
  %807 = vmatprep.subr.bf16.mxu0 0
  %808 = vmatpush1.bf16.msra.mxu0 %v267
  %809 = vmatprep.subr.bf16.mxu0 0
  %810 = vmatpush1.bf16.msra.mxu0 %v268
  %811 = vmatprep.subr.bf16.mxu0 0
  %812 = vmatpush1.bf16.msra.mxu0 %v269
  %813 = vmatprep.subr.bf16.mxu0 0
  %814 = vmatpush1.bf16.msra.mxu0 %v270
  %815 = vmatprep.subr.bf16.mxu0 0
  %816 = vmatpush1.bf16.msra.mxu0 %v271
  %817 = vmatprep.subr.bf16.mxu0 0
  %818 = vmatpush1.bf16.msra.mxu0 %v272
  %819 = vmatprep.subr.bf16.mxu0 0
  %820 = vmatpush1.bf16.msra.mxu0 %v273
  %821 = vmatprep.subr.bf16.mxu0 0
  %822 = vmatpush1.bf16.msra.mxu0 %v274
  %823 = vmatprep.mubr.bf16.mxu0 %v772
  %824 = vmatmul.mubr.bf16.gmra.mrb[0].mxu0 %v771
  %v825 = vpop.f32.mrb[0].mxu0
  %v826 = vadd.f32 0.0, %v825
  %v827 = vpop.f32.mrb[0].mxu0
  %v828 = vpop.f32.mrb[0].mxu0
  %v829 = vadd.f32 0.0, %v828
  %v830 = vpop.f32.mrb[0].mxu0
  %831 = vmatprep.mubr.bf16.mxu0 %v776
  %832 = vmatmul.mubr.bf16.gmra.mrb[0].mxu0 %v775
  %v833 = vpop.f32.mrb[0].mxu0
  %v834 = vadd.f32 0.0, %v833
  %v835 = vpop.f32.mrb[0].mxu0
  %v836 = vpop.f32.mrb[0].mxu0
  %v837 = vadd.f32 0.0, %v836
  %v838 = vpop.f32.mrb[0].mxu0
  %839 = vdwg.mxu0
  %840 = vmatprep.subr.bf16.mxu0 0
  %841 = vmatpush1.bf16.msra.mxu0 %v275
  %842 = vmatprep.subr.bf16.mxu0 0
  %843 = vmatpush1.bf16.msra.mxu0 %v276
  %844 = vmatprep.subr.bf16.mxu0 0
  %845 = vmatpush1.bf16.msra.mxu0 %v277
  %846 = vmatprep.subr.bf16.mxu0 0
  %847 = vmatpush1.bf16.msra.mxu0 %v278
  %848 = vmatprep.subr.bf16.mxu0 0
  %849 = vmatpush1.bf16.msra.mxu0 %v279
  %850 = vmatprep.subr.bf16.mxu0 0
  %851 = vmatpush1.bf16.msra.mxu0 %v280
  %852 = vmatprep.subr.bf16.mxu0 0
  %853 = vmatpush1.bf16.msra.mxu0 %v281
  %854 = vmatprep.subr.bf16.mxu0 0
  %855 = vmatpush1.bf16.msra.mxu0 %v282
  %856 = vmatprep.subr.bf16.mxu0 0
  %857 = vmatpush1.bf16.msra.mxu0 %v283
  %858 = vmatprep.subr.bf16.mxu0 0
  %859 = vmatpush1.bf16.msra.mxu0 %v284
  %860 = vmatprep.subr.bf16.mxu0 0
  %861 = vmatpush1.bf16.msra.mxu0 %v285
  %862 = vmatprep.subr.bf16.mxu0 0
  %863 = vmatpush1.bf16.msra.mxu0 %v286
  %864 = vmatprep.subr.bf16.mxu0 0
  %865 = vmatpush1.bf16.msra.mxu0 %v287
  %866 = vmatprep.subr.bf16.mxu0 0
  %867 = vmatpush1.bf16.msra.mxu0 %v288
  %868 = vmatprep.subr.bf16.mxu0 0
  %869 = vmatpush1.bf16.msra.mxu0 %v289
  %870 = vmatprep.subr.bf16.mxu0 0
  %871 = vmatpush1.bf16.msra.mxu0 %v331
  %872 = vmatprep.mubr.bf16.mxu0 %v786
  %873 = vmatmul.mubr.bf16.gmra.mrb[0].mxu0 %v773
  %v874 = vpop.f32.mrb[0].mxu0
  %v875 = vadd.f32 %v826, %v874
  %v876 = vpop.f32.mrb[0].mxu0
  %v877 = vpop.f32.mrb[0].mxu0
  %v878 = vadd.f32 %v829, %v877
  %v879 = vpop.f32.mrb[0].mxu0
  %880 = vmatprep.mubr.bf16.mxu0 %v789
  %881 = vmatmul.mubr.bf16.gmra.mrb[0].mxu0 %v777
  %v882 = vpop.f32.mrb[0].mxu0
  %v883 = vadd.f32 %v834, %v882
  %v884 = vpop.f32.mrb[0].mxu0
  %v885 = vpop.f32.mrb[0].mxu0
  %v886 = vadd.f32 %v837, %v885
  %v887 = vpop.f32.mrb[0].mxu0
  %888 = vdwg.mxu0
  %v889 = vmax.f32 %v735, %v875
  %v890 = vmax.f32 %v736, %v878
  %v891 = vmax.f32 %v737, %v883
  %v892 = vmax.f32 %v738, %v886
  %v893 = vld [vmem:[%s5] sm:$0x1]
  %v895 = vlaneseq
  %v896 = vshrl.u32 %v895, 7
  %v897 = vsub.s32 0, %v896
  %v898 = vrot.slane %v893, %v897
  %v900 = vadd.f32 %v889, %v898
  %v901 = vadd.f32 %v890, %v898
  %v902 = vadd.f32 %v891, %v898
  %v903 = vadd.f32 %v892, %v898
  %v904 = vmax.f32 %v900, 0.0
  %v905 = vmax.f32 %v901, 0.0
  %v906 = vmax.f32 %v902, 0.0
  %v907 = vmax.f32 %v903, 0.0
  %908 = vst [vmem:[%s6] sm:$0xff] %v904
  %909 = vst [vmem:[%s6 + $0x8] sm:$0xff] %v905
  %910 = vst [vmem:[%s6 + $0x10] sm:$0xff] %v906
  %911 = vst [vmem:[%s6 + $0x18] sm:$0xff] %v907
  // Predicated region
  $region26: #{lenet_forward.4} parent=0 // pred_check
    _
  $region27: #{lenet_forward.4} parent=0 // pred_check_branch
    %913 = sbr.rel (0) target = $region29
  $region28: #{lenet_forward.4} parent=0 // pred_region
    _
  $region29: #{lenet_forward.4} parent=0 // pred_fallthru
    _
  // Predicated region
  $region30: #{lenet_forward.4} parent=0 // pred_check
    _
  $region31: #{lenet_forward.4} parent=0 // pred_check_branch
    %915 = sbr.rel (0) target = $region33
  $region32: #{lenet_forward.4} parent=0 // pred_region
    _
  $region33: #{lenet_forward.4} parent=0 // pred_fallthru
    _

// kernel: lenet_forward.5
$region0: #{lenet_forward.5}
  #allocation0 [shape = 'u32[]', space=smem, size = 0x4, offset = 0x4, fixed_abs, tag = 'smem constant byte address 0x4 - core index']
  #allocation1 [shape = 'u32[144,128]{1,0:T(1,128)}', space=vmem, size = 0x12000, scoped, tag = 'internal scratch']
  %s0 = inlined_call_operand.vmem [shape: bf16[2,2048], index: 0, kind: input, shape index: {}]
  %s1 = inlined_call_operand.vmem [shape: bf16[2048,512], index: 1, kind: input, shape index: {}]
  %s2 = inlined_call_operand.vmem [shape: f32[1,512], index: 2, kind: input, shape index: {}]
  %s3 = inlined_call_operand.vmem [shape: bf16[512,128], index: 3, kind: input, shape index: {}]
  %s4 = inlined_call_operand.vmem [shape: f32[1,128], index: 4, kind: input, shape index: {}]
  %s5 = inlined_call_operand.hbm [shape: f32[2,128], index: 5, kind: output, shape index: {}]
  %s6 = sld [smem:[#allocation0]]
  $region30: #{lenet_forward.5} parent=0
    _
  %s8 = ssub.s32 1, %s6
  %s9 = scalar_select 0, %s8, %s6
  $region1: #{lenet_forward.5} parent=0
    #allocation2 [shape = 'u8[1024]{0}', space=vmem, size = 0x400, scoped, tag = 'output window, operand 0, single buffered']
    #allocation3 [shape = 's32[1]{0}', space=sflag, size = 0x4, scoped, tag = 'scoped memory for lenet_forward.5']
    %10 = vsyncpa [#allocation3], 0
    // Predicated region
    $region2: #{lenet_forward.5} parent=1 // pred_check
      _
    $region3: #{lenet_forward.5} parent=1 // pred_check_branch
      %12 = sbr.rel (0) target = $region5
    $region4: #{lenet_forward.5} parent=1 // pred_region
      _
    $region5: #{lenet_forward.5} parent=1 // pred_fallthru
      _
    // Predicated region
    $region6: #{lenet_forward.5} parent=1 // pred_check
      _
    $region7: #{lenet_forward.5} parent=1 // pred_check_branch
      %14 = sbr.rel (0) target = $region9
    $region8: #{lenet_forward.5} parent=1 // pred_region
      _
    $region9: #{lenet_forward.5} parent=1 // pred_fallthru
      _
    // Predicated region
    $region10: #{lenet_forward.5} parent=1 // pred_check
      _
    $region11: #{lenet_forward.5} parent=1 // pred_check_branch
      %16 = sbr.rel (0) target = $region13
    $region12: #{lenet_forward.5} parent=1 // pred_region
      _
    $region13: #{lenet_forward.5} parent=1 // pred_fallthru
      _
    // Predicated region
    $region14: #{lenet_forward.5} parent=1 // pred_check
      _
    $region15: #{lenet_forward.5} parent=1 // pred_check_branch
      %18 = sbr.rel (0) target = $region17
    $region16: #{lenet_forward.5} parent=1 // pred_region
      _
    $region17: #{lenet_forward.5} parent=1 // pred_fallthru
      _
    // Predicated region
    $region18: #{lenet_forward.5} parent=1 // pred_check
      _
    $region19: #{lenet_forward.5} parent=1 // pred_check_branch
      %20 = sbr.rel (0) target = $region21
    $region20: #{lenet_forward.5} parent=1 // pred_region
      _
    $region21: #{lenet_forward.5} parent=1 // pred_fallthru
      _
    %v22 = vld [vmem:[%s0] sm:$0xff]
    %v23 = vld [vmem:[%s0 + $0x8] sm:$0xff]
    %v24 = vld [vmem:[%s1] sm:$0xff]
    %v25 = vld [vmem:[%s1 + $0x8] sm:$0xff]
    %v26 = vld [vmem:[%s1 + $0x10] sm:$0xff]
    %v27 = vld [vmem:[%s1 + $0x18] sm:$0xff]
    %v28 = vld [vmem:[%s1 + $0x20] sm:$0xff]
    %v29 = vld [vmem:[%s1 + $0x28] sm:$0xff]
    %v30 = vld [vmem:[%s1 + $0x30] sm:$0xff]
    %v31 = vld [vmem:[%s1 + $0x38] sm:$0xff]
    %v32 = vld [vmem:[%s1 + $0x40] sm:$0xff]
    %v33 = vld [vmem:[%s1 + $0x48] sm:$0xff]
    %v34 = vld [vmem:[%s1 + $0x50] sm:$0xff]
    %v35 = vld [vmem:[%s1 + $0x58] sm:$0xff]
    %v36 = vld [vmem:[%s1 + $0x60] sm:$0xff]
    %v37 = vld [vmem:[%s1 + $0x68] sm:$0xff]
    %v38 = vld [vmem:[%s1 + $0x70] sm:$0xff]
    %v39 = vld [vmem:[%s1 + $0x78] sm:$0xff]
    %v40 = vld [vmem:[%s1 + $0x80] sm:$0xff]
    %v41 = vld [vmem:[%s1 + $0x88] sm:$0xff]
    %v42 = vld [vmem:[%s1 + $0x90] sm:$0xff]
    %v43 = vld [vmem:[%s1 + $0x98] sm:$0xff]
    %v44 = vld [vmem:[%s1 + $0xa0] sm:$0xff]
    %v45 = vld [vmem:[%s1 + $0xa8] sm:$0xff]
    %v46 = vld [vmem:[%s1 + $0xb0] sm:$0xff]
    %v47 = vld [vmem:[%s1 + $0xb8] sm:$0xff]
    %v48 = vld [vmem:[%s1 + $0xc0] sm:$0xff]
    %v49 = vld [vmem:[%s1 + $0xc8] sm:$0xff]
    %v50 = vld [vmem:[%s1 + $0xd0] sm:$0xff]
    %v51 = vld [vmem:[%s1 + $0xd8] sm:$0xff]
    %v52 = vld [vmem:[%s1 + $0xe0] sm:$0xff]
    %v53 = vld [vmem:[%s1 + $0xe8] sm:$0xff]
    %v54 = vld [vmem:[%s1 + $0xf0] sm:$0xff]
    %v55 = vld [vmem:[%s1 + $0xf8] sm:$0xff]
    %v56 = vld [vmem:[%s1 + $0x100] sm:$0xff]
    %v57 = vld [vmem:[%s1 + $0x108] sm:$0xff]
    %v58 = vld [vmem:[%s1 + $0x110] sm:$0xff]
    %v59 = vld [vmem:[%s1 + $0x118] sm:$0xff]
    %v60 = vld [vmem:[%s1 + $0x120] sm:$0xff]
    %v61 = vld [vmem:[%s1 + $0x128] sm:$0xff]
    %v62 = vld [vmem:[%s1 + $0x130] sm:$0xff]
    %v63 = vld [vmem:[%s1 + $0x138] sm:$0xff]
    %v64 = vld [vmem:[%s1 + $0x140] sm:$0xff]
    %v65 = vld [vmem:[%s1 + $0x148] sm:$0xff]
    %v66 = vld [vmem:[%s1 + $0x150] sm:$0xff]
    %v67 = vld [vmem:[%s1 + $0x158] sm:$0xff]
    %v68 = vld [vmem:[%s1 + $0x160] sm:$0xff]
    %v69 = vld [vmem:[%s1 + $0x168] sm:$0xff]
    %v70 = vld [vmem:[%s1 + $0x170] sm:$0xff]
    %v71 = vld [vmem:[%s1 + $0x178] sm:$0xff]
    %v72 = vld [vmem:[%s1 + $0x180] sm:$0xff]
    %v73 = vld [vmem:[%s1 + $0x188] sm:$0xff]
    %v74 = vld [vmem:[%s1 + $0x190] sm:$0xff]
    %v75 = vld [vmem:[%s1 + $0x198] sm:$0xff]
    %v76 = vld [vmem:[%s1 + $0x1a0] sm:$0xff]
    %v77 = vld [vmem:[%s1 + $0x1a8] sm:$0xff]
    %v78 = vld [vmem:[%s1 + $0x1b0] sm:$0xff]
    %v79 = vld [vmem:[%s1 + $0x1b8] sm:$0xff]
    %v80 = vld [vmem:[%s1 + $0x1c0] sm:$0xff]
    %v81 = vld [vmem:[%s1 + $0x1c8] sm:$0xff]
    %v82 = vld [vmem:[%s1 + $0x1d0] sm:$0xff]
    %v83 = vld [vmem:[%s1 + $0x1d8] sm:$0xff]
    %v84 = vld [vmem:[%s1 + $0x1e0] sm:$0xff]
    %v85 = vld [vmem:[%s1 + $0x1e8] sm:$0xff]
    %v86 = vld [vmem:[%s1 + $0x1f0] sm:$0xff]
    %v87 = vld [vmem:[%s1 + $0x1f8] sm:$0xff]
    %v88 = vld [vmem:[%s1 + $0x200] sm:$0xff]
    %v89 = vld [vmem:[%s1 + $0x208] sm:$0xff]
    %v90 = vld [vmem:[%s1 + $0x210] sm:$0xff]
    %v91 = vld [vmem:[%s1 + $0x218] sm:$0xff]
    %v92 = vld [vmem:[%s1 + $0x220] sm:$0xff]
    %v93 = vld [vmem:[%s1 + $0x228] sm:$0xff]
    %v94 = vld [vmem:[%s1 + $0x230] sm:$0xff]
    %v95 = vld [vmem:[%s1 + $0x238] sm:$0xff]
    %v96 = vld [vmem:[%s1 + $0x240] sm:$0xff]
    %v97 = vld [vmem:[%s1 + $0x248] sm:$0xff]
    %v98 = vld [vmem:[%s1 + $0x250] sm:$0xff]
    %v99 = vld [vmem:[%s1 + $0x258] sm:$0xff]
    %v100 = vld [vmem:[%s1 + $0x260] sm:$0xff]
    %v101 = vld [vmem:[%s1 + $0x268] sm:$0xff]
    %v102 = vld [vmem:[%s1 + $0x270] sm:$0xff]
    %v103 = vld [vmem:[%s1 + $0x278] sm:$0xff]
    %v104 = vld [vmem:[%s1 + $0x280] sm:$0xff]
    %v105 = vld [vmem:[%s1 + $0x288] sm:$0xff]
    %v106 = vld [vmem:[%s1 + $0x290] sm:$0xff]
    %v107 = vld [vmem:[%s1 + $0x298] sm:$0xff]
    %v108 = vld [vmem:[%s1 + $0x2a0] sm:$0xff]
    %v109 = vld [vmem:[%s1 + $0x2a8] sm:$0xff]
    %v110 = vld [vmem:[%s1 + $0x2b0] sm:$0xff]
    %v111 = vld [vmem:[%s1 + $0x2b8] sm:$0xff]
    %v112 = vld [vmem:[%s1 + $0x2c0] sm:$0xff]
    %v113 = vld [vmem:[%s1 + $0x2c8] sm:$0xff]
    %v114 = vld [vmem:[%s1 + $0x2d0] sm:$0xff]
    %v115 = vld [vmem:[%s1 + $0x2d8] sm:$0xff]
    %v116 = vld [vmem:[%s1 + $0x2e0] sm:$0xff]
    %v117 = vld [vmem:[%s1 + $0x2e8] sm:$0xff]
    %v118 = vld [vmem:[%s1 + $0x2f0] sm:$0xff]
    %v119 = vld [vmem:[%s1 + $0x2f8] sm:$0xff]
    %v120 = vld [vmem:[%s1 + $0x300] sm:$0xff]
    %v121 = vld [vmem:[%s1 + $0x308] sm:$0xff]
    %v122 = vld [vmem:[%s1 + $0x310] sm:$0xff]
    %v123 = vld [vmem:[%s1 + $0x318] sm:$0xff]
    %v124 = vld [vmem:[%s1 + $0x320] sm:$0xff]
    %v125 = vld [vmem:[%s1 + $0x328] sm:$0xff]
    %v126 = vld [vmem:[%s1 + $0x330] sm:$0xff]
    %v127 = vld [vmem:[%s1 + $0x338] sm:$0xff]
    %v128 = vld [vmem:[%s1 + $0x340] sm:$0xff]
    %v129 = vld [vmem:[%s1 + $0x348] sm:$0xff]
    %v130 = vld [vmem:[%s1 + $0x350] sm:$0xff]
    %v131 = vld [vmem:[%s1 + $0x358] sm:$0xff]
    %v132 = vld [vmem:[%s1 + $0x360] sm:$0xff]
    %v133 = vld [vmem:[%s1 + $0x368] sm:$0xff]
    %v134 = vld [vmem:[%s1 + $0x370] sm:$0xff]
    %v135 = vld [vmem:[%s1 + $0x378] sm:$0xff]
    %v136 = vld [vmem:[%s1 + $0x380] sm:$0xff]
    %v137 = vld [vmem:[%s1 + $0x388] sm:$0xff]
    %v138 = vld [vmem:[%s1 + $0x390] sm:$0xff]
    %v139 = vld [vmem:[%s1 + $0x398] sm:$0xff]
    %v140 = vld [vmem:[%s1 + $0x3a0] sm:$0xff]
    %v141 = vld [vmem:[%s1 + $0x3a8] sm:$0xff]
    %v142 = vld [vmem:[%s1 + $0x3b0] sm:$0xff]
    %v143 = vld [vmem:[%s1 + $0x3b8] sm:$0xff]
    %v144 = vld [vmem:[%s1 + $0x3c0] sm:$0xff]
    %v145 = vld [vmem:[%s1 + $0x3c8] sm:$0xff]
    %v146 = vld [vmem:[%s1 + $0x3d0] sm:$0xff]
    %v147 = vld [vmem:[%s1 + $0x3d8] sm:$0xff]
    %v148 = vld [vmem:[%s1 + $0x3e0] sm:$0xff]
    %v149 = vld [vmem:[%s1 + $0x3e8] sm:$0xff]
    %v150 = vld [vmem:[%s1 + $0x3f0] sm:$0xff]
    %v151 = vld [vmem:[%s1 + $0x3f8] sm:$0xff]
    %v152 = vld [vmem:[%s1 + $0x400] sm:$0xff]
    %v153 = vld [vmem:[%s1 + $0x408] sm:$0xff]
    %v154 = vld [vmem:[%s1 + $0x410] sm:$0xff]
    %v155 = vld [vmem:[%s1 + $0x418] sm:$0xff]
    %v156 = vld [vmem:[%s1 + $0x420] sm:$0xff]
    %v157 = vld [vmem:[%s1 + $0x428] sm:$0xff]
    %v158 = vld [vmem:[%s1 + $0x430] sm:$0xff]
    %v159 = vld [vmem:[%s1 + $0x438] sm:$0xff]
    %v160 = vld [vmem:[%s1 + $0x440] sm:$0xff]
    %v161 = vld [vmem:[%s1 + $0x448] sm:$0xff]
    %v162 = vld [vmem:[%s1 + $0x450] sm:$0xff]
    %v163 = vld [vmem:[%s1 + $0x458] sm:$0xff]
    %v164 = vld [vmem:[%s1 + $0x460] sm:$0xff]
    %v165 = vld [vmem:[%s1 + $0x468] sm:$0xff]
    %v166 = vld [vmem:[%s1 + $0x470] sm:$0xff]
    %v167 = vld [vmem:[%s1 + $0x478] sm:$0xff]
    %v168 = vld [vmem:[%s1 + $0x480] sm:$0xff]
    %v169 = vld [vmem:[%s1 + $0x488] sm:$0xff]
    %v170 = vld [vmem:[%s1 + $0x490] sm:$0xff]
    %v171 = vld [vmem:[%s1 + $0x498] sm:$0xff]
    %v172 = vld [vmem:[%s1 + $0x4a0] sm:$0xff]
    %v173 = vld [vmem:[%s1 + $0x4a8] sm:$0xff]
    %v174 = vld [vmem:[%s1 + $0x4b0] sm:$0xff]
    %v175 = vld [vmem:[%s1 + $0x4b8] sm:$0xff]
    %v176 = vld [vmem:[%s1 + $0x4c0] sm:$0xff]
    %v177 = vld [vmem:[%s1 + $0x4c8] sm:$0xff]
    %v178 = vld [vmem:[%s1 + $0x4d0] sm:$0xff]
    %v179 = vld [vmem:[%s1 + $0x4d8] sm:$0xff]
    %v180 = vld [vmem:[%s1 + $0x4e0] sm:$0xff]
    %v181 = vld [vmem:[%s1 + $0x4e8] sm:$0xff]
    %v182 = vld [vmem:[%s1 + $0x4f0] sm:$0xff]
    %v183 = vld [vmem:[%s1 + $0x4f8] sm:$0xff]
    %v184 = vld [vmem:[%s1 + $0x500] sm:$0xff]
    %v185 = vld [vmem:[%s1 + $0x508] sm:$0xff]
    %v186 = vld [vmem:[%s1 + $0x510] sm:$0xff]
    %v187 = vld [vmem:[%s1 + $0x518] sm:$0xff]
    %v188 = vld [vmem:[%s1 + $0x520] sm:$0xff]
    %v189 = vld [vmem:[%s1 + $0x528] sm:$0xff]
    %v190 = vld [vmem:[%s1 + $0x530] sm:$0xff]
    %v191 = vld [vmem:[%s1 + $0x538] sm:$0xff]
    %v192 = vld [vmem:[%s1 + $0x540] sm:$0xff]
    %v193 = vld [vmem:[%s1 + $0x548] sm:$0xff]
    %v194 = vld [vmem:[%s1 + $0x550] sm:$0xff]
    %v195 = vld [vmem:[%s1 + $0x558] sm:$0xff]
    %v196 = vld [vmem:[%s1 + $0x560] sm:$0xff]
    %v197 = vld [vmem:[%s1 + $0x568] sm:$0xff]
    %v198 = vld [vmem:[%s1 + $0x570] sm:$0xff]
    %v199 = vld [vmem:[%s1 + $0x578] sm:$0xff]
    %v200 = vld [vmem:[%s1 + $0x580] sm:$0xff]
    %v201 = vld [vmem:[%s1 + $0x588] sm:$0xff]
    %v202 = vld [vmem:[%s1 + $0x590] sm:$0xff]
    %v203 = vld [vmem:[%s1 + $0x598] sm:$0xff]
    %v204 = vld [vmem:[%s1 + $0x5a0] sm:$0xff]
    %v205 = vld [vmem:[%s1 + $0x5a8] sm:$0xff]
    %v206 = vld [vmem:[%s1 + $0x5b0] sm:$0xff]
    %v207 = vld [vmem:[%s1 + $0x5b8] sm:$0xff]
    %v208 = vld [vmem:[%s1 + $0x5c0] sm:$0xff]
    %v209 = vld [vmem:[%s1 + $0x5c8] sm:$0xff]
    %v210 = vld [vmem:[%s1 + $0x5d0] sm:$0xff]
    %v211 = vld [vmem:[%s1 + $0x5d8] sm:$0xff]
    %v212 = vld [vmem:[%s1 + $0x5e0] sm:$0xff]
    %v213 = vld [vmem:[%s1 + $0x5e8] sm:$0xff]
    %v214 = vld [vmem:[%s1 + $0x5f0] sm:$0xff]
    %v215 = vld [vmem:[%s1 + $0x5f8] sm:$0xff]
    %v216 = vld [vmem:[%s1 + $0x600] sm:$0xff]
    %v217 = vld [vmem:[%s1 + $0x608] sm:$0xff]
    %v218 = vld [vmem:[%s1 + $0x610] sm:$0xff]
    %v219 = vld [vmem:[%s1 + $0x618] sm:$0xff]
    %v220 = vld [vmem:[%s1 + $0x620] sm:$0xff]
    %v221 = vld [vmem:[%s1 + $0x628] sm:$0xff]
    %v222 = vld [vmem:[%s1 + $0x630] sm:$0xff]
    %v223 = vld [vmem:[%s1 + $0x638] sm:$0xff]
    %v224 = vld [vmem:[%s1 + $0x640] sm:$0xff]
    %v225 = vld [vmem:[%s1 + $0x648] sm:$0xff]
    %v226 = vld [vmem:[%s1 + $0x650] sm:$0xff]
    %v227 = vld [vmem:[%s1 + $0x658] sm:$0xff]
    %v228 = vld [vmem:[%s1 + $0x660] sm:$0xff]
    %v229 = vld [vmem:[%s1 + $0x668] sm:$0xff]
    %v230 = vld [vmem:[%s1 + $0x670] sm:$0xff]
    %v231 = vld [vmem:[%s1 + $0x678] sm:$0xff]
    %v232 = vld [vmem:[%s1 + $0x680] sm:$0xff]
    %v233 = vld [vmem:[%s1 + $0x688] sm:$0xff]
    %v234 = vld [vmem:[%s1 + $0x690] sm:$0xff]
    %v235 = vld [vmem:[%s1 + $0x698] sm:$0xff]
    %v236 = vld [vmem:[%s1 + $0x6a0] sm:$0xff]
    %v237 = vld [vmem:[%s1 + $0x6a8] sm:$0xff]
    %v238 = vld [vmem:[%s1 + $0x6b0] sm:$0xff]
    %v239 = vld [vmem:[%s1 + $0x6b8] sm:$0xff]
    %v240 = vld [vmem:[%s1 + $0x6c0] sm:$0xff]
    %v241 = vld [vmem:[%s1 + $0x6c8] sm:$0xff]
    %v242 = vld [vmem:[%s1 + $0x6d0] sm:$0xff]
    %v243 = vld [vmem:[%s1 + $0x6d8] sm:$0xff]
    %v244 = vld [vmem:[%s1 + $0x6e0] sm:$0xff]
    %v245 = vld [vmem:[%s1 + $0x6e8] sm:$0xff]
    %v246 = vld [vmem:[%s1 + $0x6f0] sm:$0xff]
    %v247 = vld [vmem:[%s1 + $0x6f8] sm:$0xff]
    %v248 = vld [vmem:[%s1 + $0x700] sm:$0xff]
    %v249 = vld [vmem:[%s1 + $0x708] sm:$0xff]
    %v250 = vld [vmem:[%s1 + $0x710] sm:$0xff]
    %v251 = vld [vmem:[%s1 + $0x718] sm:$0xff]
    %v252 = vld [vmem:[%s1 + $0x720] sm:$0xff]
    %v253 = vld [vmem:[%s1 + $0x728] sm:$0xff]
    %v254 = vld [vmem:[%s1 + $0x730] sm:$0xff]
    %v255 = vld [vmem:[%s1 + $0x738] sm:$0xff]
    %v256 = vld [vmem:[%s1 + $0x740] sm:$0xff]
    %v257 = vld [vmem:[%s1 + $0x748] sm:$0xff]
    %v258 = vld [vmem:[%s1 + $0x750] sm:$0xff]
    %v259 = vld [vmem:[%s1 + $0x758] sm:$0xff]
    %v260 = vld [vmem:[%s1 + $0x760] sm:$0xff]
    %v261 = vld [vmem:[%s1 + $0x768] sm:$0xff]
    %v262 = vld [vmem:[%s1 + $0x770] sm:$0xff]
    %v263 = vld [vmem:[%s1 + $0x778] sm:$0xff]
    %v264 = vld [vmem:[%s1 + $0x780] sm:$0xff]
    %v265 = vld [vmem:[%s1 + $0x788] sm:$0xff]
    %v266 = vld [vmem:[%s1 + $0x790] sm:$0xff]
    %v267 = vld [vmem:[%s1 + $0x798] sm:$0xff]
    %v268 = vld [vmem:[%s1 + $0x7a0] sm:$0xff]
    %v269 = vld [vmem:[%s1 + $0x7a8] sm:$0xff]
    %v270 = vld [vmem:[%s1 + $0x7b0] sm:$0xff]
    %v271 = vld [vmem:[%s1 + $0x7b8] sm:$0xff]
    %v272 = vld [vmem:[%s1 + $0x7c0] sm:$0xff]
    %v273 = vld [vmem:[%s1 + $0x7c8] sm:$0xff]
    %v274 = vld [vmem:[%s1 + $0x7d0] sm:$0xff]
    %v275 = vld [vmem:[%s1 + $0x7d8] sm:$0xff]
    %v276 = vld [vmem:[%s1 + $0x7e0] sm:$0xff]
    %v277 = vld [vmem:[%s1 + $0x7e8] sm:$0xff]
    %v278 = vld [vmem:[%s1 + $0x7f0] sm:$0xff]
    %v279 = vld [vmem:[%s1 + $0x7f8] sm:$0xff]
    %v280 = vld [vmem:[%s1 + $0x800] sm:$0xff]
    %v281 = vld [vmem:[%s1 + $0x808] sm:$0xff]
    %v282 = vld [vmem:[%s1 + $0x810] sm:$0xff]
    %v283 = vld [vmem:[%s1 + $0x818] sm:$0xff]
    %v284 = vld [vmem:[%s1 + $0x820] sm:$0xff]
    %v285 = vld [vmem:[%s1 + $0x828] sm:$0xff]
    %v286 = vld [vmem:[%s1 + $0x830] sm:$0xff]
    %v287 = vld [vmem:[%s1 + $0x838] sm:$0xff]
    %v288 = vld [vmem:[%s1 + $0x840] sm:$0xff]
    %v289 = vld [vmem:[%s1 + $0x848] sm:$0xff]
    %v290 = vld [vmem:[%s1 + $0x850] sm:$0xff]
    %v291 = vld [vmem:[%s1 + $0x858] sm:$0xff]
    %v292 = vld [vmem:[%s1 + $0x860] sm:$0xff]
    %v293 = vld [vmem:[%s1 + $0x868] sm:$0xff]
    %v294 = vld [vmem:[%s1 + $0x870] sm:$0xff]
    %v295 = vld [vmem:[%s1 + $0x878] sm:$0xff]
    %v296 = vld [vmem:[%s1 + $0x880] sm:$0xff]
    %v297 = vld [vmem:[%s1 + $0x888] sm:$0xff]
    %v298 = vld [vmem:[%s1 + $0x890] sm:$0xff]
    %v299 = vld [vmem:[%s1 + $0x898] sm:$0xff]
    %v300 = vld [vmem:[%s1 + $0x8a0] sm:$0xff]
    %v301 = vld [vmem:[%s1 + $0x8a8] sm:$0xff]
    %v302 = vld [vmem:[%s1 + $0x8b0] sm:$0xff]
    %v303 = vld [vmem:[%s1 + $0x8b8] sm:$0xff]
    %v304 = vld [vmem:[%s1 + $0x8c0] sm:$0xff]
    %v305 = vld [vmem:[%s1 + $0x8c8] sm:$0xff]
    %v306 = vld [vmem:[%s1 + $0x8d0] sm:$0xff]
    %v307 = vld [vmem:[%s1 + $0x8d8] sm:$0xff]
    %v308 = vld [vmem:[%s1 + $0x8e0] sm:$0xff]
    %v309 = vld [vmem:[%s1 + $0x8e8] sm:$0xff]
    %v310 = vld [vmem:[%s1 + $0x8f0] sm:$0xff]
    %v311 = vld [vmem:[%s1 + $0x8f8] sm:$0xff]
    %v312 = vld [vmem:[%s1 + $0x900] sm:$0xff]
    %v313 = vld [vmem:[%s1 + $0x908] sm:$0xff]
    %v314 = vld [vmem:[%s1 + $0x910] sm:$0xff]
    %v315 = vld [vmem:[%s1 + $0x918] sm:$0xff]
    %v316 = vld [vmem:[%s1 + $0x920] sm:$0xff]
    %v317 = vld [vmem:[%s1 + $0x928] sm:$0xff]
    %v318 = vld [vmem:[%s1 + $0x930] sm:$0xff]
    %v319 = vld [vmem:[%s1 + $0x938] sm:$0xff]
    %v320 = vld [vmem:[%s1 + $0x940] sm:$0xff]
    %v321 = vld [vmem:[%s1 + $0x948] sm:$0xff]
    %v322 = vld [vmem:[%s1 + $0x950] sm:$0xff]
    %v323 = vld [vmem:[%s1 + $0x958] sm:$0xff]
    %v324 = vld [vmem:[%s1 + $0x960] sm:$0xff]
    %v325 = vld [vmem:[%s1 + $0x968] sm:$0xff]
    %v326 = vld [vmem:[%s1 + $0x970] sm:$0xff]
    %v327 = vld [vmem:[%s1 + $0x978] sm:$0xff]
    %v328 = vld [vmem:[%s1 + $0x980] sm:$0xff]
    %v329 = vld [vmem:[%s1 + $0x988] sm:$0xff]
    %v330 = vld [vmem:[%s1 + $0x990] sm:$0xff]
    %v331 = vld [vmem:[%s1 + $0x998] sm:$0xff]
    %v332 = vld [vmem:[%s1 + $0x9a0] sm:$0xff]
    %v333 = vld [vmem:[%s1 + $0x9a8] sm:$0xff]
    %v334 = vld [vmem:[%s1 + $0x9b0] sm:$0xff]
    %v335 = vld [vmem:[%s1 + $0x9b8] sm:$0xff]
    %v336 = vld [vmem:[%s1 + $0x9c0] sm:$0xff]
    %v337 = vld [vmem:[%s1 + $0x9c8] sm:$0xff]
    %v338 = vld [vmem:[%s1 + $0x9d0] sm:$0xff]
    %v339 = vld [vmem:[%s1 + $0x9d8] sm:$0xff]
    %v340 = vld [vmem:[%s1 + $0x9e0] sm:$0xff]
    %v341 = vld [vmem:[%s1 + $0x9e8] sm:$0xff]
    %v342 = vld [vmem:[%s1 + $0x9f0] sm:$0xff]
    %v343 = vld [vmem:[%s1 + $0x9f8] sm:$0xff]
    %v344 = vld [vmem:[%s1 + $0xa00] sm:$0xff]
    %v345 = vld [vmem:[%s1 + $0xa08] sm:$0xff]
    %v346 = vld [vmem:[%s1 + $0xa10] sm:$0xff]
    %v347 = vld [vmem:[%s1 + $0xa18] sm:$0xff]
    %v348 = vld [vmem:[%s1 + $0xa20] sm:$0xff]
    %v349 = vld [vmem:[%s1 + $0xa28] sm:$0xff]
    %v350 = vld [vmem:[%s1 + $0xa30] sm:$0xff]
    %v351 = vld [vmem:[%s1 + $0xa38] sm:$0xff]
    %v352 = vld [vmem:[%s1 + $0xa40] sm:$0xff]
    %v353 = vld [vmem:[%s1 + $0xa48] sm:$0xff]
    %v354 = vld [vmem:[%s1 + $0xa50] sm:$0xff]
    %v355 = vld [vmem:[%s1 + $0xa58] sm:$0xff]
    %v356 = vld [vmem:[%s1 + $0xa60] sm:$0xff]
    %v357 = vld [vmem:[%s1 + $0xa68] sm:$0xff]
    %v358 = vld [vmem:[%s1 + $0xa70] sm:$0xff]
    %v359 = vld [vmem:[%s1 + $0xa78] sm:$0xff]
    %v360 = vld [vmem:[%s1 + $0xa80] sm:$0xff]
    %v361 = vld [vmem:[%s1 + $0xa88] sm:$0xff]
    %v362 = vld [vmem:[%s1 + $0xa90] sm:$0xff]
    %v363 = vld [vmem:[%s1 + $0xa98] sm:$0xff]
    %v364 = vld [vmem:[%s1 + $0xaa0] sm:$0xff]
    %v365 = vld [vmem:[%s1 + $0xaa8] sm:$0xff]
    %v366 = vld [vmem:[%s1 + $0xab0] sm:$0xff]
    %v367 = vld [vmem:[%s1 + $0xab8] sm:$0xff]
    %v368 = vld [vmem:[%s1 + $0xac0] sm:$0xff]
    %v369 = vld [vmem:[%s1 + $0xac8] sm:$0xff]
    %v370 = vld [vmem:[%s1 + $0xad0] sm:$0xff]
    %v371 = vld [vmem:[%s1 + $0xad8] sm:$0xff]
    %v372 = vld [vmem:[%s1 + $0xae0] sm:$0xff]
    %v373 = vld [vmem:[%s1 + $0xae8] sm:$0xff]
    %v374 = vld [vmem:[%s1 + $0xaf0] sm:$0xff]
    %v375 = vld [vmem:[%s1 + $0xaf8] sm:$0xff]
    %v376 = vld [vmem:[%s1 + $0xb00] sm:$0xff]
    %v377 = vld [vmem:[%s1 + $0xb08] sm:$0xff]
    %v378 = vld [vmem:[%s1 + $0xb10] sm:$0xff]
    %v379 = vld [vmem:[%s1 + $0xb18] sm:$0xff]
    %v380 = vld [vmem:[%s1 + $0xb20] sm:$0xff]
    %v381 = vld [vmem:[%s1 + $0xb28] sm:$0xff]
    %v382 = vld [vmem:[%s1 + $0xb30] sm:$0xff]
    %v383 = vld [vmem:[%s1 + $0xb38] sm:$0xff]
    %v384 = vld [vmem:[%s1 + $0xb40] sm:$0xff]
    %v385 = vld [vmem:[%s1 + $0xb48] sm:$0xff]
    %v386 = vld [vmem:[%s1 + $0xb50] sm:$0xff]
    %v387 = vld [vmem:[%s1 + $0xb58] sm:$0xff]
    %v388 = vld [vmem:[%s1 + $0xb60] sm:$0xff]
    %v389 = vld [vmem:[%s1 + $0xb68] sm:$0xff]
    %v390 = vld [vmem:[%s1 + $0xb70] sm:$0xff]
    %v391 = vld [vmem:[%s1 + $0xb78] sm:$0xff]
    %v392 = vld [vmem:[%s1 + $0xb80] sm:$0xff]
    %v393 = vld [vmem:[%s1 + $0xb88] sm:$0xff]
    %v394 = vld [vmem:[%s1 + $0xb90] sm:$0xff]
    %v395 = vld [vmem:[%s1 + $0xb98] sm:$0xff]
    %v396 = vld [vmem:[%s1 + $0xba0] sm:$0xff]
    %v397 = vld [vmem:[%s1 + $0xba8] sm:$0xff]
    %v398 = vld [vmem:[%s1 + $0xbb0] sm:$0xff]
    %v399 = vld [vmem:[%s1 + $0xbb8] sm:$0xff]
    %v400 = vld [vmem:[%s1 + $0xbc0] sm:$0xff]
    %v401 = vld [vmem:[%s1 + $0xbc8] sm:$0xff]
    %v402 = vld [vmem:[%s1 + $0xbd0] sm:$0xff]
    %v403 = vld [vmem:[%s1 + $0xbd8] sm:$0xff]
    %v404 = vld [vmem:[%s1 + $0xbe0] sm:$0xff]
    %v405 = vld [vmem:[%s1 + $0xbe8] sm:$0xff]
    %v406 = vld [vmem:[%s1 + $0xbf0] sm:$0xff]
    %v407 = vld [vmem:[%s1 + $0xbf8] sm:$0xff]
    %v408 = vld [vmem:[%s1 + $0xc00] sm:$0xff]
    %v409 = vld [vmem:[%s1 + $0xc08] sm:$0xff]
    %v410 = vld [vmem:[%s1 + $0xc10] sm:$0xff]
    %v411 = vld [vmem:[%s1 + $0xc18] sm:$0xff]
    %v412 = vld [vmem:[%s1 + $0xc20] sm:$0xff]
    %v413 = vld [vmem:[%s1 + $0xc28] sm:$0xff]
    %v414 = vld [vmem:[%s1 + $0xc30] sm:$0xff]
    %v415 = vld [vmem:[%s1 + $0xc38] sm:$0xff]
    %v416 = vld [vmem:[%s1 + $0xc40] sm:$0xff]
    %v417 = vld [vmem:[%s1 + $0xc48] sm:$0xff]
    %v418 = vld [vmem:[%s1 + $0xc50] sm:$0xff]
    %v419 = vld [vmem:[%s1 + $0xc58] sm:$0xff]
    %v420 = vld [vmem:[%s1 + $0xc60] sm:$0xff]
    %v421 = vld [vmem:[%s1 + $0xc68] sm:$0xff]
    %v422 = vld [vmem:[%s1 + $0xc70] sm:$0xff]
    %v423 = vld [vmem:[%s1 + $0xc78] sm:$0xff]
    %v424 = vld [vmem:[%s1 + $0xc80] sm:$0xff]
    %v425 = vld [vmem:[%s1 + $0xc88] sm:$0xff]
    %v426 = vld [vmem:[%s1 + $0xc90] sm:$0xff]
    %v427 = vld [vmem:[%s1 + $0xc98] sm:$0xff]
    %v428 = vld [vmem:[%s1 + $0xca0] sm:$0xff]
    %v429 = vld [vmem:[%s1 + $0xca8] sm:$0xff]
    %v430 = vld [vmem:[%s1 + $0xcb0] sm:$0xff]
    %v431 = vld [vmem:[%s1 + $0xcb8] sm:$0xff]
    %v432 = vld [vmem:[%s1 + $0xcc0] sm:$0xff]
    %v433 = vld [vmem:[%s1 + $0xcc8] sm:$0xff]
    %v434 = vld [vmem:[%s1 + $0xcd0] sm:$0xff]
    %v435 = vld [vmem:[%s1 + $0xcd8] sm:$0xff]
    %v436 = vld [vmem:[%s1 + $0xce0] sm:$0xff]
    %v437 = vld [vmem:[%s1 + $0xce8] sm:$0xff]
    %v438 = vld [vmem:[%s1 + $0xcf0] sm:$0xff]
    %v439 = vld [vmem:[%s1 + $0xcf8] sm:$0xff]
    %v440 = vld [vmem:[%s1 + $0xd00] sm:$0xff]
    %v441 = vld [vmem:[%s1 + $0xd08] sm:$0xff]
    %v442 = vld [vmem:[%s1 + $0xd10] sm:$0xff]
    %v443 = vld [vmem:[%s1 + $0xd18] sm:$0xff]
    %v444 = vld [vmem:[%s1 + $0xd20] sm:$0xff]
    %v445 = vld [vmem:[%s1 + $0xd28] sm:$0xff]
    %v446 = vld [vmem:[%s1 + $0xd30] sm:$0xff]
    %v447 = vld [vmem:[%s1 + $0xd38] sm:$0xff]
    %v448 = vld [vmem:[%s1 + $0xd40] sm:$0xff]
    %v449 = vld [vmem:[%s1 + $0xd48] sm:$0xff]
    %v450 = vld [vmem:[%s1 + $0xd50] sm:$0xff]
    %v451 = vld [vmem:[%s1 + $0xd58] sm:$0xff]
    %v452 = vld [vmem:[%s1 + $0xd60] sm:$0xff]
    %v453 = vld [vmem:[%s1 + $0xd68] sm:$0xff]
    %v454 = vld [vmem:[%s1 + $0xd70] sm:$0xff]
    %v455 = vld [vmem:[%s1 + $0xd78] sm:$0xff]
    %v456 = vld [vmem:[%s1 + $0xd80] sm:$0xff]
    %v457 = vld [vmem:[%s1 + $0xd88] sm:$0xff]
    %v458 = vld [vmem:[%s1 + $0xd90] sm:$0xff]
    %v459 = vld [vmem:[%s1 + $0xd98] sm:$0xff]
    %v460 = vld [vmem:[%s1 + $0xda0] sm:$0xff]
    %v461 = vld [vmem:[%s1 + $0xda8] sm:$0xff]
    %v462 = vld [vmem:[%s1 + $0xdb0] sm:$0xff]
    %v463 = vld [vmem:[%s1 + $0xdb8] sm:$0xff]
    %v464 = vld [vmem:[%s1 + $0xdc0] sm:$0xff]
    %v465 = vld [vmem:[%s1 + $0xdc8] sm:$0xff]
    %v466 = vld [vmem:[%s1 + $0xdd0] sm:$0xff]
    %v467 = vld [vmem:[%s1 + $0xdd8] sm:$0xff]
    %v468 = vld [vmem:[%s1 + $0xde0] sm:$0xff]
    %v469 = vld [vmem:[%s1 + $0xde8] sm:$0xff]
    %v470 = vld [vmem:[%s1 + $0xdf0] sm:$0xff]
    %v471 = vld [vmem:[%s1 + $0xdf8] sm:$0xff]
    %v472 = vld [vmem:[%s1 + $0xe00] sm:$0xff]
    %v473 = vld [vmem:[%s1 + $0xe08] sm:$0xff]
    %v474 = vld [vmem:[%s1 + $0xe10] sm:$0xff]
    %v475 = vld [vmem:[%s1 + $0xe18] sm:$0xff]
    %v476 = vld [vmem:[%s1 + $0xe20] sm:$0xff]
    %v477 = vld [vmem:[%s1 + $0xe28] sm:$0xff]
    %v478 = vld [vmem:[%s1 + $0xe30] sm:$0xff]
    %v479 = vld [vmem:[%s1 + $0xe38] sm:$0xff]
    %v480 = vld [vmem:[%s1 + $0xe40] sm:$0xff]
    %v481 = vld [vmem:[%s1 + $0xe48] sm:$0xff]
    %v482 = vld [vmem:[%s1 + $0xe50] sm:$0xff]
    %v483 = vld [vmem:[%s1 + $0xe58] sm:$0xff]
    %v484 = vld [vmem:[%s1 + $0xe60] sm:$0xff]
    %v485 = vld [vmem:[%s1 + $0xe68] sm:$0xff]
    %v486 = vld [vmem:[%s1 + $0xe70] sm:$0xff]
    %v487 = vld [vmem:[%s1 + $0xe78] sm:$0xff]
    %v488 = vld [vmem:[%s1 + $0xe80] sm:$0xff]
    %v489 = vld [vmem:[%s1 + $0xe88] sm:$0xff]
    %v490 = vld [vmem:[%s1 + $0xe90] sm:$0xff]
    %v491 = vld [vmem:[%s1 + $0xe98] sm:$0xff]
    %v492 = vld [vmem:[%s1 + $0xea0] sm:$0xff]
    %v493 = vld [vmem:[%s1 + $0xea8] sm:$0xff]
    %v494 = vld [vmem:[%s1 + $0xeb0] sm:$0xff]
    %v495 = vld [vmem:[%s1 + $0xeb8] sm:$0xff]
    %v496 = vld [vmem:[%s1 + $0xec0] sm:$0xff]
    %v497 = vld [vmem:[%s1 + $0xec8] sm:$0xff]
    %v498 = vld [vmem:[%s1 + $0xed0] sm:$0xff]
    %v499 = vld [vmem:[%s1 + $0xed8] sm:$0xff]
    %v500 = vld [vmem:[%s1 + $0xee0] sm:$0xff]
    %v501 = vld [vmem:[%s1 + $0xee8] sm:$0xff]
    %v502 = vld [vmem:[%s1 + $0xef0] sm:$0xff]
    %v503 = vld [vmem:[%s1 + $0xef8] sm:$0xff]
    %v504 = vld [vmem:[%s1 + $0xf00] sm:$0xff]
    %v505 = vld [vmem:[%s1 + $0xf08] sm:$0xff]
    %v506 = vld [vmem:[%s1 + $0xf10] sm:$0xff]
    %v507 = vld [vmem:[%s1 + $0xf18] sm:$0xff]
    %v508 = vld [vmem:[%s1 + $0xf20] sm:$0xff]
    %v509 = vld [vmem:[%s1 + $0xf28] sm:$0xff]
    %v510 = vld [vmem:[%s1 + $0xf30] sm:$0xff]
    %v511 = vld [vmem:[%s1 + $0xf38] sm:$0xff]
    %v512 = vld [vmem:[%s1 + $0xf40] sm:$0xff]
    %v513 = vld [vmem:[%s1 + $0xf48] sm:$0xff]
    %v514 = vld [vmem:[%s1 + $0xf50] sm:$0xff]
    %v515 = vld [vmem:[%s1 + $0xf58] sm:$0xff]
    %v516 = vld [vmem:[%s1 + $0xf60] sm:$0xff]
    %v517 = vld [vmem:[%s1 + $0xf68] sm:$0xff]
    %v518 = vld [vmem:[%s1 + $0xf70] sm:$0xff]
    %v519 = vld [vmem:[%s1 + $0xf78] sm:$0xff]
    %v520 = vld [vmem:[%s1 + $0xf80] sm:$0xff]
    %v521 = vld [vmem:[%s1 + $0xf88] sm:$0xff]
    %v522 = vld [vmem:[%s1 + $0xf90] sm:$0xff]
    %v523 = vld [vmem:[%s1 + $0xf98] sm:$0xff]
    %v524 = vld [vmem:[%s1 + $0xfa0] sm:$0xff]
    %v525 = vld [vmem:[%s1 + $0xfa8] sm:$0xff]
    %v526 = vld [vmem:[%s1 + $0xfb0] sm:$0xff]
    %v527 = vld [vmem:[%s1 + $0xfb8] sm:$0xff]
    %v528 = vld [vmem:[%s1 + $0xfc0] sm:$0xff]
    %v529 = vld [vmem:[%s1 + $0xfc8] sm:$0xff]
    %v530 = vld [vmem:[%s1 + $0xfd0] sm:$0xff]
    %v531 = vld [vmem:[%s1 + $0xfd8] sm:$0xff]
    %v532 = vld [vmem:[%s1 + $0xfe0] sm:$0xff]
    %v533 = vld [vmem:[%s1 + $0xfe8] sm:$0xff]
    %v534 = vld [vmem:[%s1 + $0xff0] sm:$0xff]
    %v535 = vld [vmem:[%s1 + $0xff8] sm:$0xff]
    %v536 = vld [vmem:[%s2] sm:$0xf]
    %v538 = vlaneseq
    %v539 = vshrl.u32 %v538, 7
    %v540 = vsub.s32 0, %v539
    %v541 = vrot.slane %v536, %v540
    %v542 = vlaneseq
    %v543 = vshrl.u32 %v542, 7
    %v544 = vsub.s32 1, %v543
    %v545 = vrot.slane %v536, %v544
    %v546 = vlaneseq
    %v547 = vshrl.u32 %v546, 7
    %v548 = vsub.s32 2, %v547
    %v549 = vrot.slane %v536, %v548
    %v550 = vlaneseq
    %v551 = vshrl.u32 %v550, 7
    %v552 = vsub.s32 3, %v551
    %v553 = vrot.slane %v536, %v552
    %v560 = vcombine.high %v22, %v22
    %v562 = vunpack.c.l.s4 1966171168
    %v563 = vunpack.c.0.s8 %v562
    %v564 = vlaneseq
    %v565 = vshrl.u32 %v564, 7
    %v566 = vsub.s32 %v563, %v565
    %v567 = vrot.slane %v22, %v566
    %v569 = vunpack.c.l.s4 1966171168
    %v570 = vunpack.c.0.s8 %v569
    %v571 = vlaneseq
    %v572 = vshrl.u32 %v571, 7
    %v573 = vsub.s32 %v570, %v572
    %v574 = vrot.slane %v560, %v573
    %v575 = vcombine.high %v567, %v567
    %v576 = vcombine.high %v574, %v574
    %v578 = vunpack.c.l.s4 1966171168
    %v579 = vunpack.c.0.s8 %v578
    %v580 = vlaneseq
    %v581 = vshrl.u32 %v580, 7
    %v582 = vsub.s32 %v579, %v581
    %v583 = vrot.slane %v567, %v582
    %v585 = vunpack.c.l.s4 1966171168
    %v586 = vunpack.c.0.s8 %v585
    %v587 = vlaneseq
    %v588 = vshrl.u32 %v587, 7
    %v589 = vsub.s32 %v586, %v588
    %v590 = vrot.slane %v574, %v589
    %v592 = vunpack.c.l.s4 1966171168
    %v593 = vunpack.c.0.s8 %v592
    %v594 = vlaneseq
    %v595 = vshrl.u32 %v594, 7
    %v596 = vsub.s32 %v593, %v595
    %v597 = vrot.slane %v575, %v596
    %v599 = vunpack.c.l.s4 1966171168
    %v600 = vunpack.c.0.s8 %v599
    %v601 = vlaneseq
    %v602 = vshrl.u32 %v601, 7
    %v603 = vsub.s32 %v600, %v602
    %v604 = vrot.slane %v576, %v603
    %v605 = vcombine.high %v583, %v583
    %v606 = vcombine.high %v590, %v590
    %v607 = vcombine.high %v597, %v597
    %v608 = vcombine.high %v604, %v604
    %v609 = vcombine.high %v23, %v23
    %v611 = vunpack.c.l.s4 1966171168
    %v612 = vunpack.c.0.s8 %v611
    %v613 = vlaneseq
    %v614 = vshrl.u32 %v613, 7
    %v615 = vsub.s32 %v612, %v614
    %v616 = vrot.slane %v23, %v615
    %v618 = vunpack.c.l.s4 1966171168
    %v619 = vunpack.c.0.s8 %v618
    %v620 = vlaneseq
    %v621 = vshrl.u32 %v620, 7
    %v622 = vsub.s32 %v619, %v621
    %v623 = vrot.slane %v609, %v622
    %v624 = vcombine.high %v616, %v616
    %v625 = vcombine.high %v623, %v623
    %v627 = vunpack.c.l.s4 1966171168
    %v628 = vunpack.c.0.s8 %v627
    %v629 = vlaneseq
    %v630 = vshrl.u32 %v629, 7
    %v631 = vsub.s32 %v628, %v630
    %v632 = vrot.slane %v616, %v631
    %v634 = vunpack.c.l.s4 1966171168
    %v635 = vunpack.c.0.s8 %v634
    %v636 = vlaneseq
    %v637 = vshrl.u32 %v636, 7
    %v638 = vsub.s32 %v635, %v637
    %v639 = vrot.slane %v623, %v638
    %v641 = vunpack.c.l.s4 1966171168
    %v642 = vunpack.c.0.s8 %v641
    %v643 = vlaneseq
    %v644 = vshrl.u32 %v643, 7
    %v645 = vsub.s32 %v642, %v644
    %v646 = vrot.slane %v624, %v645
    %v648 = vunpack.c.l.s4 1966171168
    %v649 = vunpack.c.0.s8 %v648
    %v650 = vlaneseq
    %v651 = vshrl.u32 %v650, 7
    %v652 = vsub.s32 %v649, %v651
    %v653 = vrot.slane %v625, %v652
    %v654 = vcombine.high %v632, %v632
    %v655 = vcombine.high %v639, %v639
    %v656 = vcombine.high %v646, %v646
    %v657 = vcombine.high %v653, %v653
    %v1186 = vunpack.c.l.b16 %v24
    %v1187 = vunpack.c.h.b16 %v24
    %v1188 = vunpack.c.l.b16 %v25
    %v1189 = vunpack.c.h.b16 %v25
    %v1190 = vunpack.c.l.b16 %v26
    %v1191 = vunpack.c.h.b16 %v26
    %v1192 = vunpack.c.l.b16 %v27
    %v1193 = vunpack.c.h.b16 %v27
    %v1194 = vunpack.c.l.b16 %v28
    %v1195 = vunpack.c.h.b16 %v28
    %v1196 = vunpack.c.l.b16 %v29
    %v1197 = vunpack.c.h.b16 %v29
    %v1198 = vunpack.c.l.b16 %v30
    %v1199 = vunpack.c.h.b16 %v30
    %v1200 = vunpack.c.l.b16 %v31
    %v1201 = vunpack.c.h.b16 %v31
    %v1202 = vunpack.c.l.b16 %v32
    %v1203 = vunpack.c.h.b16 %v32
    %v1204 = vunpack.c.l.b16 %v33
    %v1205 = vunpack.c.h.b16 %v33
    %v1206 = vunpack.c.l.b16 %v34
    %v1207 = vunpack.c.h.b16 %v34
    %v1208 = vunpack.c.l.b16 %v35
    %v1209 = vunpack.c.h.b16 %v35
    %v1210 = vunpack.c.l.b16 %v36
    %v1211 = vunpack.c.h.b16 %v36
    %v1212 = vunpack.c.l.b16 %v37
    %v1213 = vunpack.c.h.b16 %v37
    %v1214 = vunpack.c.l.b16 %v38
    %v1215 = vunpack.c.h.b16 %v38
    %v1216 = vunpack.c.l.b16 %v39
    %v1217 = vunpack.c.h.b16 %v39
    %v1218 = vunpack.c.l.b16 %v40
    %v1219 = vunpack.c.h.b16 %v40
    %v1220 = vunpack.c.l.b16 %v41
    %v1221 = vunpack.c.h.b16 %v41
    %v1222 = vunpack.c.l.b16 %v42
    %v1223 = vunpack.c.h.b16 %v42
    %v1224 = vunpack.c.l.b16 %v43
    %v1225 = vunpack.c.h.b16 %v43
    %v1226 = vunpack.c.l.b16 %v44
    %v1227 = vunpack.c.h.b16 %v44
    %v1228 = vunpack.c.l.b16 %v45
    %v1229 = vunpack.c.h.b16 %v45
    %v1230 = vunpack.c.l.b16 %v46
    %v1231 = vunpack.c.h.b16 %v46
    %v1232 = vunpack.c.l.b16 %v47
    %v1233 = vunpack.c.h.b16 %v47
    %v1234 = vunpack.c.l.b16 %v48
    %v1235 = vunpack.c.h.b16 %v48
    %v1236 = vunpack.c.l.b16 %v49
    %v1237 = vunpack.c.h.b16 %v49
    %v1238 = vunpack.c.l.b16 %v50
    %v1239 = vunpack.c.h.b16 %v50
    %v1240 = vunpack.c.l.b16 %v51
    %v1241 = vunpack.c.h.b16 %v51
    %v1242 = vunpack.c.l.b16 %v52
    %v1243 = vunpack.c.h.b16 %v52
    %v1244 = vunpack.c.l.b16 %v53
    %v1245 = vunpack.c.h.b16 %v53
    %v1246 = vunpack.c.l.b16 %v54
    %v1247 = vunpack.c.h.b16 %v54
    %v1248 = vunpack.c.l.b16 %v55
    %v1249 = vunpack.c.h.b16 %v55
    %v1250 = vunpack.c.l.b16 %v56
    %v1251 = vunpack.c.h.b16 %v56
    %v1252 = vunpack.c.l.b16 %v57
    %v1253 = vunpack.c.h.b16 %v57
    %v1254 = vunpack.c.l.b16 %v58
    %v1255 = vunpack.c.h.b16 %v58
    %v1256 = vunpack.c.l.b16 %v59
    %v1257 = vunpack.c.h.b16 %v59
    %v1258 = vunpack.c.l.b16 %v60
    %v1259 = vunpack.c.h.b16 %v60
    %v1260 = vunpack.c.l.b16 %v61
    %v1261 = vunpack.c.h.b16 %v61
    %v1262 = vunpack.c.l.b16 %v62
    %v1263 = vunpack.c.h.b16 %v62
    %v1264 = vunpack.c.l.b16 %v63
    %v1265 = vunpack.c.h.b16 %v63
    %v1266 = vunpack.c.l.b16 %v64
    %v1267 = vunpack.c.h.b16 %v64
    %v1268 = vunpack.c.l.b16 %v65
    %v1269 = vunpack.c.h.b16 %v65
    %v1270 = vunpack.c.l.b16 %v66
    %v1271 = vunpack.c.h.b16 %v66
    %v1272 = vunpack.c.l.b16 %v67
    %v1273 = vunpack.c.h.b16 %v67
    %v1274 = vunpack.c.l.b16 %v68
    %v1275 = vunpack.c.h.b16 %v68
    %v1276 = vunpack.c.l.b16 %v69
    %v1277 = vunpack.c.h.b16 %v69
    %v1278 = vunpack.c.l.b16 %v70
    %v1279 = vunpack.c.h.b16 %v70
    %v1280 = vunpack.c.l.b16 %v71
    %v1281 = vunpack.c.h.b16 %v71
    %v1282 = vunpack.c.l.b16 %v72
    %v1283 = vunpack.c.h.b16 %v72
    %v1284 = vunpack.c.l.b16 %v73
    %v1285 = vunpack.c.h.b16 %v73
    %v1286 = vunpack.c.l.b16 %v74
    %v1287 = vunpack.c.h.b16 %v74
    %v1288 = vunpack.c.l.b16 %v75
    %v1289 = vunpack.c.h.b16 %v75
    %v1290 = vunpack.c.l.b16 %v76
    %v1291 = vunpack.c.h.b16 %v76
    %v1292 = vunpack.c.l.b16 %v77
    %v1293 = vunpack.c.h.b16 %v77
    %v1294 = vunpack.c.l.b16 %v78
    %v1295 = vunpack.c.h.b16 %v78
    %v1296 = vunpack.c.l.b16 %v79
    %v1297 = vunpack.c.h.b16 %v79
    %v1298 = vunpack.c.l.b16 %v80
    %v1299 = vunpack.c.h.b16 %v80
    %v1300 = vunpack.c.l.b16 %v81
    %v1301 = vunpack.c.h.b16 %v81
    %v1302 = vunpack.c.l.b16 %v82
    %v1303 = vunpack.c.h.b16 %v82
    %v1304 = vunpack.c.l.b16 %v83
    %v1305 = vunpack.c.h.b16 %v83
    %v1306 = vunpack.c.l.b16 %v84
    %v1307 = vunpack.c.h.b16 %v84
    %v1308 = vunpack.c.l.b16 %v85
    %v1309 = vunpack.c.h.b16 %v85
    %v1310 = vunpack.c.l.b16 %v86
    %v1311 = vunpack.c.h.b16 %v86
    %v1312 = vunpack.c.l.b16 %v87
    %v1313 = vunpack.c.h.b16 %v87
    %v1314 = vunpack.c.l.b16 %v88
    %v1315 = vunpack.c.h.b16 %v88
    %v1316 = vunpack.c.l.b16 %v89
    %v1317 = vunpack.c.h.b16 %v89
    %v1318 = vunpack.c.l.b16 %v90
    %v1319 = vunpack.c.h.b16 %v90
    %v1320 = vunpack.c.l.b16 %v91
    %v1321 = vunpack.c.h.b16 %v91
    %v1322 = vunpack.c.l.b16 %v92
    %v1323 = vunpack.c.h.b16 %v92
    %v1324 = vunpack.c.l.b16 %v93
    %v1325 = vunpack.c.h.b16 %v93
    %v1326 = vunpack.c.l.b16 %v94
    %v1327 = vunpack.c.h.b16 %v94
    %v1328 = vunpack.c.l.b16 %v95
    %v1329 = vunpack.c.h.b16 %v95
    %v1330 = vunpack.c.l.b16 %v96
    %v1331 = vunpack.c.h.b16 %v96
    %v1332 = vunpack.c.l.b16 %v97
    %v1333 = vunpack.c.h.b16 %v97
    %v1334 = vunpack.c.l.b16 %v98
    %v1335 = vunpack.c.h.b16 %v98
    %v1336 = vunpack.c.l.b16 %v99
    %v1337 = vunpack.c.h.b16 %v99
    %v1338 = vunpack.c.l.b16 %v100
    %v1339 = vunpack.c.h.b16 %v100
    %v1340 = vunpack.c.l.b16 %v101
    %v1341 = vunpack.c.h.b16 %v101
    %v1342 = vunpack.c.l.b16 %v102
    %v1343 = vunpack.c.h.b16 %v102
    %v1344 = vunpack.c.l.b16 %v103
    %v1345 = vunpack.c.h.b16 %v103
    %v1346 = vunpack.c.l.b16 %v104
    %v1347 = vunpack.c.h.b16 %v104
    %v1348 = vunpack.c.l.b16 %v105
    %v1349 = vunpack.c.h.b16 %v105
    %v1350 = vunpack.c.l.b16 %v106
    %v1351 = vunpack.c.h.b16 %v106
    %v1352 = vunpack.c.l.b16 %v107
    %v1353 = vunpack.c.h.b16 %v107
    %v1354 = vunpack.c.l.b16 %v108
    %v1355 = vunpack.c.h.b16 %v108
    %v1356 = vunpack.c.l.b16 %v109
    %v1357 = vunpack.c.h.b16 %v109
    %v1358 = vunpack.c.l.b16 %v110
    %v1359 = vunpack.c.h.b16 %v110
    %v1360 = vunpack.c.l.b16 %v111
    %v1361 = vunpack.c.h.b16 %v111
    %v1362 = vunpack.c.l.b16 %v112
    %v1363 = vunpack.c.h.b16 %v112
    %v1364 = vunpack.c.l.b16 %v113
    %v1365 = vunpack.c.h.b16 %v113
    %v1366 = vunpack.c.l.b16 %v114
    %v1367 = vunpack.c.h.b16 %v114
    %v1368 = vunpack.c.l.b16 %v115
    %v1369 = vunpack.c.h.b16 %v115
    %v1370 = vunpack.c.l.b16 %v116
    %v1371 = vunpack.c.h.b16 %v116
    %v1372 = vunpack.c.l.b16 %v117
    %v1373 = vunpack.c.h.b16 %v117
    %v1374 = vunpack.c.l.b16 %v118
    %v1375 = vunpack.c.h.b16 %v118
    %v1376 = vunpack.c.l.b16 %v119
    %v1377 = vunpack.c.h.b16 %v119
    %v1378 = vunpack.c.l.b16 %v120
    %v1379 = vunpack.c.h.b16 %v120
    %v1380 = vunpack.c.l.b16 %v121
    %v1381 = vunpack.c.h.b16 %v121
    %v1382 = vunpack.c.l.b16 %v122
    %v1383 = vunpack.c.h.b16 %v122
    %v1384 = vunpack.c.l.b16 %v123
    %v1385 = vunpack.c.h.b16 %v123
    %v1386 = vunpack.c.l.b16 %v124
    %v1387 = vunpack.c.h.b16 %v124
    %v1388 = vunpack.c.l.b16 %v125
    %v1389 = vunpack.c.h.b16 %v125
    %v1390 = vunpack.c.l.b16 %v126
    %v1391 = vunpack.c.h.b16 %v126
    %v1392 = vunpack.c.l.b16 %v127
    %v1393 = vunpack.c.h.b16 %v127
    %v1394 = vunpack.c.l.b16 %v128
    %v1395 = vunpack.c.h.b16 %v128
    %v1396 = vunpack.c.l.b16 %v129
    %v1397 = vunpack.c.h.b16 %v129
    %v1398 = vunpack.c.l.b16 %v130
    %v1399 = vunpack.c.h.b16 %v130
    %v1400 = vunpack.c.l.b16 %v131
    %v1401 = vunpack.c.h.b16 %v131
    %v1402 = vunpack.c.l.b16 %v132
    %v1403 = vunpack.c.h.b16 %v132
    %v1404 = vunpack.c.l.b16 %v133
    %v1405 = vunpack.c.h.b16 %v133
    %v1406 = vunpack.c.l.b16 %v134
    %v1407 = vunpack.c.h.b16 %v134
    %v1408 = vunpack.c.l.b16 %v135
    %v1409 = vunpack.c.h.b16 %v135
    %v1410 = vunpack.c.l.b16 %v136
    %v1411 = vunpack.c.h.b16 %v136
    %v1412 = vunpack.c.l.b16 %v137
    %v1413 = vunpack.c.h.b16 %v137
    %v1414 = vunpack.c.l.b16 %v138
    %v1415 = vunpack.c.h.b16 %v138
    %v1416 = vunpack.c.l.b16 %v139
    %v1417 = vunpack.c.h.b16 %v139
    %v1418 = vunpack.c.l.b16 %v140
    %v1419 = vunpack.c.h.b16 %v140
    %v1420 = vunpack.c.l.b16 %v141
    %v1421 = vunpack.c.h.b16 %v141
    %v1422 = vunpack.c.l.b16 %v142
    %v1423 = vunpack.c.h.b16 %v142
    %v1424 = vunpack.c.l.b16 %v143
    %v1425 = vunpack.c.h.b16 %v143
    %v1426 = vunpack.c.l.b16 %v144
    %v1427 = vunpack.c.h.b16 %v144
    %v1428 = vunpack.c.l.b16 %v145
    %v1429 = vunpack.c.h.b16 %v145
    %v1430 = vunpack.c.l.b16 %v146
    %v1431 = vunpack.c.h.b16 %v146
    %v1432 = vunpack.c.l.b16 %v147
    %v1433 = vunpack.c.h.b16 %v147
    %v1434 = vunpack.c.l.b16 %v148
    %v1435 = vunpack.c.h.b16 %v148
    %v1436 = vunpack.c.l.b16 %v149
    %v1437 = vunpack.c.h.b16 %v149
    %v1438 = vunpack.c.l.b16 %v150
    %v1439 = vunpack.c.h.b16 %v150
    %v1440 = vunpack.c.l.b16 %v151
    %v1441 = vunpack.c.h.b16 %v151
    %v1442 = vunpack.c.l.b16 %v152
    %v1443 = vunpack.c.h.b16 %v152
    %v1444 = vunpack.c.l.b16 %v153
    %v1445 = vunpack.c.h.b16 %v153
    %v1446 = vunpack.c.l.b16 %v154
    %v1447 = vunpack.c.h.b16 %v154
    %v1448 = vunpack.c.l.b16 %v155
    %v1449 = vunpack.c.h.b16 %v155
    %v1450 = vunpack.c.l.b16 %v156
    %v1451 = vunpack.c.h.b16 %v156
    %v1452 = vunpack.c.l.b16 %v157
    %v1453 = vunpack.c.h.b16 %v157
    %v1454 = vunpack.c.l.b16 %v158
    %v1455 = vunpack.c.h.b16 %v158
    %v1456 = vunpack.c.l.b16 %v159
    %v1457 = vunpack.c.h.b16 %v159
    %v1458 = vunpack.c.l.b16 %v160
    %v1459 = vunpack.c.h.b16 %v160
    %v1460 = vunpack.c.l.b16 %v161
    %v1461 = vunpack.c.h.b16 %v161
    %v1462 = vunpack.c.l.b16 %v162
    %v1463 = vunpack.c.h.b16 %v162
    %v1464 = vunpack.c.l.b16 %v163
    %v1465 = vunpack.c.h.b16 %v163
    %v1466 = vunpack.c.l.b16 %v164
    %v1467 = vunpack.c.h.b16 %v164
    %v1468 = vunpack.c.l.b16 %v165
    %v1469 = vunpack.c.h.b16 %v165
    %v1470 = vunpack.c.l.b16 %v166
    %v1471 = vunpack.c.h.b16 %v166
    %v1472 = vunpack.c.l.b16 %v167
    %v1473 = vunpack.c.h.b16 %v167
    %v1474 = vunpack.c.l.b16 %v168
    %v1475 = vunpack.c.h.b16 %v168
    %v1476 = vunpack.c.l.b16 %v169
    %v1477 = vunpack.c.h.b16 %v169
    %v1478 = vunpack.c.l.b16 %v170
    %v1479 = vunpack.c.h.b16 %v170
    %v1480 = vunpack.c.l.b16 %v171
    %v1481 = vunpack.c.h.b16 %v171
    %v1482 = vunpack.c.l.b16 %v172
    %v1483 = vunpack.c.h.b16 %v172
    %v1484 = vunpack.c.l.b16 %v173
    %v1485 = vunpack.c.h.b16 %v173
    %v1486 = vunpack.c.l.b16 %v174
    %v1487 = vunpack.c.h.b16 %v174
    %v1488 = vunpack.c.l.b16 %v175
    %v1489 = vunpack.c.h.b16 %v175
    %v1490 = vunpack.c.l.b16 %v176
    %v1491 = vunpack.c.h.b16 %v176
    %v1492 = vunpack.c.l.b16 %v177
    %v1493 = vunpack.c.h.b16 %v177
    %v1494 = vunpack.c.l.b16 %v178
    %v1495 = vunpack.c.h.b16 %v178
    %v1496 = vunpack.c.l.b16 %v179
    %v1497 = vunpack.c.h.b16 %v179
    %v1498 = vunpack.c.l.b16 %v180
    %v1499 = vunpack.c.h.b16 %v180
    %v1500 = vunpack.c.l.b16 %v181
    %v1501 = vunpack.c.h.b16 %v181
    %v1502 = vunpack.c.l.b16 %v182
    %v1503 = vunpack.c.h.b16 %v182
    %v1504 = vunpack.c.l.b16 %v183
    %v1505 = vunpack.c.h.b16 %v183
    %v1506 = vunpack.c.l.b16 %v184
    %v1507 = vunpack.c.h.b16 %v184
    %v1508 = vunpack.c.l.b16 %v185
    %v1509 = vunpack.c.h.b16 %v185
    %v1510 = vunpack.c.l.b16 %v186
    %v1511 = vunpack.c.h.b16 %v186
    %v1512 = vunpack.c.l.b16 %v187
    %v1513 = vunpack.c.h.b16 %v187
    %v1514 = vunpack.c.l.b16 %v188
    %v1515 = vunpack.c.h.b16 %v188
    %v1516 = vunpack.c.l.b16 %v189
    %v1517 = vunpack.c.h.b16 %v189
    %v1518 = vunpack.c.l.b16 %v190
    %v1519 = vunpack.c.h.b16 %v190
    %v1520 = vunpack.c.l.b16 %v191
    %v1521 = vunpack.c.h.b16 %v191
    %v1522 = vunpack.c.l.b16 %v192
    %v1523 = vunpack.c.h.b16 %v192
    %v1524 = vunpack.c.l.b16 %v193
    %v1525 = vunpack.c.h.b16 %v193
    %v1526 = vunpack.c.l.b16 %v194
    %v1527 = vunpack.c.h.b16 %v194
    %v1528 = vunpack.c.l.b16 %v195
    %v1529 = vunpack.c.h.b16 %v195
    %v1530 = vunpack.c.l.b16 %v196
    %v1531 = vunpack.c.h.b16 %v196
    %v1532 = vunpack.c.l.b16 %v197
    %v1533 = vunpack.c.h.b16 %v197
    %v1534 = vunpack.c.l.b16 %v198
    %v1535 = vunpack.c.h.b16 %v198
    %v1536 = vunpack.c.l.b16 %v199
    %v1537 = vunpack.c.h.b16 %v199
    %v1538 = vunpack.c.l.b16 %v200
    %v1539 = vunpack.c.h.b16 %v200
    %v1540 = vunpack.c.l.b16 %v201
    %v1541 = vunpack.c.h.b16 %v201
    %v1542 = vunpack.c.l.b16 %v202
    %v1543 = vunpack.c.h.b16 %v202
    %v1544 = vunpack.c.l.b16 %v203
    %v1545 = vunpack.c.h.b16 %v203
    %v1546 = vunpack.c.l.b16 %v204
    %v1547 = vunpack.c.h.b16 %v204
    %v1548 = vunpack.c.l.b16 %v205
    %v1549 = vunpack.c.h.b16 %v205
    %v1550 = vunpack.c.l.b16 %v206
    %v1551 = vunpack.c.h.b16 %v206
    %v1552 = vunpack.c.l.b16 %v207
    %v1553 = vunpack.c.h.b16 %v207
    %v1554 = vunpack.c.l.b16 %v208
    %v1555 = vunpack.c.h.b16 %v208
    %v1556 = vunpack.c.l.b16 %v209
    %v1557 = vunpack.c.h.b16 %v209
    %v1558 = vunpack.c.l.b16 %v210
    %v1559 = vunpack.c.h.b16 %v210
    %v1560 = vunpack.c.l.b16 %v211
    %v1561 = vunpack.c.h.b16 %v211
    %v1562 = vunpack.c.l.b16 %v212
    %v1563 = vunpack.c.h.b16 %v212
    %v1564 = vunpack.c.l.b16 %v213
    %v1565 = vunpack.c.h.b16 %v213
    %v1566 = vunpack.c.l.b16 %v214
    %v1567 = vunpack.c.h.b16 %v214
    %v1568 = vunpack.c.l.b16 %v215
    %v1569 = vunpack.c.h.b16 %v215
    %v1570 = vunpack.c.l.b16 %v216
    %v1571 = vunpack.c.h.b16 %v216
    %v1572 = vunpack.c.l.b16 %v217
    %v1573 = vunpack.c.h.b16 %v217
    %v1574 = vunpack.c.l.b16 %v218
    %v1575 = vunpack.c.h.b16 %v218
    %v1576 = vunpack.c.l.b16 %v219
    %v1577 = vunpack.c.h.b16 %v219
    %v1578 = vunpack.c.l.b16 %v220
    %v1579 = vunpack.c.h.b16 %v220
    %v1580 = vunpack.c.l.b16 %v221
    %v1581 = vunpack.c.h.b16 %v221
    %v1582 = vunpack.c.l.b16 %v222
    %v1583 = vunpack.c.h.b16 %v222
    %v1584 = vunpack.c.l.b16 %v223
    %v1585 = vunpack.c.h.b16 %v223
    %v1586 = vunpack.c.l.b16 %v224
    %v1587 = vunpack.c.h.b16 %v224
    %v1588 = vunpack.c.l.b16 %v225
    %v1589 = vunpack.c.h.b16 %v225
    %v1590 = vunpack.c.l.b16 %v226
    %v1591 = vunpack.c.h.b16 %v226
    %v1592 = vunpack.c.l.b16 %v227
    %v1593 = vunpack.c.h.b16 %v227
    %v1594 = vunpack.c.l.b16 %v228
    %v1595 = vunpack.c.h.b16 %v228
    %v1596 = vunpack.c.l.b16 %v229
    %v1597 = vunpack.c.h.b16 %v229
    %v1598 = vunpack.c.l.b16 %v230
    %v1599 = vunpack.c.h.b16 %v230
    %v1600 = vunpack.c.l.b16 %v231
    %v1601 = vunpack.c.h.b16 %v231
    %v1602 = vunpack.c.l.b16 %v232
    %v1603 = vunpack.c.h.b16 %v232
    %v1604 = vunpack.c.l.b16 %v233
    %v1605 = vunpack.c.h.b16 %v233
    %v1606 = vunpack.c.l.b16 %v234
    %v1607 = vunpack.c.h.b16 %v234
    %v1608 = vunpack.c.l.b16 %v235
    %v1609 = vunpack.c.h.b16 %v235
    %v1610 = vunpack.c.l.b16 %v236
    %v1611 = vunpack.c.h.b16 %v236
    %v1612 = vunpack.c.l.b16 %v237
    %v1613 = vunpack.c.h.b16 %v237
    %v1614 = vunpack.c.l.b16 %v238
    %v1615 = vunpack.c.h.b16 %v238
    %v1616 = vunpack.c.l.b16 %v239
    %v1617 = vunpack.c.h.b16 %v239
    %v1618 = vunpack.c.l.b16 %v240
    %v1619 = vunpack.c.h.b16 %v240
    %v1620 = vunpack.c.l.b16 %v241
    %v1621 = vunpack.c.h.b16 %v241
    %v1622 = vunpack.c.l.b16 %v242
    %v1623 = vunpack.c.h.b16 %v242
    %v1624 = vunpack.c.l.b16 %v243
    %v1625 = vunpack.c.h.b16 %v243
    %v1626 = vunpack.c.l.b16 %v244
    %v1627 = vunpack.c.h.b16 %v244
    %v1628 = vunpack.c.l.b16 %v245
    %v1629 = vunpack.c.h.b16 %v245
    %v1630 = vunpack.c.l.b16 %v246
    %v1631 = vunpack.c.h.b16 %v246
    %v1632 = vunpack.c.l.b16 %v247
    %v1633 = vunpack.c.h.b16 %v247
    %v1634 = vunpack.c.l.b16 %v248
    %v1635 = vunpack.c.h.b16 %v248
    %v1636 = vunpack.c.l.b16 %v249
    %v1637 = vunpack.c.h.b16 %v249
    %v1638 = vunpack.c.l.b16 %v250
    %v1639 = vunpack.c.h.b16 %v250
    %v1640 = vunpack.c.l.b16 %v251
    %v1641 = vunpack.c.h.b16 %v251
    %v1642 = vunpack.c.l.b16 %v252
    %v1643 = vunpack.c.h.b16 %v252
    %v1644 = vunpack.c.l.b16 %v253
    %v1645 = vunpack.c.h.b16 %v253
    %v1646 = vunpack.c.l.b16 %v254
    %v1647 = vunpack.c.h.b16 %v254
    %v1648 = vunpack.c.l.b16 %v255
    %v1649 = vunpack.c.h.b16 %v255
    %v1650 = vunpack.c.l.b16 %v256
    %v1651 = vunpack.c.h.b16 %v256
    %v1652 = vunpack.c.l.b16 %v257
    %v1653 = vunpack.c.h.b16 %v257
    %v1654 = vunpack.c.l.b16 %v258
    %v1655 = vunpack.c.h.b16 %v258
    %v1656 = vunpack.c.l.b16 %v259
    %v1657 = vunpack.c.h.b16 %v259
    %v1658 = vunpack.c.l.b16 %v260
    %v1659 = vunpack.c.h.b16 %v260
    %v1660 = vunpack.c.l.b16 %v261
    %v1661 = vunpack.c.h.b16 %v261
    %v1662 = vunpack.c.l.b16 %v262
    %v1663 = vunpack.c.h.b16 %v262
    %v1664 = vunpack.c.l.b16 %v263
    %v1665 = vunpack.c.h.b16 %v263
    %v1666 = vunpack.c.l.b16 %v264
    %v1667 = vunpack.c.h.b16 %v264
    %v1668 = vunpack.c.l.b16 %v265
    %v1669 = vunpack.c.h.b16 %v265
    %v1670 = vunpack.c.l.b16 %v266
    %v1671 = vunpack.c.h.b16 %v266
    %v1672 = vunpack.c.l.b16 %v267
    %v1673 = vunpack.c.h.b16 %v267
    %v1674 = vunpack.c.l.b16 %v268
    %v1675 = vunpack.c.h.b16 %v268
    %v1676 = vunpack.c.l.b16 %v269
    %v1677 = vunpack.c.h.b16 %v269
    %v1678 = vunpack.c.l.b16 %v270
    %v1679 = vunpack.c.h.b16 %v270
    %v1680 = vunpack.c.l.b16 %v271
    %v1681 = vunpack.c.h.b16 %v271
    %v1682 = vunpack.c.l.b16 %v272
    %v1683 = vunpack.c.h.b16 %v272
    %v1684 = vunpack.c.l.b16 %v273
    %v1685 = vunpack.c.h.b16 %v273
    %v1686 = vunpack.c.l.b16 %v274
    %v1687 = vunpack.c.h.b16 %v274
    %v1688 = vunpack.c.l.b16 %v275
    %v1689 = vunpack.c.h.b16 %v275
    %v1690 = vunpack.c.l.b16 %v276
    %v1691 = vunpack.c.h.b16 %v276
    %v1692 = vunpack.c.l.b16 %v277
    %v1693 = vunpack.c.h.b16 %v277
    %v1694 = vunpack.c.l.b16 %v278
    %v1695 = vunpack.c.h.b16 %v278
    %v1696 = vunpack.c.l.b16 %v279
    %v1697 = vunpack.c.h.b16 %v279
    %v1698 = vunpack.c.l.b16 %v280
    %v1699 = vunpack.c.h.b16 %v280
    %v1700 = vunpack.c.l.b16 %v281
    %v1701 = vunpack.c.h.b16 %v281
    %v1702 = vunpack.c.l.b16 %v282
    %v1703 = vunpack.c.h.b16 %v282
    %v1704 = vunpack.c.l.b16 %v283
    %v1705 = vunpack.c.h.b16 %v283
    %v1706 = vunpack.c.l.b16 %v284
    %v1707 = vunpack.c.h.b16 %v284
    %v1708 = vunpack.c.l.b16 %v285
    %v1709 = vunpack.c.h.b16 %v285
    %v1710 = vunpack.c.l.b16 %v286
    %v1711 = vunpack.c.h.b16 %v286
    %v1712 = vunpack.c.l.b16 %v287
    %v1713 = vunpack.c.h.b16 %v287
    %v1714 = vunpack.c.l.b16 %v288
    %v1715 = vunpack.c.h.b16 %v288
    %v1716 = vunpack.c.l.b16 %v289
    %v1717 = vunpack.c.h.b16 %v289
    %v1718 = vunpack.c.l.b16 %v290
    %v1719 = vunpack.c.h.b16 %v290
    %v1720 = vunpack.c.l.b16 %v291
    %v1721 = vunpack.c.h.b16 %v291
    %v1722 = vunpack.c.l.b16 %v292
    %v1723 = vunpack.c.h.b16 %v292
    %v1724 = vunpack.c.l.b16 %v293
    %v1725 = vunpack.c.h.b16 %v293
    %v1726 = vunpack.c.l.b16 %v294
    %v1727 = vunpack.c.h.b16 %v294
    %v1728 = vunpack.c.l.b16 %v295
    %v1729 = vunpack.c.h.b16 %v295
    %v1730 = vunpack.c.l.b16 %v296
    %v1731 = vunpack.c.h.b16 %v296
    %v1732 = vunpack.c.l.b16 %v297
    %v1733 = vunpack.c.h.b16 %v297
    %v1734 = vunpack.c.l.b16 %v298
    %v1735 = vunpack.c.h.b16 %v298
    %v1736 = vunpack.c.l.b16 %v299
    %v1737 = vunpack.c.h.b16 %v299
    %v1738 = vunpack.c.l.b16 %v300
    %v1739 = vunpack.c.h.b16 %v300
    %v1740 = vunpack.c.l.b16 %v301
    %v1741 = vunpack.c.h.b16 %v301
    %v1742 = vunpack.c.l.b16 %v302
    %v1743 = vunpack.c.h.b16 %v302
    %v1744 = vunpack.c.l.b16 %v303
    %v1745 = vunpack.c.h.b16 %v303
    %v1746 = vunpack.c.l.b16 %v304
    %v1747 = vunpack.c.h.b16 %v304
    %v1748 = vunpack.c.l.b16 %v305
    %v1749 = vunpack.c.h.b16 %v305
    %v1750 = vunpack.c.l.b16 %v306
    %v1751 = vunpack.c.h.b16 %v306
    %v1752 = vunpack.c.l.b16 %v307
    %v1753 = vunpack.c.h.b16 %v307
    %v1754 = vunpack.c.l.b16 %v308
    %v1755 = vunpack.c.h.b16 %v308
    %v1756 = vunpack.c.l.b16 %v309
    %v1757 = vunpack.c.h.b16 %v309
    %v1758 = vunpack.c.l.b16 %v310
    %v1759 = vunpack.c.h.b16 %v310
    %v1760 = vunpack.c.l.b16 %v311
    %v1761 = vunpack.c.h.b16 %v311
    %v1762 = vunpack.c.l.b16 %v312
    %v1763 = vunpack.c.h.b16 %v312
    %v1764 = vunpack.c.l.b16 %v313
    %v1765 = vunpack.c.h.b16 %v313
    %v1766 = vunpack.c.l.b16 %v314
    %v1767 = vunpack.c.h.b16 %v314
    %v1768 = vunpack.c.l.b16 %v315
    %v1769 = vunpack.c.h.b16 %v315
    %v1770 = vunpack.c.l.b16 %v316
    %v1771 = vunpack.c.h.b16 %v316
    %v1772 = vunpack.c.l.b16 %v317
    %v1773 = vunpack.c.h.b16 %v317
    %v1774 = vunpack.c.l.b16 %v318
    %v1775 = vunpack.c.h.b16 %v318
    %v1776 = vunpack.c.l.b16 %v319
    %v1777 = vunpack.c.h.b16 %v319
    %v1778 = vunpack.c.l.b16 %v320
    %v1779 = vunpack.c.h.b16 %v320
    %v1780 = vunpack.c.l.b16 %v321
    %v1781 = vunpack.c.h.b16 %v321
    %v1782 = vunpack.c.l.b16 %v322
    %v1783 = vunpack.c.h.b16 %v322
    %v1784 = vunpack.c.l.b16 %v323
    %v1785 = vunpack.c.h.b16 %v323
    %v1786 = vunpack.c.l.b16 %v324
    %v1787 = vunpack.c.h.b16 %v324
    %v1788 = vunpack.c.l.b16 %v325
    %v1789 = vunpack.c.h.b16 %v325
    %v1790 = vunpack.c.l.b16 %v326
    %v1791 = vunpack.c.h.b16 %v326
    %v1792 = vunpack.c.l.b16 %v327
    %v1793 = vunpack.c.h.b16 %v327
    %v1794 = vunpack.c.l.b16 %v328
    %v1795 = vunpack.c.h.b16 %v328
    %v1796 = vunpack.c.l.b16 %v329
    %v1797 = vunpack.c.h.b16 %v329
    %v1798 = vunpack.c.l.b16 %v330
    %v1799 = vunpack.c.h.b16 %v330
    %v1800 = vunpack.c.l.b16 %v331
    %v1801 = vunpack.c.h.b16 %v331
    %v1802 = vunpack.c.l.b16 %v332
    %v1803 = vunpack.c.h.b16 %v332
    %v1804 = vunpack.c.l.b16 %v333
    %v1805 = vunpack.c.h.b16 %v333
    %v1806 = vunpack.c.l.b16 %v334
    %v1807 = vunpack.c.h.b16 %v334
    %v1808 = vunpack.c.l.b16 %v335
    %v1809 = vunpack.c.h.b16 %v335
    %v1810 = vunpack.c.l.b16 %v336
    %v1811 = vunpack.c.h.b16 %v336
    %v1812 = vunpack.c.l.b16 %v337
    %v1813 = vunpack.c.h.b16 %v337
    %v1814 = vunpack.c.l.b16 %v338
    %v1815 = vunpack.c.h.b16 %v338
    %v1816 = vunpack.c.l.b16 %v339
    %v1817 = vunpack.c.h.b16 %v339
    %v1818 = vunpack.c.l.b16 %v340
    %v1819 = vunpack.c.h.b16 %v340
    %v1820 = vunpack.c.l.b16 %v341
    %v1821 = vunpack.c.h.b16 %v341
    %v1822 = vunpack.c.l.b16 %v342
    %v1823 = vunpack.c.h.b16 %v342
    %v1824 = vunpack.c.l.b16 %v343
    %v1825 = vunpack.c.h.b16 %v343
    %v1826 = vunpack.c.l.b16 %v344
    %v1827 = vunpack.c.h.b16 %v344
    %v1828 = vunpack.c.l.b16 %v345
    %v1829 = vunpack.c.h.b16 %v345
    %v1830 = vunpack.c.l.b16 %v346
    %v1831 = vunpack.c.h.b16 %v346
    %v1832 = vunpack.c.l.b16 %v347
    %v1833 = vunpack.c.h.b16 %v347
    %v1834 = vunpack.c.l.b16 %v348
    %v1835 = vunpack.c.h.b16 %v348
    %v1836 = vunpack.c.l.b16 %v349
    %v1837 = vunpack.c.h.b16 %v349
    %v1838 = vunpack.c.l.b16 %v350
    %v1839 = vunpack.c.h.b16 %v350
    %v1840 = vunpack.c.l.b16 %v351
    %v1841 = vunpack.c.h.b16 %v351
    %v1842 = vunpack.c.l.b16 %v352
    %v1843 = vunpack.c.h.b16 %v352
    %v1844 = vunpack.c.l.b16 %v353
    %v1845 = vunpack.c.h.b16 %v353
    %v1846 = vunpack.c.l.b16 %v354
    %v1847 = vunpack.c.h.b16 %v354
    %v1848 = vunpack.c.l.b16 %v355
    %v1849 = vunpack.c.h.b16 %v355
    %v1850 = vunpack.c.l.b16 %v356
    %v1851 = vunpack.c.h.b16 %v356
    %v1852 = vunpack.c.l.b16 %v357
    %v1853 = vunpack.c.h.b16 %v357
    %v1854 = vunpack.c.l.b16 %v358
    %v1855 = vunpack.c.h.b16 %v358
    %v1856 = vunpack.c.l.b16 %v359
    %v1857 = vunpack.c.h.b16 %v359
    %v1858 = vunpack.c.l.b16 %v360
    %v1859 = vunpack.c.h.b16 %v360
    %v1860 = vunpack.c.l.b16 %v361
    %v1861 = vunpack.c.h.b16 %v361
    %v1862 = vunpack.c.l.b16 %v362
    %v1863 = vunpack.c.h.b16 %v362
    %v1864 = vunpack.c.l.b16 %v363
    %v1865 = vunpack.c.h.b16 %v363
    %v1866 = vunpack.c.l.b16 %v364
    %v1867 = vunpack.c.h.b16 %v364
    %v1868 = vunpack.c.l.b16 %v365
    %v1869 = vunpack.c.h.b16 %v365
    %v1870 = vunpack.c.l.b16 %v366
    %v1871 = vunpack.c.h.b16 %v366
    %v1872 = vunpack.c.l.b16 %v367
    %v1873 = vunpack.c.h.b16 %v367
    %v1874 = vunpack.c.l.b16 %v368
    %v1875 = vunpack.c.h.b16 %v368
    %v1876 = vunpack.c.l.b16 %v369
    %v1877 = vunpack.c.h.b16 %v369
    %v1878 = vunpack.c.l.b16 %v370
    %v1879 = vunpack.c.h.b16 %v370
    %v1880 = vunpack.c.l.b16 %v371
    %v1881 = vunpack.c.h.b16 %v371
    %v1882 = vunpack.c.l.b16 %v372
    %v1883 = vunpack.c.h.b16 %v372
    %v1884 = vunpack.c.l.b16 %v373
    %v1885 = vunpack.c.h.b16 %v373
    %v1886 = vunpack.c.l.b16 %v374
    %v1887 = vunpack.c.h.b16 %v374
    %v1888 = vunpack.c.l.b16 %v375
    %v1889 = vunpack.c.h.b16 %v375
    %v1890 = vunpack.c.l.b16 %v376
    %v1891 = vunpack.c.h.b16 %v376
    %v1892 = vunpack.c.l.b16 %v377
    %v1893 = vunpack.c.h.b16 %v377
    %v1894 = vunpack.c.l.b16 %v378
    %v1895 = vunpack.c.h.b16 %v378
    %v1896 = vunpack.c.l.b16 %v379
    %v1897 = vunpack.c.h.b16 %v379
    %v1898 = vunpack.c.l.b16 %v380
    %v1899 = vunpack.c.h.b16 %v380
    %v1900 = vunpack.c.l.b16 %v381
    %v1901 = vunpack.c.h.b16 %v381
    %v1902 = vunpack.c.l.b16 %v382
    %v1903 = vunpack.c.h.b16 %v382
    %v1904 = vunpack.c.l.b16 %v383
    %v1905 = vunpack.c.h.b16 %v383
    %v1906 = vunpack.c.l.b16 %v384
    %v1907 = vunpack.c.h.b16 %v384
    %v1908 = vunpack.c.l.b16 %v385
    %v1909 = vunpack.c.h.b16 %v385
    %v1910 = vunpack.c.l.b16 %v386
    %v1911 = vunpack.c.h.b16 %v386
    %v1912 = vunpack.c.l.b16 %v387
    %v1913 = vunpack.c.h.b16 %v387
    %v1914 = vunpack.c.l.b16 %v388
    %v1915 = vunpack.c.h.b16 %v388
    %v1916 = vunpack.c.l.b16 %v389
    %v1917 = vunpack.c.h.b16 %v389
    %v1918 = vunpack.c.l.b16 %v390
    %v1919 = vunpack.c.h.b16 %v390
    %v1920 = vunpack.c.l.b16 %v391
    %v1921 = vunpack.c.h.b16 %v391
    %v1922 = vunpack.c.l.b16 %v392
    %v1923 = vunpack.c.h.b16 %v392
    %v1924 = vunpack.c.l.b16 %v393
    %v1925 = vunpack.c.h.b16 %v393
    %v1926 = vunpack.c.l.b16 %v394
    %v1927 = vunpack.c.h.b16 %v394
    %v1928 = vunpack.c.l.b16 %v395
    %v1929 = vunpack.c.h.b16 %v395
    %v1930 = vunpack.c.l.b16 %v396
    %v1931 = vunpack.c.h.b16 %v396
    %v1932 = vunpack.c.l.b16 %v397
    %v1933 = vunpack.c.h.b16 %v397
    %v1934 = vunpack.c.l.b16 %v398
    %v1935 = vunpack.c.h.b16 %v398
    %v1936 = vunpack.c.l.b16 %v399
    %v1937 = vunpack.c.h.b16 %v399
    %v1938 = vunpack.c.l.b16 %v400
    %v1939 = vunpack.c.h.b16 %v400
    %v1940 = vunpack.c.l.b16 %v401
    %v1941 = vunpack.c.h.b16 %v401
    %v1942 = vunpack.c.l.b16 %v402
    %v1943 = vunpack.c.h.b16 %v402
    %v1944 = vunpack.c.l.b16 %v403
    %v1945 = vunpack.c.h.b16 %v403
    %v1946 = vunpack.c.l.b16 %v404
    %v1947 = vunpack.c.h.b16 %v404
    %v1948 = vunpack.c.l.b16 %v405
    %v1949 = vunpack.c.h.b16 %v405
    %v1950 = vunpack.c.l.b16 %v406
    %v1951 = vunpack.c.h.b16 %v406
    %v1952 = vunpack.c.l.b16 %v407
    %v1953 = vunpack.c.h.b16 %v407
    %v1954 = vunpack.c.l.b16 %v408
    %v1955 = vunpack.c.h.b16 %v408
    %v1956 = vunpack.c.l.b16 %v409
    %v1957 = vunpack.c.h.b16 %v409
    %v1958 = vunpack.c.l.b16 %v410
    %v1959 = vunpack.c.h.b16 %v410
    %v1960 = vunpack.c.l.b16 %v411
    %v1961 = vunpack.c.h.b16 %v411
    %v1962 = vunpack.c.l.b16 %v412
    %v1963 = vunpack.c.h.b16 %v412
    %v1964 = vunpack.c.l.b16 %v413
    %v1965 = vunpack.c.h.b16 %v413
    %v1966 = vunpack.c.l.b16 %v414
    %v1967 = vunpack.c.h.b16 %v414
    %v1968 = vunpack.c.l.b16 %v415
    %v1969 = vunpack.c.h.b16 %v415
    %v1970 = vunpack.c.l.b16 %v416
    %v1971 = vunpack.c.h.b16 %v416
    %v1972 = vunpack.c.l.b16 %v417
    %v1973 = vunpack.c.h.b16 %v417
    %v1974 = vunpack.c.l.b16 %v418
    %v1975 = vunpack.c.h.b16 %v418
    %v1976 = vunpack.c.l.b16 %v419
    %v1977 = vunpack.c.h.b16 %v419
    %v1978 = vunpack.c.l.b16 %v420
    %v1979 = vunpack.c.h.b16 %v420
    %v1980 = vunpack.c.l.b16 %v421
    %v1981 = vunpack.c.h.b16 %v421
    %v1982 = vunpack.c.l.b16 %v422
    %v1983 = vunpack.c.h.b16 %v422
    %v1984 = vunpack.c.l.b16 %v423
    %v1985 = vunpack.c.h.b16 %v423
    %v1986 = vunpack.c.l.b16 %v424
    %v1987 = vunpack.c.h.b16 %v424
    %v1988 = vunpack.c.l.b16 %v425
    %v1989 = vunpack.c.h.b16 %v425
    %v1990 = vunpack.c.l.b16 %v426
    %v1991 = vunpack.c.h.b16 %v426
    %v1992 = vunpack.c.l.b16 %v427
    %v1993 = vunpack.c.h.b16 %v427
    %v1994 = vunpack.c.l.b16 %v428
    %v1995 = vunpack.c.h.b16 %v428
    %v1996 = vunpack.c.l.b16 %v429
    %v1997 = vunpack.c.h.b16 %v429
    %v1998 = vunpack.c.l.b16 %v430
    %v1999 = vunpack.c.h.b16 %v430
    %v2000 = vunpack.c.l.b16 %v431
    %v2001 = vunpack.c.h.b16 %v431
    %v2002 = vunpack.c.l.b16 %v432
    %v2003 = vunpack.c.h.b16 %v432
    %v2004 = vunpack.c.l.b16 %v433
    %v2005 = vunpack.c.h.b16 %v433
    %v2006 = vunpack.c.l.b16 %v434
    %v2007 = vunpack.c.h.b16 %v434
    %v2008 = vunpack.c.l.b16 %v435
    %v2009 = vunpack.c.h.b16 %v435
    %v2010 = vunpack.c.l.b16 %v436
    %v2011 = vunpack.c.h.b16 %v436
    %v2012 = vunpack.c.l.b16 %v437
    %v2013 = vunpack.c.h.b16 %v437
    %v2014 = vunpack.c.l.b16 %v438
    %v2015 = vunpack.c.h.b16 %v438
    %v2016 = vunpack.c.l.b16 %v439
    %v2017 = vunpack.c.h.b16 %v439
    %v2018 = vunpack.c.l.b16 %v440
    %v2019 = vunpack.c.h.b16 %v440
    %v2020 = vunpack.c.l.b16 %v441
    %v2021 = vunpack.c.h.b16 %v441
    %v2022 = vunpack.c.l.b16 %v442
    %v2023 = vunpack.c.h.b16 %v442
    %v2024 = vunpack.c.l.b16 %v443
    %v2025 = vunpack.c.h.b16 %v443
    %v2026 = vunpack.c.l.b16 %v444
    %v2027 = vunpack.c.h.b16 %v444
    %v2028 = vunpack.c.l.b16 %v445
    %v2029 = vunpack.c.h.b16 %v445
    %v2030 = vunpack.c.l.b16 %v446
    %v2031 = vunpack.c.h.b16 %v446
    %v2032 = vunpack.c.l.b16 %v447
    %v2033 = vunpack.c.h.b16 %v447
    %v2034 = vunpack.c.l.b16 %v448
    %v2035 = vunpack.c.h.b16 %v448
    %v2036 = vunpack.c.l.b16 %v449
    %v2037 = vunpack.c.h.b16 %v449
    %v2038 = vunpack.c.l.b16 %v450
    %v2039 = vunpack.c.h.b16 %v450
    %v2040 = vunpack.c.l.b16 %v451
    %v2041 = vunpack.c.h.b16 %v451
    %v2042 = vunpack.c.l.b16 %v452
    %v2043 = vunpack.c.h.b16 %v452
    %v2044 = vunpack.c.l.b16 %v453
    %v2045 = vunpack.c.h.b16 %v453
    %v2046 = vunpack.c.l.b16 %v454
    %v2047 = vunpack.c.h.b16 %v454
    %v2048 = vunpack.c.l.b16 %v455
    %v2049 = vunpack.c.h.b16 %v455
    %v2050 = vunpack.c.l.b16 %v456
    %v2051 = vunpack.c.h.b16 %v456
    %v2052 = vunpack.c.l.b16 %v457
    %v2053 = vunpack.c.h.b16 %v457
    %v2054 = vunpack.c.l.b16 %v458
    %v2055 = vunpack.c.h.b16 %v458
    %v2056 = vunpack.c.l.b16 %v459
    %v2057 = vunpack.c.h.b16 %v459
    %v2058 = vunpack.c.l.b16 %v460
    %v2059 = vunpack.c.h.b16 %v460
    %v2060 = vunpack.c.l.b16 %v461
    %v2061 = vunpack.c.h.b16 %v461
    %v2062 = vunpack.c.l.b16 %v462
    %v2063 = vunpack.c.h.b16 %v462
    %v2064 = vunpack.c.l.b16 %v463
    %v2065 = vunpack.c.h.b16 %v463
    %v2066 = vunpack.c.l.b16 %v464
    %v2067 = vunpack.c.h.b16 %v464
    %v2068 = vunpack.c.l.b16 %v465
    %v2069 = vunpack.c.h.b16 %v465
    %v2070 = vunpack.c.l.b16 %v466
    %v2071 = vunpack.c.h.b16 %v466
    %v2072 = vunpack.c.l.b16 %v467
    %v2073 = vunpack.c.h.b16 %v467
    %v2074 = vunpack.c.l.b16 %v468
    %v2075 = vunpack.c.h.b16 %v468
    %v2076 = vunpack.c.l.b16 %v469
    %v2077 = vunpack.c.h.b16 %v469
    %v2078 = vunpack.c.l.b16 %v470
    %v2079 = vunpack.c.h.b16 %v470
    %v2080 = vunpack.c.l.b16 %v471
    %v2081 = vunpack.c.h.b16 %v471
    %v2082 = vunpack.c.l.b16 %v472
    %v2083 = vunpack.c.h.b16 %v472
    %v2084 = vunpack.c.l.b16 %v473
    %v2085 = vunpack.c.h.b16 %v473
    %v2086 = vunpack.c.l.b16 %v474
    %v2087 = vunpack.c.h.b16 %v474
    %v2088 = vunpack.c.l.b16 %v475
    %v2089 = vunpack.c.h.b16 %v475
    %v2090 = vunpack.c.l.b16 %v476
    %v2091 = vunpack.c.h.b16 %v476
    %v2092 = vunpack.c.l.b16 %v477
    %v2093 = vunpack.c.h.b16 %v477
    %v2094 = vunpack.c.l.b16 %v478
    %v2095 = vunpack.c.h.b16 %v478
    %v2096 = vunpack.c.l.b16 %v479
    %v2097 = vunpack.c.h.b16 %v479
    %v2098 = vunpack.c.l.b16 %v480
    %v2099 = vunpack.c.h.b16 %v480
    %v2100 = vunpack.c.l.b16 %v481
    %v2101 = vunpack.c.h.b16 %v481
    %v2102 = vunpack.c.l.b16 %v482
    %v2103 = vunpack.c.h.b16 %v482
    %v2104 = vunpack.c.l.b16 %v483
    %v2105 = vunpack.c.h.b16 %v483
    %v2106 = vunpack.c.l.b16 %v484
    %v2107 = vunpack.c.h.b16 %v484
    %v2108 = vunpack.c.l.b16 %v485
    %v2109 = vunpack.c.h.b16 %v485
    %v2110 = vunpack.c.l.b16 %v486
    %v2111 = vunpack.c.h.b16 %v486
    %v2112 = vunpack.c.l.b16 %v487
    %v2113 = vunpack.c.h.b16 %v487
    %v2114 = vunpack.c.l.b16 %v488
    %v2115 = vunpack.c.h.b16 %v488
    %v2116 = vunpack.c.l.b16 %v489
    %v2117 = vunpack.c.h.b16 %v489
    %v2118 = vunpack.c.l.b16 %v490
    %v2119 = vunpack.c.h.b16 %v490
    %v2120 = vunpack.c.l.b16 %v491
    %v2121 = vunpack.c.h.b16 %v491
    %v2122 = vunpack.c.l.b16 %v492
    %v2123 = vunpack.c.h.b16 %v492
    %v2124 = vunpack.c.l.b16 %v493
    %v2125 = vunpack.c.h.b16 %v493
    %v2126 = vunpack.c.l.b16 %v494
    %v2127 = vunpack.c.h.b16 %v494
    %v2128 = vunpack.c.l.b16 %v495
    %v2129 = vunpack.c.h.b16 %v495
    %v2130 = vunpack.c.l.b16 %v496
    %v2131 = vunpack.c.h.b16 %v496
    %v2132 = vunpack.c.l.b16 %v497
    %v2133 = vunpack.c.h.b16 %v497
    %v2134 = vunpack.c.l.b16 %v498
    %v2135 = vunpack.c.h.b16 %v498
    %v2136 = vunpack.c.l.b16 %v499
    %v2137 = vunpack.c.h.b16 %v499
    %v2138 = vunpack.c.l.b16 %v500
    %v2139 = vunpack.c.h.b16 %v500
    %v2140 = vunpack.c.l.b16 %v501
    %v2141 = vunpack.c.h.b16 %v501
    %v2142 = vunpack.c.l.b16 %v502
    %v2143 = vunpack.c.h.b16 %v502
    %v2144 = vunpack.c.l.b16 %v503
    %v2145 = vunpack.c.h.b16 %v503
    %v2146 = vunpack.c.l.b16 %v504
    %v2147 = vunpack.c.h.b16 %v504
    %v2148 = vunpack.c.l.b16 %v505
    %v2149 = vunpack.c.h.b16 %v505
    %v2150 = vunpack.c.l.b16 %v506
    %v2151 = vunpack.c.h.b16 %v506
    %v2152 = vunpack.c.l.b16 %v507
    %v2153 = vunpack.c.h.b16 %v507
    %v2154 = vunpack.c.l.b16 %v508
    %v2155 = vunpack.c.h.b16 %v508
    %v2156 = vunpack.c.l.b16 %v509
    %v2157 = vunpack.c.h.b16 %v509
    %v2158 = vunpack.c.l.b16 %v510
    %v2159 = vunpack.c.h.b16 %v510
    %v2160 = vunpack.c.l.b16 %v511
    %v2161 = vunpack.c.h.b16 %v511
    %v2162 = vunpack.c.l.b16 %v512
    %v2163 = vunpack.c.h.b16 %v512
    %v2164 = vunpack.c.l.b16 %v513
    %v2165 = vunpack.c.h.b16 %v513
    %v2166 = vunpack.c.l.b16 %v514
    %v2167 = vunpack.c.h.b16 %v514
    %v2168 = vunpack.c.l.b16 %v515
    %v2169 = vunpack.c.h.b16 %v515
    %v2170 = vunpack.c.l.b16 %v516
    %v2171 = vunpack.c.h.b16 %v516
    %v2172 = vunpack.c.l.b16 %v517
    %v2173 = vunpack.c.h.b16 %v517
    %v2174 = vunpack.c.l.b16 %v518
    %v2175 = vunpack.c.h.b16 %v518
    %v2176 = vunpack.c.l.b16 %v519
    %v2177 = vunpack.c.h.b16 %v519
    %v2178 = vunpack.c.l.b16 %v520
    %v2179 = vunpack.c.h.b16 %v520
    %v2180 = vunpack.c.l.b16 %v521
    %v2181 = vunpack.c.h.b16 %v521
    %v2182 = vunpack.c.l.b16 %v522
    %v2183 = vunpack.c.h.b16 %v522
    %v2184 = vunpack.c.l.b16 %v523
    %v2185 = vunpack.c.h.b16 %v523
    %v2186 = vunpack.c.l.b16 %v524
    %v2187 = vunpack.c.h.b16 %v524
    %v2188 = vunpack.c.l.b16 %v525
    %v2189 = vunpack.c.h.b16 %v525
    %v2190 = vunpack.c.l.b16 %v526
    %v2191 = vunpack.c.h.b16 %v526
    %v2192 = vunpack.c.l.b16 %v527
    %v2193 = vunpack.c.h.b16 %v527
    %v2194 = vunpack.c.l.b16 %v528
    %v2195 = vunpack.c.h.b16 %v528
    %v2196 = vunpack.c.l.b16 %v529
    %v2197 = vunpack.c.h.b16 %v529
    %v2198 = vunpack.c.l.b16 %v530
    %v2199 = vunpack.c.h.b16 %v530
    %v2200 = vunpack.c.l.b16 %v531
    %v2201 = vunpack.c.h.b16 %v531
    %v2202 = vunpack.c.l.b16 %v532
    %v2203 = vunpack.c.h.b16 %v532
    %v2204 = vunpack.c.l.b16 %v533
    %v2205 = vunpack.c.h.b16 %v533
    %v2206 = vunpack.c.l.b16 %v534
    %v2207 = vunpack.c.h.b16 %v534
    %v2208 = vunpack.c.l.b16 %v535
    %v2209 = vunpack.c.h.b16 %v535
    %v2210 = vpack.c.b16 %v1190, %v1186
    %v2211 = vpack.c.b16 %v1191, %v1187
    %v2212 = vpack.c.b16 %v1192, %v1188
    %v2213 = vpack.c.b16 %v1193, %v1189
    %v2214 = vpack.c.b16 %v1198, %v1194
    %v2215 = vpack.c.b16 %v1199, %v1195
    %v2216 = vpack.c.b16 %v1200, %v1196
    %v2217 = vpack.c.b16 %v1201, %v1197
    %v2218 = vpack.c.b16 %v1206, %v1202
    %v2219 = vpack.c.b16 %v1207, %v1203
    %v2220 = vpack.c.b16 %v1208, %v1204
    %v2221 = vpack.c.b16 %v1209, %v1205
    %v2222 = vpack.c.b16 %v1214, %v1210
    %v2223 = vpack.c.b16 %v1215, %v1211
    %v2224 = vpack.c.b16 %v1216, %v1212
    %v2225 = vpack.c.b16 %v1217, %v1213
    %v2226 = vpack.c.b16 %v1222, %v1218
    %v2227 = vpack.c.b16 %v1223, %v1219
    %v2228 = vpack.c.b16 %v1224, %v1220
    %v2229 = vpack.c.b16 %v1225, %v1221
    %v2230 = vpack.c.b16 %v1230, %v1226
    %v2231 = vpack.c.b16 %v1231, %v1227
    %v2232 = vpack.c.b16 %v1232, %v1228
    %v2233 = vpack.c.b16 %v1233, %v1229
    %v2234 = vpack.c.b16 %v1238, %v1234
    %v2235 = vpack.c.b16 %v1239, %v1235
    %v2236 = vpack.c.b16 %v1240, %v1236
    %v2237 = vpack.c.b16 %v1241, %v1237
    %v2238 = vpack.c.b16 %v1246, %v1242
    %v2239 = vpack.c.b16 %v1247, %v1243
    %v2240 = vpack.c.b16 %v1248, %v1244
    %v2241 = vpack.c.b16 %v1249, %v1245
    %v2242 = vpack.c.b16 %v1254, %v1250
    %v2243 = vpack.c.b16 %v1255, %v1251
    %v2244 = vpack.c.b16 %v1256, %v1252
    %v2245 = vpack.c.b16 %v1257, %v1253
    %v2246 = vpack.c.b16 %v1262, %v1258
    %v2247 = vpack.c.b16 %v1263, %v1259
    %v2248 = vpack.c.b16 %v1264, %v1260
    %v2249 = vpack.c.b16 %v1265, %v1261
    %v2250 = vpack.c.b16 %v1270, %v1266
    %v2251 = vpack.c.b16 %v1271, %v1267
    %v2252 = vpack.c.b16 %v1272, %v1268
    %v2253 = vpack.c.b16 %v1273, %v1269
    %v2254 = vpack.c.b16 %v1278, %v1274
    %v2255 = vpack.c.b16 %v1279, %v1275
    %v2256 = vpack.c.b16 %v1280, %v1276
    %v2257 = vpack.c.b16 %v1281, %v1277
    %v2258 = vpack.c.b16 %v1286, %v1282
    %v2259 = vpack.c.b16 %v1287, %v1283
    %v2260 = vpack.c.b16 %v1288, %v1284
    %v2261 = vpack.c.b16 %v1289, %v1285
    %v2262 = vpack.c.b16 %v1294, %v1290
    %v2263 = vpack.c.b16 %v1295, %v1291
    %v2264 = vpack.c.b16 %v1296, %v1292
    %v2265 = vpack.c.b16 %v1297, %v1293
    %v2266 = vpack.c.b16 %v1302, %v1298
    %v2267 = vpack.c.b16 %v1303, %v1299
    %v2268 = vpack.c.b16 %v1304, %v1300
    %v2269 = vpack.c.b16 %v1305, %v1301
    %v2270 = vpack.c.b16 %v1310, %v1306
    %v2271 = vpack.c.b16 %v1311, %v1307
    %v2272 = vpack.c.b16 %v1312, %v1308
    %v2273 = vpack.c.b16 %v1313, %v1309
    %v2274 = vpack.c.b16 %v1318, %v1314
    %v2275 = vpack.c.b16 %v1319, %v1315
    %v2276 = vpack.c.b16 %v1320, %v1316
    %v2277 = vpack.c.b16 %v1321, %v1317
    %v2278 = vpack.c.b16 %v1326, %v1322
    %v2279 = vpack.c.b16 %v1327, %v1323
    %v2280 = vpack.c.b16 %v1328, %v1324
    %v2281 = vpack.c.b16 %v1329, %v1325
    %v2282 = vpack.c.b16 %v1334, %v1330
    %v2283 = vpack.c.b16 %v1335, %v1331
    %v2284 = vpack.c.b16 %v1336, %v1332
    %v2285 = vpack.c.b16 %v1337, %v1333
    %v2286 = vpack.c.b16 %v1342, %v1338
    %v2287 = vpack.c.b16 %v1343, %v1339
    %v2288 = vpack.c.b16 %v1344, %v1340
    %v2289 = vpack.c.b16 %v1345, %v1341
    %v2290 = vpack.c.b16 %v1350, %v1346
    %v2291 = vpack.c.b16 %v1351, %v1347
    %v2292 = vpack.c.b16 %v1352, %v1348
    %v2293 = vpack.c.b16 %v1353, %v1349
    %v2294 = vpack.c.b16 %v1358, %v1354
    %v2295 = vpack.c.b16 %v1359, %v1355
    %v2296 = vpack.c.b16 %v1360, %v1356
    %v2297 = vpack.c.b16 %v1361, %v1357
    %v2298 = vpack.c.b16 %v1366, %v1362
    %v2299 = vpack.c.b16 %v1367, %v1363
    %v2300 = vpack.c.b16 %v1368, %v1364
    %v2301 = vpack.c.b16 %v1369, %v1365
    %v2302 = vpack.c.b16 %v1374, %v1370
    %v2303 = vpack.c.b16 %v1375, %v1371
    %v2304 = vpack.c.b16 %v1376, %v1372
    %v2305 = vpack.c.b16 %v1377, %v1373
    %v2306 = vpack.c.b16 %v1382, %v1378
    %v2307 = vpack.c.b16 %v1383, %v1379
    %v2308 = vpack.c.b16 %v1384, %v1380
    %v2309 = vpack.c.b16 %v1385, %v1381
    %v2310 = vpack.c.b16 %v1390, %v1386
    %v2311 = vpack.c.b16 %v1391, %v1387
    %v2312 = vpack.c.b16 %v1392, %v1388
    %v2313 = vpack.c.b16 %v1393, %v1389
    %v2314 = vpack.c.b16 %v1398, %v1394
    %v2315 = vpack.c.b16 %v1399, %v1395
    %v2316 = vpack.c.b16 %v1400, %v1396
    %v2317 = vpack.c.b16 %v1401, %v1397
    %v2318 = vpack.c.b16 %v1406, %v1402
    %v2319 = vpack.c.b16 %v1407, %v1403
    %v2320 = vpack.c.b16 %v1408, %v1404
    %v2321 = vpack.c.b16 %v1409, %v1405
    %v2322 = vpack.c.b16 %v1414, %v1410
    %v2323 = vpack.c.b16 %v1415, %v1411
    %v2324 = vpack.c.b16 %v1416, %v1412
    %v2325 = vpack.c.b16 %v1417, %v1413
    %v2326 = vpack.c.b16 %v1422, %v1418
    %v2327 = vpack.c.b16 %v1423, %v1419
    %v2328 = vpack.c.b16 %v1424, %v1420
    %v2329 = vpack.c.b16 %v1425, %v1421
    %v2330 = vpack.c.b16 %v1430, %v1426
    %v2331 = vpack.c.b16 %v1431, %v1427
    %v2332 = vpack.c.b16 %v1432, %v1428
    %v2333 = vpack.c.b16 %v1433, %v1429
    %v2334 = vpack.c.b16 %v1438, %v1434
    %v2335 = vpack.c.b16 %v1439, %v1435
    %v2336 = vpack.c.b16 %v1440, %v1436
    %v2337 = vpack.c.b16 %v1441, %v1437
    %v2338 = vpack.c.b16 %v1446, %v1442
    %v2339 = vpack.c.b16 %v1447, %v1443
    %v2340 = vpack.c.b16 %v1448, %v1444
    %v2341 = vpack.c.b16 %v1449, %v1445
    %v2342 = vpack.c.b16 %v1454, %v1450
    %v2343 = vpack.c.b16 %v1455, %v1451
    %v2344 = vpack.c.b16 %v1456, %v1452
    %v2345 = vpack.c.b16 %v1457, %v1453
    %v2346 = vpack.c.b16 %v1462, %v1458
    %v2347 = vpack.c.b16 %v1463, %v1459
    %v2348 = vpack.c.b16 %v1464, %v1460
    %v2349 = vpack.c.b16 %v1465, %v1461
    %v2350 = vpack.c.b16 %v1470, %v1466
    %v2351 = vpack.c.b16 %v1471, %v1467
    %v2352 = vpack.c.b16 %v1472, %v1468
    %v2353 = vpack.c.b16 %v1473, %v1469
    %v2354 = vpack.c.b16 %v1478, %v1474
    %v2355 = vpack.c.b16 %v1479, %v1475
    %v2356 = vpack.c.b16 %v1480, %v1476
    %v2357 = vpack.c.b16 %v1481, %v1477
    %v2358 = vpack.c.b16 %v1486, %v1482
    %v2359 = vpack.c.b16 %v1487, %v1483
    %v2360 = vpack.c.b16 %v1488, %v1484
    %v2361 = vpack.c.b16 %v1489, %v1485
    %v2362 = vpack.c.b16 %v1494, %v1490
    %v2363 = vpack.c.b16 %v1495, %v1491
    %v2364 = vpack.c.b16 %v1496, %v1492
    %v2365 = vpack.c.b16 %v1497, %v1493
    %v2366 = vpack.c.b16 %v1502, %v1498
    %v2367 = vpack.c.b16 %v1503, %v1499
    %v2368 = vpack.c.b16 %v1504, %v1500
    %v2369 = vpack.c.b16 %v1505, %v1501
    %v2370 = vpack.c.b16 %v1510, %v1506
    %v2371 = vpack.c.b16 %v1511, %v1507
    %v2372 = vpack.c.b16 %v1512, %v1508
    %v2373 = vpack.c.b16 %v1513, %v1509
    %v2374 = vpack.c.b16 %v1518, %v1514
    %v2375 = vpack.c.b16 %v1519, %v1515
    %v2376 = vpack.c.b16 %v1520, %v1516
    %v2377 = vpack.c.b16 %v1521, %v1517
    %v2378 = vpack.c.b16 %v1526, %v1522
    %v2379 = vpack.c.b16 %v1527, %v1523
    %v2380 = vpack.c.b16 %v1528, %v1524
    %v2381 = vpack.c.b16 %v1529, %v1525
    %v2382 = vpack.c.b16 %v1534, %v1530
    %v2383 = vpack.c.b16 %v1535, %v1531
    %v2384 = vpack.c.b16 %v1536, %v1532
    %v2385 = vpack.c.b16 %v1537, %v1533
    %v2386 = vpack.c.b16 %v1542, %v1538
    %v2387 = vpack.c.b16 %v1543, %v1539
    %v2388 = vpack.c.b16 %v1544, %v1540
    %v2389 = vpack.c.b16 %v1545, %v1541
    %v2390 = vpack.c.b16 %v1550, %v1546
    %v2391 = vpack.c.b16 %v1551, %v1547
    %v2392 = vpack.c.b16 %v1552, %v1548
    %v2393 = vpack.c.b16 %v1553, %v1549
    %v2394 = vpack.c.b16 %v1558, %v1554
    %v2395 = vpack.c.b16 %v1559, %v1555
    %v2396 = vpack.c.b16 %v1560, %v1556
    %v2397 = vpack.c.b16 %v1561, %v1557
    %v2398 = vpack.c.b16 %v1566, %v1562
    %v2399 = vpack.c.b16 %v1567, %v1563
    %v2400 = vpack.c.b16 %v1568, %v1564
    %v2401 = vpack.c.b16 %v1569, %v1565
    %v2402 = vpack.c.b16 %v1574, %v1570
    %v2403 = vpack.c.b16 %v1575, %v1571
    %v2404 = vpack.c.b16 %v1576, %v1572
    %v2405 = vpack.c.b16 %v1577, %v1573
    %v2406 = vpack.c.b16 %v1582, %v1578
    %v2407 = vpack.c.b16 %v1583, %v1579
    %v2408 = vpack.c.b16 %v1584, %v1580
    %v2409 = vpack.c.b16 %v1585, %v1581
    %v2410 = vpack.c.b16 %v1590, %v1586
    %v2411 = vpack.c.b16 %v1591, %v1587
    %v2412 = vpack.c.b16 %v1592, %v1588
    %v2413 = vpack.c.b16 %v1593, %v1589
    %v2414 = vpack.c.b16 %v1598, %v1594
    %v2415 = vpack.c.b16 %v1599, %v1595
    %v2416 = vpack.c.b16 %v1600, %v1596
    %v2417 = vpack.c.b16 %v1601, %v1597
    %v2418 = vpack.c.b16 %v1606, %v1602
    %v2419 = vpack.c.b16 %v1607, %v1603
    %v2420 = vpack.c.b16 %v1608, %v1604
    %v2421 = vpack.c.b16 %v1609, %v1605
    %v2422 = vpack.c.b16 %v1614, %v1610
    %v2423 = vpack.c.b16 %v1615, %v1611
    %v2424 = vpack.c.b16 %v1616, %v1612
    %v2425 = vpack.c.b16 %v1617, %v1613
    %v2426 = vpack.c.b16 %v1622, %v1618
    %v2427 = vpack.c.b16 %v1623, %v1619
    %v2428 = vpack.c.b16 %v1624, %v1620
    %v2429 = vpack.c.b16 %v1625, %v1621
    %v2430 = vpack.c.b16 %v1630, %v1626
    %v2431 = vpack.c.b16 %v1631, %v1627
    %v2432 = vpack.c.b16 %v1632, %v1628
    %v2433 = vpack.c.b16 %v1633, %v1629
    %v2434 = vpack.c.b16 %v1638, %v1634
    %v2435 = vpack.c.b16 %v1639, %v1635
    %v2436 = vpack.c.b16 %v1640, %v1636
    %v2437 = vpack.c.b16 %v1641, %v1637
    %v2438 = vpack.c.b16 %v1646, %v1642
    %v2439 = vpack.c.b16 %v1647, %v1643
    %v2440 = vpack.c.b16 %v1648, %v1644
    %v2441 = vpack.c.b16 %v1649, %v1645
    %v2442 = vpack.c.b16 %v1654, %v1650
    %v2443 = vpack.c.b16 %v1655, %v1651
    %v2444 = vpack.c.b16 %v1656, %v1652
    %v2445 = vpack.c.b16 %v1657, %v1653
    %v2446 = vpack.c.b16 %v1662, %v1658
    %v2447 = vpack.c.b16 %v1663, %v1659
    %v2448 = vpack.c.b16 %v1664, %v1660
    %v2449 = vpack.c.b16 %v1665, %v1661
    %v2450 = vpack.c.b16 %v1670, %v1666
    %v2451 = vpack.c.b16 %v1671, %v1667
    %v2452 = vpack.c.b16 %v1672, %v1668
    %v2453 = vpack.c.b16 %v1673, %v1669
    %v2454 = vpack.c.b16 %v1678, %v1674
    %v2455 = vpack.c.b16 %v1679, %v1675
    %v2456 = vpack.c.b16 %v1680, %v1676
    %v2457 = vpack.c.b16 %v1681, %v1677
    %v2458 = vpack.c.b16 %v1686, %v1682
    %v2459 = vpack.c.b16 %v1687, %v1683
    %v2460 = vpack.c.b16 %v1688, %v1684
    %v2461 = vpack.c.b16 %v1689, %v1685
    %v2462 = vpack.c.b16 %v1694, %v1690
    %v2463 = vpack.c.b16 %v1695, %v1691
    %v2464 = vpack.c.b16 %v1696, %v1692
    %v2465 = vpack.c.b16 %v1697, %v1693
    %v2466 = vpack.c.b16 %v1702, %v1698
    %v2467 = vpack.c.b16 %v1703, %v1699
    %v2468 = vpack.c.b16 %v1704, %v1700
    %v2469 = vpack.c.b16 %v1705, %v1701
    %v2470 = vpack.c.b16 %v1710, %v1706
    %v2471 = vpack.c.b16 %v1711, %v1707
    %v2472 = vpack.c.b16 %v1712, %v1708
    %v2473 = vpack.c.b16 %v1713, %v1709
    %v2474 = vpack.c.b16 %v1718, %v1714
    %v2475 = vpack.c.b16 %v1719, %v1715
    %v2476 = vpack.c.b16 %v1720, %v1716
    %v2477 = vpack.c.b16 %v1721, %v1717
    %v2478 = vpack.c.b16 %v1726, %v1722
    %v2479 = vpack.c.b16 %v1727, %v1723
    %v2480 = vpack.c.b16 %v1728, %v1724
    %v2481 = vpack.c.b16 %v1729, %v1725
    %v2482 = vpack.c.b16 %v1734, %v1730
    %v2483 = vpack.c.b16 %v1735, %v1731
    %v2484 = vpack.c.b16 %v1736, %v1732
    %v2485 = vpack.c.b16 %v1737, %v1733
    %v2486 = vpack.c.b16 %v1742, %v1738
    %v2487 = vpack.c.b16 %v1743, %v1739
    %v2488 = vpack.c.b16 %v1744, %v1740
    %v2489 = vpack.c.b16 %v1745, %v1741
    %v2490 = vpack.c.b16 %v1750, %v1746
    %v2491 = vpack.c.b16 %v1751, %v1747
    %v2492 = vpack.c.b16 %v1752, %v1748
    %v2493 = vpack.c.b16 %v1753, %v1749
    %v2494 = vpack.c.b16 %v1758, %v1754
    %v2495 = vpack.c.b16 %v1759, %v1755
    %v2496 = vpack.c.b16 %v1760, %v1756
    %v2497 = vpack.c.b16 %v1761, %v1757
    %v2498 = vpack.c.b16 %v1766, %v1762
    %v2499 = vpack.c.b16 %v1767, %v1763
    %v2500 = vpack.c.b16 %v1768, %v1764
    %v2501 = vpack.c.b16 %v1769, %v1765
    %v2502 = vpack.c.b16 %v1774, %v1770
    %v2503 = vpack.c.b16 %v1775, %v1771
    %v2504 = vpack.c.b16 %v1776, %v1772
    %v2505 = vpack.c.b16 %v1777, %v1773
    %v2506 = vpack.c.b16 %v1782, %v1778
    %v2507 = vpack.c.b16 %v1783, %v1779
    %v2508 = vpack.c.b16 %v1784, %v1780
    %v2509 = vpack.c.b16 %v1785, %v1781
    %v2510 = vpack.c.b16 %v1790, %v1786
    %v2511 = vpack.c.b16 %v1791, %v1787
    %v2512 = vpack.c.b16 %v1792, %v1788
    %v2513 = vpack.c.b16 %v1793, %v1789
    %v2514 = vpack.c.b16 %v1798, %v1794
    %v2515 = vpack.c.b16 %v1799, %v1795
    %v2516 = vpack.c.b16 %v1800, %v1796
    %v2517 = vpack.c.b16 %v1801, %v1797
    %v2518 = vpack.c.b16 %v1806, %v1802
    %v2519 = vpack.c.b16 %v1807, %v1803
    %v2520 = vpack.c.b16 %v1808, %v1804
    %v2521 = vpack.c.b16 %v1809, %v1805
    %v2522 = vpack.c.b16 %v1814, %v1810
    %v2523 = vpack.c.b16 %v1815, %v1811
    %v2524 = vpack.c.b16 %v1816, %v1812
    %v2525 = vpack.c.b16 %v1817, %v1813
    %v2526 = vpack.c.b16 %v1822, %v1818
    %v2527 = vpack.c.b16 %v1823, %v1819
    %v2528 = vpack.c.b16 %v1824, %v1820
    %v2529 = vpack.c.b16 %v1825, %v1821
    %v2530 = vpack.c.b16 %v1830, %v1826
    %v2531 = vpack.c.b16 %v1831, %v1827
    %v2532 = vpack.c.b16 %v1832, %v1828
    %v2533 = vpack.c.b16 %v1833, %v1829
    %v2534 = vpack.c.b16 %v1838, %v1834
    %v2535 = vpack.c.b16 %v1839, %v1835
    %v2536 = vpack.c.b16 %v1840, %v1836
    %v2537 = vpack.c.b16 %v1841, %v1837
    %v2538 = vpack.c.b16 %v1846, %v1842
    %v2539 = vpack.c.b16 %v1847, %v1843
    %v2540 = vpack.c.b16 %v1848, %v1844
    %v2541 = vpack.c.b16 %v1849, %v1845
    %v2542 = vpack.c.b16 %v1854, %v1850
    %v2543 = vpack.c.b16 %v1855, %v1851
    %v2544 = vpack.c.b16 %v1856, %v1852
    %v2545 = vpack.c.b16 %v1857, %v1853
    %v2546 = vpack.c.b16 %v1862, %v1858
    %v2547 = vpack.c.b16 %v1863, %v1859
    %v2548 = vpack.c.b16 %v1864, %v1860
    %v2549 = vpack.c.b16 %v1865, %v1861
    %v2550 = vpack.c.b16 %v1870, %v1866
    %v2551 = vpack.c.b16 %v1871, %v1867
    %v2552 = vpack.c.b16 %v1872, %v1868
    %v2553 = vpack.c.b16 %v1873, %v1869
    %v2554 = vpack.c.b16 %v1878, %v1874
    %v2555 = vpack.c.b16 %v1879, %v1875
    %v2556 = vpack.c.b16 %v1880, %v1876
    %v2557 = vpack.c.b16 %v1881, %v1877
    %v2558 = vpack.c.b16 %v1886, %v1882
    %v2559 = vpack.c.b16 %v1887, %v1883
    %v2560 = vpack.c.b16 %v1888, %v1884
    %v2561 = vpack.c.b16 %v1889, %v1885
    %v2562 = vpack.c.b16 %v1894, %v1890
    %v2563 = vpack.c.b16 %v1895, %v1891
    %v2564 = vpack.c.b16 %v1896, %v1892
    %v2565 = vpack.c.b16 %v1897, %v1893
    %v2566 = vpack.c.b16 %v1902, %v1898
    %v2567 = vpack.c.b16 %v1903, %v1899
    %v2568 = vpack.c.b16 %v1904, %v1900
    %v2569 = vpack.c.b16 %v1905, %v1901
    %v2570 = vpack.c.b16 %v1910, %v1906
    %v2571 = vpack.c.b16 %v1911, %v1907
    %v2572 = vpack.c.b16 %v1912, %v1908
    %v2573 = vpack.c.b16 %v1913, %v1909
    %v2574 = vpack.c.b16 %v1918, %v1914
    %v2575 = vpack.c.b16 %v1919, %v1915
    %v2576 = vpack.c.b16 %v1920, %v1916
    %v2577 = vpack.c.b16 %v1921, %v1917
    %v2578 = vpack.c.b16 %v1926, %v1922
    %v2579 = vpack.c.b16 %v1927, %v1923
    %v2580 = vpack.c.b16 %v1928, %v1924
    %v2581 = vpack.c.b16 %v1929, %v1925
    %v2582 = vpack.c.b16 %v1934, %v1930
    %v2583 = vpack.c.b16 %v1935, %v1931
    %v2584 = vpack.c.b16 %v1936, %v1932
    %v2585 = vpack.c.b16 %v1937, %v1933
    %v2586 = vpack.c.b16 %v1942, %v1938
    %v2587 = vpack.c.b16 %v1943, %v1939
    %v2588 = vpack.c.b16 %v1944, %v1940
    %v2589 = vpack.c.b16 %v1945, %v1941
    %v2590 = vpack.c.b16 %v1950, %v1946
    %v2591 = vpack.c.b16 %v1951, %v1947
    %v2592 = vpack.c.b16 %v1952, %v1948
    %v2593 = vpack.c.b16 %v1953, %v1949
    %v2594 = vpack.c.b16 %v1958, %v1954
    %v2595 = vpack.c.b16 %v1959, %v1955
    %v2596 = vpack.c.b16 %v1960, %v1956
    %v2597 = vpack.c.b16 %v1961, %v1957
    %v2598 = vpack.c.b16 %v1966, %v1962
    %v2599 = vpack.c.b16 %v1967, %v1963
    %v2600 = vpack.c.b16 %v1968, %v1964
    %v2601 = vpack.c.b16 %v1969, %v1965
    %v2602 = vpack.c.b16 %v1974, %v1970
    %v2603 = vpack.c.b16 %v1975, %v1971
    %v2604 = vpack.c.b16 %v1976, %v1972
    %v2605 = vpack.c.b16 %v1977, %v1973
    %v2606 = vpack.c.b16 %v1982, %v1978
    %v2607 = vpack.c.b16 %v1983, %v1979
    %v2608 = vpack.c.b16 %v1984, %v1980
    %v2609 = vpack.c.b16 %v1985, %v1981
    %v2610 = vpack.c.b16 %v1990, %v1986
    %v2611 = vpack.c.b16 %v1991, %v1987
    %v2612 = vpack.c.b16 %v1992, %v1988
    %v2613 = vpack.c.b16 %v1993, %v1989
    %v2614 = vpack.c.b16 %v1998, %v1994
    %v2615 = vpack.c.b16 %v1999, %v1995
    %v2616 = vpack.c.b16 %v2000, %v1996
    %v2617 = vpack.c.b16 %v2001, %v1997
    %v2618 = vpack.c.b16 %v2006, %v2002
    %v2619 = vpack.c.b16 %v2007, %v2003
    %v2620 = vpack.c.b16 %v2008, %v2004
    %v2621 = vpack.c.b16 %v2009, %v2005
    %v2622 = vpack.c.b16 %v2014, %v2010
    %v2623 = vpack.c.b16 %v2015, %v2011
    %v2624 = vpack.c.b16 %v2016, %v2012
    %v2625 = vpack.c.b16 %v2017, %v2013
    %v2626 = vpack.c.b16 %v2022, %v2018
    %v2627 = vpack.c.b16 %v2023, %v2019
    %v2628 = vpack.c.b16 %v2024, %v2020
    %v2629 = vpack.c.b16 %v2025, %v2021
    %v2630 = vpack.c.b16 %v2030, %v2026
    %v2631 = vpack.c.b16 %v2031, %v2027
    %v2632 = vpack.c.b16 %v2032, %v2028
    %v2633 = vpack.c.b16 %v2033, %v2029
    %v2634 = vpack.c.b16 %v2038, %v2034
    %v2635 = vpack.c.b16 %v2039, %v2035
    %v2636 = vpack.c.b16 %v2040, %v2036
    %v2637 = vpack.c.b16 %v2041, %v2037
    %v2638 = vpack.c.b16 %v2046, %v2042
    %v2639 = vpack.c.b16 %v2047, %v2043
    %v2640 = vpack.c.b16 %v2048, %v2044
    %v2641 = vpack.c.b16 %v2049, %v2045
    %v2642 = vpack.c.b16 %v2054, %v2050
    %v2643 = vpack.c.b16 %v2055, %v2051
    %v2644 = vpack.c.b16 %v2056, %v2052
    %v2645 = vpack.c.b16 %v2057, %v2053
    %v2646 = vpack.c.b16 %v2062, %v2058
    %v2647 = vpack.c.b16 %v2063, %v2059
    %v2648 = vpack.c.b16 %v2064, %v2060
    %v2649 = vpack.c.b16 %v2065, %v2061
    %v2650 = vpack.c.b16 %v2070, %v2066
    %v2651 = vpack.c.b16 %v2071, %v2067
    %v2652 = vpack.c.b16 %v2072, %v2068
    %v2653 = vpack.c.b16 %v2073, %v2069
    %v2654 = vpack.c.b16 %v2078, %v2074
    %v2655 = vpack.c.b16 %v2079, %v2075
    %v2656 = vpack.c.b16 %v2080, %v2076
    %v2657 = vpack.c.b16 %v2081, %v2077
    %v2658 = vpack.c.b16 %v2086, %v2082
    %v2659 = vpack.c.b16 %v2087, %v2083
    %v2660 = vpack.c.b16 %v2088, %v2084
    %v2661 = vpack.c.b16 %v2089, %v2085
    %v2662 = vpack.c.b16 %v2094, %v2090
    %v2663 = vpack.c.b16 %v2095, %v2091
    %v2664 = vpack.c.b16 %v2096, %v2092
    %v2665 = vpack.c.b16 %v2097, %v2093
    %v2666 = vpack.c.b16 %v2102, %v2098
    %v2667 = vpack.c.b16 %v2103, %v2099
    %v2668 = vpack.c.b16 %v2104, %v2100
    %v2669 = vpack.c.b16 %v2105, %v2101
    %v2670 = vpack.c.b16 %v2110, %v2106
    %v2671 = vpack.c.b16 %v2111, %v2107
    %v2672 = vpack.c.b16 %v2112, %v2108
    %v2673 = vpack.c.b16 %v2113, %v2109
    %v2674 = vpack.c.b16 %v2118, %v2114
    %v2675 = vpack.c.b16 %v2119, %v2115
    %v2676 = vpack.c.b16 %v2120, %v2116
    %v2677 = vpack.c.b16 %v2121, %v2117
    %v2678 = vpack.c.b16 %v2126, %v2122
    %v2679 = vpack.c.b16 %v2127, %v2123
    %v2680 = vpack.c.b16 %v2128, %v2124
    %v2681 = vpack.c.b16 %v2129, %v2125
    %v2682 = vpack.c.b16 %v2134, %v2130
    %v2683 = vpack.c.b16 %v2135, %v2131
    %v2684 = vpack.c.b16 %v2136, %v2132
    %v2685 = vpack.c.b16 %v2137, %v2133
    %v2686 = vpack.c.b16 %v2142, %v2138
    %v2687 = vpack.c.b16 %v2143, %v2139
    %v2688 = vpack.c.b16 %v2144, %v2140
    %v2689 = vpack.c.b16 %v2145, %v2141
    %v2690 = vpack.c.b16 %v2150, %v2146
    %v2691 = vpack.c.b16 %v2151, %v2147
    %v2692 = vpack.c.b16 %v2152, %v2148
    %v2693 = vpack.c.b16 %v2153, %v2149
    %v2694 = vpack.c.b16 %v2158, %v2154
    %v2695 = vpack.c.b16 %v2159, %v2155
    %v2696 = vpack.c.b16 %v2160, %v2156
    %v2697 = vpack.c.b16 %v2161, %v2157
    %v2698 = vpack.c.b16 %v2166, %v2162
    %v2699 = vpack.c.b16 %v2167, %v2163
    %v2700 = vpack.c.b16 %v2168, %v2164
    %v2701 = vpack.c.b16 %v2169, %v2165
    %v2702 = vpack.c.b16 %v2174, %v2170
    %v2703 = vpack.c.b16 %v2175, %v2171
    %v2704 = vpack.c.b16 %v2176, %v2172
    %v2705 = vpack.c.b16 %v2177, %v2173
    %v2706 = vpack.c.b16 %v2182, %v2178
    %v2707 = vpack.c.b16 %v2183, %v2179
    %v2708 = vpack.c.b16 %v2184, %v2180
    %v2709 = vpack.c.b16 %v2185, %v2181
    %v2710 = vpack.c.b16 %v2190, %v2186
    %v2711 = vpack.c.b16 %v2191, %v2187
    %v2712 = vpack.c.b16 %v2192, %v2188
    %v2713 = vpack.c.b16 %v2193, %v2189
    %v2714 = vpack.c.b16 %v2198, %v2194
    %v2715 = vpack.c.b16 %v2199, %v2195
    %v2716 = vpack.c.b16 %v2200, %v2196
    %v2717 = vpack.c.b16 %v2201, %v2197
    %v2718 = vpack.c.b16 %v2206, %v2202
    %v2719 = vpack.c.b16 %v2207, %v2203
    %v2720 = vpack.c.b16 %v2208, %v2204
    %v2721 = vpack.c.b16 %v2209, %v2205
    %3234 = vmatprep.subr.bf16.mxu0 %v2211
    %3235 = vmatpush1.bf16.msra.mxu0 %v2210
    %3236 = vmatprep.subr.bf16.mxu0 %v2215
    %3237 = vmatpush1.bf16.msra.mxu0 %v2214
    %3238 = vmatprep.subr.bf16.mxu0 %v2219
    %3239 = vmatpush1.bf16.msra.mxu0 %v2218
    %3240 = vmatprep.subr.bf16.mxu0 %v2223
    %3241 = vmatpush1.bf16.msra.mxu0 %v2222
    %3242 = vmatprep.subr.bf16.mxu0 %v2227
    %3243 = vmatpush1.bf16.msra.mxu0 %v2226
    %3244 = vmatprep.subr.bf16.mxu0 %v2231
    %3245 = vmatpush1.bf16.msra.mxu0 %v2230
    %3246 = vmatprep.subr.bf16.mxu0 %v2235
    %3247 = vmatpush1.bf16.msra.mxu0 %v2234
    %3248 = vmatprep.subr.bf16.mxu0 %v2239
    %3249 = vmatpush1.bf16.msra.mxu0 %v2238
    %3250 = vmatprep.subr.bf16.mxu0 %v2243
    %3251 = vmatpush1.bf16.msra.mxu0 %v2242
    %3252 = vmatprep.subr.bf16.mxu0 %v2247
    %3253 = vmatpush1.bf16.msra.mxu0 %v2246
    %3254 = vmatprep.subr.bf16.mxu0 %v2251
    %3255 = vmatpush1.bf16.msra.mxu0 %v2250
    %3256 = vmatprep.subr.bf16.mxu0 %v2255
    %3257 = vmatpush1.bf16.msra.mxu0 %v2254
    %3258 = vmatprep.subr.bf16.mxu0 %v2259
    %3259 = vmatpush1.bf16.msra.mxu0 %v2258
    %3260 = vmatprep.subr.bf16.mxu0 %v2263
    %3261 = vmatpush1.bf16.msra.mxu0 %v2262
    %3262 = vmatprep.subr.bf16.mxu0 %v2267
    %3263 = vmatpush1.bf16.msra.mxu0 %v2266
    %3264 = vmatprep.subr.bf16.mxu0 %v2271
    %3265 = vmatpush1.bf16.msra.mxu0 %v2270
    %3266 = vmatprep.mubr.bf16.mxu0 %v597
    %3267 = vmatmul.mubr.bf16.gmra.mrb[0].mxu0 %v583
    %v3268 = vpop.f32.mrb[0].mxu0
    %v3269 = vadd.f32 %v541, %v3268
    %v3270 = vpop.f32.mrb[0].mxu0
    %v3271 = vadd.f32 %v545, %v3270
    %v3272 = vpop.f32.mrb[0].mxu0
    %v3273 = vpop.f32.mrb[0].mxu0
    %3274 = vdwg.mxu0
    %3275 = vmatprep.subr.bf16.mxu0 %v2275
    %3276 = vmatpush1.bf16.msra.mxu0 %v2274
    %3277 = vmatprep.subr.bf16.mxu0 %v2279
    %3278 = vmatpush1.bf16.msra.mxu0 %v2278
    %3279 = vmatprep.subr.bf16.mxu0 %v2283
    %3280 = vmatpush1.bf16.msra.mxu0 %v2282
    %3281 = vmatprep.subr.bf16.mxu0 %v2287
    %3282 = vmatpush1.bf16.msra.mxu0 %v2286
    %3283 = vmatprep.subr.bf16.mxu0 %v2291
    %3284 = vmatpush1.bf16.msra.mxu0 %v2290
    %3285 = vmatprep.subr.bf16.mxu0 %v2295
    %3286 = vmatpush1.bf16.msra.mxu0 %v2294
    %3287 = vmatprep.subr.bf16.mxu0 %v2299
    %3288 = vmatpush1.bf16.msra.mxu0 %v2298
    %3289 = vmatprep.subr.bf16.mxu0 %v2303
    %3290 = vmatpush1.bf16.msra.mxu0 %v2302
    %3291 = vmatprep.subr.bf16.mxu0 %v2307
    %3292 = vmatpush1.bf16.msra.mxu0 %v2306
    %3293 = vmatprep.subr.bf16.mxu0 %v2311
    %3294 = vmatpush1.bf16.msra.mxu0 %v2310
    %3295 = vmatprep.subr.bf16.mxu0 %v2315
    %3296 = vmatpush1.bf16.msra.mxu0 %v2314
    %3297 = vmatprep.subr.bf16.mxu0 %v2319
    %3298 = vmatpush1.bf16.msra.mxu0 %v2318
    %3299 = vmatprep.subr.bf16.mxu0 %v2323
    %3300 = vmatpush1.bf16.msra.mxu0 %v2322
    %3301 = vmatprep.subr.bf16.mxu0 %v2327
    %3302 = vmatpush1.bf16.msra.mxu0 %v2326
    %3303 = vmatprep.subr.bf16.mxu0 %v2331
    %3304 = vmatpush1.bf16.msra.mxu0 %v2330
    %3305 = vmatprep.subr.bf16.mxu0 %v2335
    %3306 = vmatpush1.bf16.msra.mxu0 %v2334
    %3307 = vmatprep.mubr.bf16.mxu0 %v607
    %3308 = vmatmul.mubr.bf16.gmra.mrb[0].mxu0 %v605
    %v3309 = vpop.f32.mrb[0].mxu0
    %v3310 = vadd.f32 %v3269, %v3309
    %v3311 = vpop.f32.mrb[0].mxu0
    %v3312 = vadd.f32 %v3271, %v3311
    %v3313 = vpop.f32.mrb[0].mxu0
    %v3314 = vpop.f32.mrb[0].mxu0
    %3315 = vdwg.mxu0
    %3316 = vmatprep.subr.bf16.mxu0 %v2339
    %3317 = vmatpush1.bf16.msra.mxu0 %v2338
    %3318 = vmatprep.subr.bf16.mxu0 %v2343
    %3319 = vmatpush1.bf16.msra.mxu0 %v2342
    %3320 = vmatprep.subr.bf16.mxu0 %v2347
    %3321 = vmatpush1.bf16.msra.mxu0 %v2346
    %3322 = vmatprep.subr.bf16.mxu0 %v2351
    %3323 = vmatpush1.bf16.msra.mxu0 %v2350
    %3324 = vmatprep.subr.bf16.mxu0 %v2355
    %3325 = vmatpush1.bf16.msra.mxu0 %v2354
    %3326 = vmatprep.subr.bf16.mxu0 %v2359
    %3327 = vmatpush1.bf16.msra.mxu0 %v2358
    %3328 = vmatprep.subr.bf16.mxu0 %v2363
    %3329 = vmatpush1.bf16.msra.mxu0 %v2362
    %3330 = vmatprep.subr.bf16.mxu0 %v2367
    %3331 = vmatpush1.bf16.msra.mxu0 %v2366
    %3332 = vmatprep.subr.bf16.mxu0 %v2371
    %3333 = vmatpush1.bf16.msra.mxu0 %v2370
    %3334 = vmatprep.subr.bf16.mxu0 %v2375
    %3335 = vmatpush1.bf16.msra.mxu0 %v2374
    %3336 = vmatprep.subr.bf16.mxu0 %v2379
    %3337 = vmatpush1.bf16.msra.mxu0 %v2378
    %3338 = vmatprep.subr.bf16.mxu0 %v2383
    %3339 = vmatpush1.bf16.msra.mxu0 %v2382
    %3340 = vmatprep.subr.bf16.mxu0 %v2387
    %3341 = vmatpush1.bf16.msra.mxu0 %v2386
    %3342 = vmatprep.subr.bf16.mxu0 %v2391
    %3343 = vmatpush1.bf16.msra.mxu0 %v2390
    %3344 = vmatprep.subr.bf16.mxu0 %v2395
    %3345 = vmatpush1.bf16.msra.mxu0 %v2394
    %3346 = vmatprep.subr.bf16.mxu0 %v2399
    %3347 = vmatpush1.bf16.msra.mxu0 %v2398
    %3348 = vmatprep.mubr.bf16.mxu0 %v604
    %3349 = vmatmul.mubr.bf16.gmra.mrb[0].mxu0 %v590
    %v3350 = vpop.f32.mrb[0].mxu0
    %v3351 = vadd.f32 %v3310, %v3350
    %v3352 = vpop.f32.mrb[0].mxu0
    %v3353 = vadd.f32 %v3312, %v3352
    %v3354 = vpop.f32.mrb[0].mxu0
    %v3355 = vpop.f32.mrb[0].mxu0
    %3356 = vdwg.mxu0
    %3357 = vmatprep.subr.bf16.mxu0 %v2403
    %3358 = vmatpush1.bf16.msra.mxu0 %v2402
    %3359 = vmatprep.subr.bf16.mxu0 %v2407
    %3360 = vmatpush1.bf16.msra.mxu0 %v2406
    %3361 = vmatprep.subr.bf16.mxu0 %v2411
    %3362 = vmatpush1.bf16.msra.mxu0 %v2410
    %3363 = vmatprep.subr.bf16.mxu0 %v2415
    %3364 = vmatpush1.bf16.msra.mxu0 %v2414
    %3365 = vmatprep.subr.bf16.mxu0 %v2419
    %3366 = vmatpush1.bf16.msra.mxu0 %v2418
    %3367 = vmatprep.subr.bf16.mxu0 %v2423
    %3368 = vmatpush1.bf16.msra.mxu0 %v2422
    %3369 = vmatprep.subr.bf16.mxu0 %v2427
    %3370 = vmatpush1.bf16.msra.mxu0 %v2426
    %3371 = vmatprep.subr.bf16.mxu0 %v2431
    %3372 = vmatpush1.bf16.msra.mxu0 %v2430
    %3373 = vmatprep.subr.bf16.mxu0 %v2435
    %3374 = vmatpush1.bf16.msra.mxu0 %v2434
    %3375 = vmatprep.subr.bf16.mxu0 %v2439
    %3376 = vmatpush1.bf16.msra.mxu0 %v2438
    %3377 = vmatprep.subr.bf16.mxu0 %v2443
    %3378 = vmatpush1.bf16.msra.mxu0 %v2442
    %3379 = vmatprep.subr.bf16.mxu0 %v2447
    %3380 = vmatpush1.bf16.msra.mxu0 %v2446
    %3381 = vmatprep.subr.bf16.mxu0 %v2451
    %3382 = vmatpush1.bf16.msra.mxu0 %v2450
    %3383 = vmatprep.subr.bf16.mxu0 %v2455
    %3384 = vmatpush1.bf16.msra.mxu0 %v2454
    %3385 = vmatprep.subr.bf16.mxu0 %v2459
    %3386 = vmatpush1.bf16.msra.mxu0 %v2458
    %3387 = vmatprep.subr.bf16.mxu0 %v2463
    %3388 = vmatpush1.bf16.msra.mxu0 %v2462
    %3389 = vmatprep.mubr.bf16.mxu0 %v608
    %3390 = vmatmul.mubr.bf16.gmra.mrb[0].mxu0 %v606
    %v3391 = vpop.f32.mrb[0].mxu0
    %v3392 = vadd.f32 %v3351, %v3391
    %v3393 = vpop.f32.mrb[0].mxu0
    %v3394 = vadd.f32 %v3353, %v3393
    %v3395 = vpop.f32.mrb[0].mxu0
    %v3396 = vpop.f32.mrb[0].mxu0
    %3397 = vdwg.mxu0
    %3398 = vmatprep.subr.bf16.mxu0 %v2467
    %3399 = vmatpush1.bf16.msra.mxu0 %v2466
    %3400 = vmatprep.subr.bf16.mxu0 %v2471
    %3401 = vmatpush1.bf16.msra.mxu0 %v2470
    %3402 = vmatprep.subr.bf16.mxu0 %v2475
    %3403 = vmatpush1.bf16.msra.mxu0 %v2474
    %3404 = vmatprep.subr.bf16.mxu0 %v2479
    %3405 = vmatpush1.bf16.msra.mxu0 %v2478
    %3406 = vmatprep.subr.bf16.mxu0 %v2483
    %3407 = vmatpush1.bf16.msra.mxu0 %v2482
    %3408 = vmatprep.subr.bf16.mxu0 %v2487
    %3409 = vmatpush1.bf16.msra.mxu0 %v2486
    %3410 = vmatprep.subr.bf16.mxu0 %v2491
    %3411 = vmatpush1.bf16.msra.mxu0 %v2490
    %3412 = vmatprep.subr.bf16.mxu0 %v2495
    %3413 = vmatpush1.bf16.msra.mxu0 %v2494
    %3414 = vmatprep.subr.bf16.mxu0 %v2499
    %3415 = vmatpush1.bf16.msra.mxu0 %v2498
    %3416 = vmatprep.subr.bf16.mxu0 %v2503
    %3417 = vmatpush1.bf16.msra.mxu0 %v2502
    %3418 = vmatprep.subr.bf16.mxu0 %v2507
    %3419 = vmatpush1.bf16.msra.mxu0 %v2506
    %3420 = vmatprep.subr.bf16.mxu0 %v2511
    %3421 = vmatpush1.bf16.msra.mxu0 %v2510
    %3422 = vmatprep.subr.bf16.mxu0 %v2515
    %3423 = vmatpush1.bf16.msra.mxu0 %v2514
    %3424 = vmatprep.subr.bf16.mxu0 %v2519
    %3425 = vmatpush1.bf16.msra.mxu0 %v2518
    %3426 = vmatprep.subr.bf16.mxu0 %v2523
    %3427 = vmatpush1.bf16.msra.mxu0 %v2522
    %3428 = vmatprep.subr.bf16.mxu0 %v2527
    %3429 = vmatpush1.bf16.msra.mxu0 %v2526
    %3430 = vmatprep.mubr.bf16.mxu0 %v646
    %3431 = vmatmul.mubr.bf16.gmra.mrb[0].mxu0 %v632
    %v3432 = vpop.f32.mrb[0].mxu0
    %v3433 = vadd.f32 %v3392, %v3432
    %v3434 = vpop.f32.mrb[0].mxu0
    %v3435 = vadd.f32 %v3394, %v3434
    %v3436 = vpop.f32.mrb[0].mxu0
    %v3437 = vpop.f32.mrb[0].mxu0
    %3438 = vdwg.mxu0
    %3439 = vmatprep.subr.bf16.mxu0 %v2531
    %3440 = vmatpush1.bf16.msra.mxu0 %v2530
    %3441 = vmatprep.subr.bf16.mxu0 %v2535
    %3442 = vmatpush1.bf16.msra.mxu0 %v2534
    %3443 = vmatprep.subr.bf16.mxu0 %v2539
    %3444 = vmatpush1.bf16.msra.mxu0 %v2538
    %3445 = vmatprep.subr.bf16.mxu0 %v2543
    %3446 = vmatpush1.bf16.msra.mxu0 %v2542
    %3447 = vmatprep.subr.bf16.mxu0 %v2547
    %3448 = vmatpush1.bf16.msra.mxu0 %v2546
    %3449 = vmatprep.subr.bf16.mxu0 %v2551
    %3450 = vmatpush1.bf16.msra.mxu0 %v2550
    %3451 = vmatprep.subr.bf16.mxu0 %v2555
    %3452 = vmatpush1.bf16.msra.mxu0 %v2554
    %3453 = vmatprep.subr.bf16.mxu0 %v2559
    %3454 = vmatpush1.bf16.msra.mxu0 %v2558
    %3455 = vmatprep.subr.bf16.mxu0 %v2563
    %3456 = vmatpush1.bf16.msra.mxu0 %v2562
    %3457 = vmatprep.subr.bf16.mxu0 %v2567
    %3458 = vmatpush1.bf16.msra.mxu0 %v2566
    %3459 = vmatprep.subr.bf16.mxu0 %v2571
    %3460 = vmatpush1.bf16.msra.mxu0 %v2570
    %3461 = vmatprep.subr.bf16.mxu0 %v2575
    %3462 = vmatpush1.bf16.msra.mxu0 %v2574
    %3463 = vmatprep.subr.bf16.mxu0 %v2579
    %3464 = vmatpush1.bf16.msra.mxu0 %v2578
    %3465 = vmatprep.subr.bf16.mxu0 %v2583
    %3466 = vmatpush1.bf16.msra.mxu0 %v2582
    %3467 = vmatprep.subr.bf16.mxu0 %v2587
    %3468 = vmatpush1.bf16.msra.mxu0 %v2586
    %3469 = vmatprep.subr.bf16.mxu0 %v2591
    %3470 = vmatpush1.bf16.msra.mxu0 %v2590
    %3471 = vmatprep.mubr.bf16.mxu0 %v656
    %3472 = vmatmul.mubr.bf16.gmra.mrb[0].mxu0 %v654
    %v3473 = vpop.f32.mrb[0].mxu0
    %v3474 = vadd.f32 %v3433, %v3473
    %v3475 = vpop.f32.mrb[0].mxu0
    %v3476 = vadd.f32 %v3435, %v3475
    %v3477 = vpop.f32.mrb[0].mxu0
    %v3478 = vpop.f32.mrb[0].mxu0
    %3479 = vdwg.mxu0
    %3480 = vmatprep.subr.bf16.mxu0 %v2595
    %3481 = vmatpush1.bf16.msra.mxu0 %v2594
    %3482 = vmatprep.subr.bf16.mxu0 %v2599
    %3483 = vmatpush1.bf16.msra.mxu0 %v2598
    %3484 = vmatprep.subr.bf16.mxu0 %v2603
    %3485 = vmatpush1.bf16.msra.mxu0 %v2602
    %3486 = vmatprep.subr.bf16.mxu0 %v2607
    %3487 = vmatpush1.bf16.msra.mxu0 %v2606
    %3488 = vmatprep.subr.bf16.mxu0 %v2611
    %3489 = vmatpush1.bf16.msra.mxu0 %v2610
    %3490 = vmatprep.subr.bf16.mxu0 %v2615
    %3491 = vmatpush1.bf16.msra.mxu0 %v2614
    %3492 = vmatprep.subr.bf16.mxu0 %v2619
    %3493 = vmatpush1.bf16.msra.mxu0 %v2618
    %3494 = vmatprep.subr.bf16.mxu0 %v2623
    %3495 = vmatpush1.bf16.msra.mxu0 %v2622
    %3496 = vmatprep.subr.bf16.mxu0 %v2627
    %3497 = vmatpush1.bf16.msra.mxu0 %v2626
    %3498 = vmatprep.subr.bf16.mxu0 %v2631
    %3499 = vmatpush1.bf16.msra.mxu0 %v2630
    %3500 = vmatprep.subr.bf16.mxu0 %v2635
    %3501 = vmatpush1.bf16.msra.mxu0 %v2634
    %3502 = vmatprep.subr.bf16.mxu0 %v2639
    %3503 = vmatpush1.bf16.msra.mxu0 %v2638
    %3504 = vmatprep.subr.bf16.mxu0 %v2643
    %3505 = vmatpush1.bf16.msra.mxu0 %v2642
    %3506 = vmatprep.subr.bf16.mxu0 %v2647
    %3507 = vmatpush1.bf16.msra.mxu0 %v2646
    %3508 = vmatprep.subr.bf16.mxu0 %v2651
    %3509 = vmatpush1.bf16.msra.mxu0 %v2650
    %3510 = vmatprep.subr.bf16.mxu0 %v2655
    %3511 = vmatpush1.bf16.msra.mxu0 %v2654
    %3512 = vmatprep.mubr.bf16.mxu0 %v653
    %3513 = vmatmul.mubr.bf16.gmra.mrb[0].mxu0 %v639
    %v3514 = vpop.f32.mrb[0].mxu0
    %v3515 = vadd.f32 %v3474, %v3514
    %v3516 = vpop.f32.mrb[0].mxu0
    %v3517 = vadd.f32 %v3476, %v3516
    %v3518 = vpop.f32.mrb[0].mxu0
    %v3519 = vpop.f32.mrb[0].mxu0
    %3520 = vdwg.mxu0
    %3521 = vmatprep.subr.bf16.mxu0 %v2659
    %3522 = vmatpush1.bf16.msra.mxu0 %v2658
    %3523 = vmatprep.subr.bf16.mxu0 %v2663
    %3524 = vmatpush1.bf16.msra.mxu0 %v2662
    %3525 = vmatprep.subr.bf16.mxu0 %v2667
    %3526 = vmatpush1.bf16.msra.mxu0 %v2666
    %3527 = vmatprep.subr.bf16.mxu0 %v2671
    %3528 = vmatpush1.bf16.msra.mxu0 %v2670
    %3529 = vmatprep.subr.bf16.mxu0 %v2675
    %3530 = vmatpush1.bf16.msra.mxu0 %v2674
    %3531 = vmatprep.subr.bf16.mxu0 %v2679
    %3532 = vmatpush1.bf16.msra.mxu0 %v2678
    %3533 = vmatprep.subr.bf16.mxu0 %v2683
    %3534 = vmatpush1.bf16.msra.mxu0 %v2682
    %3535 = vmatprep.subr.bf16.mxu0 %v2687
    %3536 = vmatpush1.bf16.msra.mxu0 %v2686
    %3537 = vmatprep.subr.bf16.mxu0 %v2691
    %3538 = vmatpush1.bf16.msra.mxu0 %v2690
    %3539 = vmatprep.subr.bf16.mxu0 %v2695
    %3540 = vmatpush1.bf16.msra.mxu0 %v2694
    %3541 = vmatprep.subr.bf16.mxu0 %v2699
    %3542 = vmatpush1.bf16.msra.mxu0 %v2698
    %3543 = vmatprep.subr.bf16.mxu0 %v2703
    %3544 = vmatpush1.bf16.msra.mxu0 %v2702
    %3545 = vmatprep.subr.bf16.mxu0 %v2707
    %3546 = vmatpush1.bf16.msra.mxu0 %v2706
    %3547 = vmatprep.subr.bf16.mxu0 %v2711
    %3548 = vmatpush1.bf16.msra.mxu0 %v2710
    %3549 = vmatprep.subr.bf16.mxu0 %v2715
    %3550 = vmatpush1.bf16.msra.mxu0 %v2714
    %3551 = vmatprep.subr.bf16.mxu0 %v2719
    %3552 = vmatpush1.bf16.msra.mxu0 %v2718
    %3553 = vmatprep.mubr.bf16.mxu0 %v657
    %3554 = vmatmul.mubr.bf16.gmra.mrb[0].mxu0 %v655
    %v3555 = vpop.f32.mrb[0].mxu0
    %v3556 = vadd.f32 %v3515, %v3555
    %v3557 = vpop.f32.mrb[0].mxu0
    %v3558 = vadd.f32 %v3517, %v3557
    %v3559 = vpop.f32.mrb[0].mxu0
    %v3560 = vpop.f32.mrb[0].mxu0
    %3561 = vdwg.mxu0
    %3562 = vmatprep.subr.bf16.mxu0 %v2213
    %3563 = vmatpush1.bf16.msra.mxu0 %v2212
    %3564 = vmatprep.subr.bf16.mxu0 %v2217
    %3565 = vmatpush1.bf16.msra.mxu0 %v2216
    %3566 = vmatprep.subr.bf16.mxu0 %v2221
    %3567 = vmatpush1.bf16.msra.mxu0 %v2220
    %3568 = vmatprep.subr.bf16.mxu0 %v2225
    %3569 = vmatpush1.bf16.msra.mxu0 %v2224
    %3570 = vmatprep.subr.bf16.mxu0 %v2229
    %3571 = vmatpush1.bf16.msra.mxu0 %v2228
    %3572 = vmatprep.subr.bf16.mxu0 %v2233
    %3573 = vmatpush1.bf16.msra.mxu0 %v2232
    %3574 = vmatprep.subr.bf16.mxu0 %v2237
    %3575 = vmatpush1.bf16.msra.mxu0 %v2236
    %3576 = vmatprep.subr.bf16.mxu0 %v2241
    %3577 = vmatpush1.bf16.msra.mxu0 %v2240
    %3578 = vmatprep.subr.bf16.mxu0 %v2245
    %3579 = vmatpush1.bf16.msra.mxu0 %v2244
    %3580 = vmatprep.subr.bf16.mxu0 %v2249
    %3581 = vmatpush1.bf16.msra.mxu0 %v2248
    %3582 = vmatprep.subr.bf16.mxu0 %v2253
    %3583 = vmatpush1.bf16.msra.mxu0 %v2252
    %3584 = vmatprep.subr.bf16.mxu0 %v2257
    %3585 = vmatpush1.bf16.msra.mxu0 %v2256
    %3586 = vmatprep.subr.bf16.mxu0 %v2261
    %3587 = vmatpush1.bf16.msra.mxu0 %v2260
    %3588 = vmatprep.subr.bf16.mxu0 %v2265
    %3589 = vmatpush1.bf16.msra.mxu0 %v2264
    %3590 = vmatprep.subr.bf16.mxu0 %v2269
    %3591 = vmatpush1.bf16.msra.mxu0 %v2268
    %3592 = vmatprep.subr.bf16.mxu0 %v2273
    %3593 = vmatpush1.bf16.msra.mxu0 %v2272
    %3594 = vmatprep.mubr.bf16.mxu0 %v597
    %3595 = vmatmul.mubr.bf16.gmra.mrb[0].mxu0 %v583
    %v3596 = vpop.f32.mrb[0].mxu0
    %v3597 = vadd.f32 %v549, %v3596
    %v3598 = vpop.f32.mrb[0].mxu0
    %v3599 = vadd.f32 %v553, %v3598
    %v3600 = vpop.f32.mrb[0].mxu0
    %v3601 = vpop.f32.mrb[0].mxu0
    %3602 = vdwg.mxu0
    %3603 = vmatprep.subr.bf16.mxu0 %v2277
    %3604 = vmatpush1.bf16.msra.mxu0 %v2276
    %3605 = vmatprep.subr.bf16.mxu0 %v2281
    %3606 = vmatpush1.bf16.msra.mxu0 %v2280
    %3607 = vmatprep.subr.bf16.mxu0 %v2285
    %3608 = vmatpush1.bf16.msra.mxu0 %v2284
    %3609 = vmatprep.subr.bf16.mxu0 %v2289
    %3610 = vmatpush1.bf16.msra.mxu0 %v2288
    %3611 = vmatprep.subr.bf16.mxu0 %v2293
    %3612 = vmatpush1.bf16.msra.mxu0 %v2292
    %3613 = vmatprep.subr.bf16.mxu0 %v2297
    %3614 = vmatpush1.bf16.msra.mxu0 %v2296
    %3615 = vmatprep.subr.bf16.mxu0 %v2301
    %3616 = vmatpush1.bf16.msra.mxu0 %v2300
    %3617 = vmatprep.subr.bf16.mxu0 %v2305
    %3618 = vmatpush1.bf16.msra.mxu0 %v2304
    %3619 = vmatprep.subr.bf16.mxu0 %v2309
    %3620 = vmatpush1.bf16.msra.mxu0 %v2308
    %3621 = vmatprep.subr.bf16.mxu0 %v2313
    %3622 = vmatpush1.bf16.msra.mxu0 %v2312
    %3623 = vmatprep.subr.bf16.mxu0 %v2317
    %3624 = vmatpush1.bf16.msra.mxu0 %v2316
    %3625 = vmatprep.subr.bf16.mxu0 %v2321
    %3626 = vmatpush1.bf16.msra.mxu0 %v2320
    %3627 = vmatprep.subr.bf16.mxu0 %v2325
    %3628 = vmatpush1.bf16.msra.mxu0 %v2324
    %3629 = vmatprep.subr.bf16.mxu0 %v2329
    %3630 = vmatpush1.bf16.msra.mxu0 %v2328
    %3631 = vmatprep.subr.bf16.mxu0 %v2333
    %3632 = vmatpush1.bf16.msra.mxu0 %v2332
    %3633 = vmatprep.subr.bf16.mxu0 %v2337
    %3634 = vmatpush1.bf16.msra.mxu0 %v2336
    %3635 = vmatprep.mubr.bf16.mxu0 %v607
    %3636 = vmatmul.mubr.bf16.gmra.mrb[0].mxu0 %v605
    %v3637 = vpop.f32.mrb[0].mxu0
    %v3638 = vadd.f32 %v3597, %v3637
    %v3639 = vpop.f32.mrb[0].mxu0
    %v3640 = vadd.f32 %v3599, %v3639
    %v3641 = vpop.f32.mrb[0].mxu0
    %v3642 = vpop.f32.mrb[0].mxu0
    %3643 = vdwg.mxu0
    %3644 = vmatprep.subr.bf16.mxu0 %v2341
    %3645 = vmatpush1.bf16.msra.mxu0 %v2340
    %3646 = vmatprep.subr.bf16.mxu0 %v2345
    %3647 = vmatpush1.bf16.msra.mxu0 %v2344
    %3648 = vmatprep.subr.bf16.mxu0 %v2349
    %3649 = vmatpush1.bf16.msra.mxu0 %v2348
    %3650 = vmatprep.subr.bf16.mxu0 %v2353
    %3651 = vmatpush1.bf16.msra.mxu0 %v2352
    %3652 = vmatprep.subr.bf16.mxu0 %v2357
    %3653 = vmatpush1.bf16.msra.mxu0 %v2356
    %3654 = vmatprep.subr.bf16.mxu0 %v2361
    %3655 = vmatpush1.bf16.msra.mxu0 %v2360
    %3656 = vmatprep.subr.bf16.mxu0 %v2365
    %3657 = vmatpush1.bf16.msra.mxu0 %v2364
    %3658 = vmatprep.subr.bf16.mxu0 %v2369
    %3659 = vmatpush1.bf16.msra.mxu0 %v2368
    %3660 = vmatprep.subr.bf16.mxu0 %v2373
    %3661 = vmatpush1.bf16.msra.mxu0 %v2372
    %3662 = vmatprep.subr.bf16.mxu0 %v2377
    %3663 = vmatpush1.bf16.msra.mxu0 %v2376
    %3664 = vmatprep.subr.bf16.mxu0 %v2381
    %3665 = vmatpush1.bf16.msra.mxu0 %v2380
    %3666 = vmatprep.subr.bf16.mxu0 %v2385
    %3667 = vmatpush1.bf16.msra.mxu0 %v2384
    %3668 = vmatprep.subr.bf16.mxu0 %v2389
    %3669 = vmatpush1.bf16.msra.mxu0 %v2388
    %3670 = vmatprep.subr.bf16.mxu0 %v2393
    %3671 = vmatpush1.bf16.msra.mxu0 %v2392
    %3672 = vmatprep.subr.bf16.mxu0 %v2397
    %3673 = vmatpush1.bf16.msra.mxu0 %v2396
    %3674 = vmatprep.subr.bf16.mxu0 %v2401
    %3675 = vmatpush1.bf16.msra.mxu0 %v2400
    %3676 = vmatprep.mubr.bf16.mxu0 %v604
    %3677 = vmatmul.mubr.bf16.gmra.mrb[0].mxu0 %v590
    %v3678 = vpop.f32.mrb[0].mxu0
    %v3679 = vadd.f32 %v3638, %v3678
    %v3680 = vpop.f32.mrb[0].mxu0
    %v3681 = vadd.f32 %v3640, %v3680
    %v3682 = vpop.f32.mrb[0].mxu0
    %v3683 = vpop.f32.mrb[0].mxu0
    %3684 = vdwg.mxu0
    %3685 = vmatprep.subr.bf16.mxu0 %v2405
    %3686 = vmatpush1.bf16.msra.mxu0 %v2404
    %3687 = vmatprep.subr.bf16.mxu0 %v2409
    %3688 = vmatpush1.bf16.msra.mxu0 %v2408
    %3689 = vmatprep.subr.bf16.mxu0 %v2413
    %3690 = vmatpush1.bf16.msra.mxu0 %v2412
    %3691 = vmatprep.subr.bf16.mxu0 %v2417
    %3692 = vmatpush1.bf16.msra.mxu0 %v2416
    %3693 = vmatprep.subr.bf16.mxu0 %v2421
    %3694 = vmatpush1.bf16.msra.mxu0 %v2420
    %3695 = vmatprep.subr.bf16.mxu0 %v2425
    %3696 = vmatpush1.bf16.msra.mxu0 %v2424
    %3697 = vmatprep.subr.bf16.mxu0 %v2429
    %3698 = vmatpush1.bf16.msra.mxu0 %v2428
    %3699 = vmatprep.subr.bf16.mxu0 %v2433
    %3700 = vmatpush1.bf16.msra.mxu0 %v2432
    %3701 = vmatprep.subr.bf16.mxu0 %v2437
    %3702 = vmatpush1.bf16.msra.mxu0 %v2436
    %3703 = vmatprep.subr.bf16.mxu0 %v2441
    %3704 = vmatpush1.bf16.msra.mxu0 %v2440
    %3705 = vmatprep.subr.bf16.mxu0 %v2445
    %3706 = vmatpush1.bf16.msra.mxu0 %v2444
    %3707 = vmatprep.subr.bf16.mxu0 %v2449
    %3708 = vmatpush1.bf16.msra.mxu0 %v2448
    %3709 = vmatprep.subr.bf16.mxu0 %v2453
    %3710 = vmatpush1.bf16.msra.mxu0 %v2452
    %3711 = vmatprep.subr.bf16.mxu0 %v2457
    %3712 = vmatpush1.bf16.msra.mxu0 %v2456
    %3713 = vmatprep.subr.bf16.mxu0 %v2461
    %3714 = vmatpush1.bf16.msra.mxu0 %v2460
    %3715 = vmatprep.subr.bf16.mxu0 %v2465
    %3716 = vmatpush1.bf16.msra.mxu0 %v2464
    %3717 = vmatprep.mubr.bf16.mxu0 %v608
    %3718 = vmatmul.mubr.bf16.gmra.mrb[0].mxu0 %v606
    %v3719 = vpop.f32.mrb[0].mxu0
    %v3720 = vadd.f32 %v3679, %v3719
    %v3721 = vpop.f32.mrb[0].mxu0
    %v3722 = vadd.f32 %v3681, %v3721
    %v3723 = vpop.f32.mrb[0].mxu0
    %v3724 = vpop.f32.mrb[0].mxu0
    %3725 = vdwg.mxu0
    %3726 = vmatprep.subr.bf16.mxu0 %v2469
    %3727 = vmatpush1.bf16.msra.mxu0 %v2468
    %3728 = vmatprep.subr.bf16.mxu0 %v2473
    %3729 = vmatpush1.bf16.msra.mxu0 %v2472
    %3730 = vmatprep.subr.bf16.mxu0 %v2477
    %3731 = vmatpush1.bf16.msra.mxu0 %v2476
    %3732 = vmatprep.subr.bf16.mxu0 %v2481
    %3733 = vmatpush1.bf16.msra.mxu0 %v2480
    %3734 = vmatprep.subr.bf16.mxu0 %v2485
    %3735 = vmatpush1.bf16.msra.mxu0 %v2484
    %3736 = vmatprep.subr.bf16.mxu0 %v2489
    %3737 = vmatpush1.bf16.msra.mxu0 %v2488
    %3738 = vmatprep.subr.bf16.mxu0 %v2493
    %3739 = vmatpush1.bf16.msra.mxu0 %v2492
    %3740 = vmatprep.subr.bf16.mxu0 %v2497
    %3741 = vmatpush1.bf16.msra.mxu0 %v2496
    %3742 = vmatprep.subr.bf16.mxu0 %v2501
    %3743 = vmatpush1.bf16.msra.mxu0 %v2500
    %3744 = vmatprep.subr.bf16.mxu0 %v2505
    %3745 = vmatpush1.bf16.msra.mxu0 %v2504
    %3746 = vmatprep.subr.bf16.mxu0 %v2509
    %3747 = vmatpush1.bf16.msra.mxu0 %v2508
    %3748 = vmatprep.subr.bf16.mxu0 %v2513
    %3749 = vmatpush1.bf16.msra.mxu0 %v2512
    %3750 = vmatprep.subr.bf16.mxu0 %v2517
    %3751 = vmatpush1.bf16.msra.mxu0 %v2516
    %3752 = vmatprep.subr.bf16.mxu0 %v2521
    %3753 = vmatpush1.bf16.msra.mxu0 %v2520
    %3754 = vmatprep.subr.bf16.mxu0 %v2525
    %3755 = vmatpush1.bf16.msra.mxu0 %v2524
    %3756 = vmatprep.subr.bf16.mxu0 %v2529
    %3757 = vmatpush1.bf16.msra.mxu0 %v2528
    %3758 = vmatprep.mubr.bf16.mxu0 %v646
    %3759 = vmatmul.mubr.bf16.gmra.mrb[0].mxu0 %v632
    %v3760 = vpop.f32.mrb[0].mxu0
    %v3761 = vadd.f32 %v3720, %v3760
    %v3762 = vpop.f32.mrb[0].mxu0
    %v3763 = vadd.f32 %v3722, %v3762
    %v3764 = vpop.f32.mrb[0].mxu0
    %v3765 = vpop.f32.mrb[0].mxu0
    %3766 = vdwg.mxu0
    %3767 = vmatprep.subr.bf16.mxu0 %v2533
    %3768 = vmatpush1.bf16.msra.mxu0 %v2532
    %3769 = vmatprep.subr.bf16.mxu0 %v2537
    %3770 = vmatpush1.bf16.msra.mxu0 %v2536
    %3771 = vmatprep.subr.bf16.mxu0 %v2541
    %3772 = vmatpush1.bf16.msra.mxu0 %v2540
    %3773 = vmatprep.subr.bf16.mxu0 %v2545
    %3774 = vmatpush1.bf16.msra.mxu0 %v2544
    %3775 = vmatprep.subr.bf16.mxu0 %v2549
    %3776 = vmatpush1.bf16.msra.mxu0 %v2548
    %3777 = vmatprep.subr.bf16.mxu0 %v2553
    %3778 = vmatpush1.bf16.msra.mxu0 %v2552
    %3779 = vmatprep.subr.bf16.mxu0 %v2557
    %3780 = vmatpush1.bf16.msra.mxu0 %v2556
    %3781 = vmatprep.subr.bf16.mxu0 %v2561
    %3782 = vmatpush1.bf16.msra.mxu0 %v2560
    %3783 = vmatprep.subr.bf16.mxu0 %v2565
    %3784 = vmatpush1.bf16.msra.mxu0 %v2564
    %3785 = vmatprep.subr.bf16.mxu0 %v2569
    %3786 = vmatpush1.bf16.msra.mxu0 %v2568
    %3787 = vmatprep.subr.bf16.mxu0 %v2573
    %3788 = vmatpush1.bf16.msra.mxu0 %v2572
    %3789 = vmatprep.subr.bf16.mxu0 %v2577
    %3790 = vmatpush1.bf16.msra.mxu0 %v2576
    %3791 = vmatprep.subr.bf16.mxu0 %v2581
    %3792 = vmatpush1.bf16.msra.mxu0 %v2580
    %3793 = vmatprep.subr.bf16.mxu0 %v2585
    %3794 = vmatpush1.bf16.msra.mxu0 %v2584
    %3795 = vmatprep.subr.bf16.mxu0 %v2589
    %3796 = vmatpush1.bf16.msra.mxu0 %v2588
    %3797 = vmatprep.subr.bf16.mxu0 %v2593
    %3798 = vmatpush1.bf16.msra.mxu0 %v2592
    %3799 = vmatprep.mubr.bf16.mxu0 %v656
    %3800 = vmatmul.mubr.bf16.gmra.mrb[0].mxu0 %v654
    %v3801 = vpop.f32.mrb[0].mxu0
    %v3802 = vadd.f32 %v3761, %v3801
    %v3803 = vpop.f32.mrb[0].mxu0
    %v3804 = vadd.f32 %v3763, %v3803
    %v3805 = vpop.f32.mrb[0].mxu0
    %v3806 = vpop.f32.mrb[0].mxu0
    %3807 = vdwg.mxu0
    %3808 = vmatprep.subr.bf16.mxu0 %v2597
    %3809 = vmatpush1.bf16.msra.mxu0 %v2596
    %3810 = vmatprep.subr.bf16.mxu0 %v2601
    %3811 = vmatpush1.bf16.msra.mxu0 %v2600
    %3812 = vmatprep.subr.bf16.mxu0 %v2605
    %3813 = vmatpush1.bf16.msra.mxu0 %v2604
    %3814 = vmatprep.subr.bf16.mxu0 %v2609
    %3815 = vmatpush1.bf16.msra.mxu0 %v2608
    %3816 = vmatprep.subr.bf16.mxu0 %v2613
    %3817 = vmatpush1.bf16.msra.mxu0 %v2612
    %3818 = vmatprep.subr.bf16.mxu0 %v2617
    %3819 = vmatpush1.bf16.msra.mxu0 %v2616
    %3820 = vmatprep.subr.bf16.mxu0 %v2621
    %3821 = vmatpush1.bf16.msra.mxu0 %v2620
    %3822 = vmatprep.subr.bf16.mxu0 %v2625
    %3823 = vmatpush1.bf16.msra.mxu0 %v2624
    %3824 = vmatprep.subr.bf16.mxu0 %v2629
    %3825 = vmatpush1.bf16.msra.mxu0 %v2628
    %3826 = vmatprep.subr.bf16.mxu0 %v2633
    %3827 = vmatpush1.bf16.msra.mxu0 %v2632
    %3828 = vmatprep.subr.bf16.mxu0 %v2637
    %3829 = vmatpush1.bf16.msra.mxu0 %v2636
    %3830 = vmatprep.subr.bf16.mxu0 %v2641
    %3831 = vmatpush1.bf16.msra.mxu0 %v2640
    %3832 = vmatprep.subr.bf16.mxu0 %v2645
    %3833 = vmatpush1.bf16.msra.mxu0 %v2644
    %3834 = vmatprep.subr.bf16.mxu0 %v2649
    %3835 = vmatpush1.bf16.msra.mxu0 %v2648
    %3836 = vmatprep.subr.bf16.mxu0 %v2653
    %3837 = vmatpush1.bf16.msra.mxu0 %v2652
    %3838 = vmatprep.subr.bf16.mxu0 %v2657
    %3839 = vmatpush1.bf16.msra.mxu0 %v2656
    %3840 = vmatprep.mubr.bf16.mxu0 %v653
    %3841 = vmatmul.mubr.bf16.gmra.mrb[0].mxu0 %v639
    %v3842 = vpop.f32.mrb[0].mxu0
    %v3843 = vadd.f32 %v3802, %v3842
    %v3844 = vpop.f32.mrb[0].mxu0
    %v3845 = vadd.f32 %v3804, %v3844
    %v3846 = vpop.f32.mrb[0].mxu0
    %v3847 = vpop.f32.mrb[0].mxu0
    %3848 = vdwg.mxu0
    %3849 = vmatprep.subr.bf16.mxu0 %v2661
    %3850 = vmatpush1.bf16.msra.mxu0 %v2660
    %3851 = vmatprep.subr.bf16.mxu0 %v2665
    %3852 = vmatpush1.bf16.msra.mxu0 %v2664
    %3853 = vmatprep.subr.bf16.mxu0 %v2669
    %3854 = vmatpush1.bf16.msra.mxu0 %v2668
    %3855 = vmatprep.subr.bf16.mxu0 %v2673
    %3856 = vmatpush1.bf16.msra.mxu0 %v2672
    %3857 = vmatprep.subr.bf16.mxu0 %v2677
    %3858 = vmatpush1.bf16.msra.mxu0 %v2676
    %3859 = vmatprep.subr.bf16.mxu0 %v2681
    %3860 = vmatpush1.bf16.msra.mxu0 %v2680
    %3861 = vmatprep.subr.bf16.mxu0 %v2685
    %3862 = vmatpush1.bf16.msra.mxu0 %v2684
    %3863 = vmatprep.subr.bf16.mxu0 %v2689
    %3864 = vmatpush1.bf16.msra.mxu0 %v2688
    %3865 = vmatprep.subr.bf16.mxu0 %v2693
    %3866 = vmatpush1.bf16.msra.mxu0 %v2692
    %3867 = vmatprep.subr.bf16.mxu0 %v2697
    %3868 = vmatpush1.bf16.msra.mxu0 %v2696
    %3869 = vmatprep.subr.bf16.mxu0 %v2701
    %3870 = vmatpush1.bf16.msra.mxu0 %v2700
    %3871 = vmatprep.subr.bf16.mxu0 %v2705
    %3872 = vmatpush1.bf16.msra.mxu0 %v2704
    %3873 = vmatprep.subr.bf16.mxu0 %v2709
    %3874 = vmatpush1.bf16.msra.mxu0 %v2708
    %3875 = vmatprep.subr.bf16.mxu0 %v2713
    %3876 = vmatpush1.bf16.msra.mxu0 %v2712
    %3877 = vmatprep.subr.bf16.mxu0 %v2717
    %3878 = vmatpush1.bf16.msra.mxu0 %v2716
    %3879 = vmatprep.subr.bf16.mxu0 %v2721
    %3880 = vmatpush1.bf16.msra.mxu0 %v2720
    %3881 = vmatprep.mubr.bf16.mxu0 %v657
    %3882 = vmatmul.mubr.bf16.gmra.mrb[0].mxu0 %v655
    %v3883 = vpop.f32.mrb[0].mxu0
    %v3884 = vadd.f32 %v3843, %v3883
    %v3885 = vpop.f32.mrb[0].mxu0
    %v3886 = vadd.f32 %v3845, %v3885
    %v3887 = vpop.f32.mrb[0].mxu0
    %v3888 = vpop.f32.mrb[0].mxu0
    %3889 = vdwg.mxu0
    %v3890 = vmax.f32 %v3556, 0.0
    %v3891 = vmax.f32 %v3558, 0.0
    %v3892 = vmax.f32 %v3884, 0.0
    %v3893 = vmax.f32 %v3886, 0.0
    %v3894 = vpack.c.bf16 %v3890, %v3890
    %v3895 = vpack.c.bf16 %v3891, %v3891
    %v3896 = vpack.c.bf16 %v3892, %v3892
    %v3897 = vpack.c.bf16 %v3893, %v3893
    %v3898 = vld [vmem:[%s3] sm:$0xf]
    %v3899 = vld [vmem:[%s3 + $0x4] sm:$0xf]
    %v3900 = vld [vmem:[%s3 + $0x8] sm:$0xf]
    %v3901 = vld [vmem:[%s3 + $0xc] sm:$0xf]
    %v3902 = vld [vmem:[%s3 + $0x10] sm:$0xf]
    %v3903 = vld [vmem:[%s3 + $0x14] sm:$0xf]
    %v3904 = vld [vmem:[%s3 + $0x18] sm:$0xf]
    %v3905 = vld [vmem:[%s3 + $0x1c] sm:$0xf]
    %v3906 = vld [vmem:[%s3 + $0x20] sm:$0xf]
    %v3907 = vld [vmem:[%s3 + $0x24] sm:$0xf]
    %v3908 = vld [vmem:[%s3 + $0x28] sm:$0xf]
    %v3909 = vld [vmem:[%s3 + $0x2c] sm:$0xf]
    %v3910 = vld [vmem:[%s3 + $0x30] sm:$0xf]
    %v3911 = vld [vmem:[%s3 + $0x34] sm:$0xf]
    %v3912 = vld [vmem:[%s3 + $0x38] sm:$0xf]
    %v3913 = vld [vmem:[%s3 + $0x3c] sm:$0xf]
    %v3914 = vld [vmem:[%s3 + $0x40] sm:$0xf]
    %v3915 = vld [vmem:[%s3 + $0x44] sm:$0xf]
    %v3916 = vld [vmem:[%s3 + $0x48] sm:$0xf]
    %v3917 = vld [vmem:[%s3 + $0x4c] sm:$0xf]
    %v3918 = vld [vmem:[%s3 + $0x50] sm:$0xf]
    %v3919 = vld [vmem:[%s3 + $0x54] sm:$0xf]
    %v3920 = vld [vmem:[%s3 + $0x58] sm:$0xf]
    %v3921 = vld [vmem:[%s3 + $0x5c] sm:$0xf]
    %v3922 = vld [vmem:[%s3 + $0x60] sm:$0xf]
    %v3923 = vld [vmem:[%s3 + $0x64] sm:$0xf]
    %v3924 = vld [vmem:[%s3 + $0x68] sm:$0xf]
    %v3925 = vld [vmem:[%s3 + $0x6c] sm:$0xf]
    %v3926 = vld [vmem:[%s3 + $0x70] sm:$0xf]
    %v3927 = vld [vmem:[%s3 + $0x74] sm:$0xf]
    %v3928 = vld [vmem:[%s3 + $0x78] sm:$0xf]
    %v3929 = vld [vmem:[%s3 + $0x7c] sm:$0xf]
    %v3930 = vld [vmem:[%s3 + $0x80] sm:$0xf]
    %v3931 = vld [vmem:[%s3 + $0x84] sm:$0xf]
    %v3932 = vld [vmem:[%s3 + $0x88] sm:$0xf]
    %v3933 = vld [vmem:[%s3 + $0x8c] sm:$0xf]
    %v3934 = vld [vmem:[%s3 + $0x90] sm:$0xf]
    %v3935 = vld [vmem:[%s3 + $0x94] sm:$0xf]
    %v3936 = vld [vmem:[%s3 + $0x98] sm:$0xf]
    %v3937 = vld [vmem:[%s3 + $0x9c] sm:$0xf]
    %v3938 = vld [vmem:[%s3 + $0xa0] sm:$0xf]
    %v3939 = vld [vmem:[%s3 + $0xa4] sm:$0xf]
    %v3940 = vld [vmem:[%s3 + $0xa8] sm:$0xf]
    %v3941 = vld [vmem:[%s3 + $0xac] sm:$0xf]
    %v3942 = vld [vmem:[%s3 + $0xb0] sm:$0xf]
    %v3943 = vld [vmem:[%s3 + $0xb4] sm:$0xf]
    %v3944 = vld [vmem:[%s3 + $0xb8] sm:$0xf]
    %v3945 = vld [vmem:[%s3 + $0xbc] sm:$0xf]
    %v3946 = vld [vmem:[%s3 + $0xc0] sm:$0xf]
    %v3947 = vld [vmem:[%s3 + $0xc4] sm:$0xf]
    %v3948 = vld [vmem:[%s3 + $0xc8] sm:$0xf]
    %v3949 = vld [vmem:[%s3 + $0xcc] sm:$0xf]
    %v3950 = vld [vmem:[%s3 + $0xd0] sm:$0xf]
    %v3951 = vld [vmem:[%s3 + $0xd4] sm:$0xf]
    %v3952 = vld [vmem:[%s3 + $0xd8] sm:$0xf]
    %v3953 = vld [vmem:[%s3 + $0xdc] sm:$0xf]
    %v3954 = vld [vmem:[%s3 + $0xe0] sm:$0xf]
    %v3955 = vld [vmem:[%s3 + $0xe4] sm:$0xf]
    %v3956 = vld [vmem:[%s3 + $0xe8] sm:$0xf]
    %v3957 = vld [vmem:[%s3 + $0xec] sm:$0xf]
    %v3958 = vld [vmem:[%s3 + $0xf0] sm:$0xf]
    %v3959 = vld [vmem:[%s3 + $0xf4] sm:$0xf]
    %v3960 = vld [vmem:[%s3 + $0xf8] sm:$0xf]
    %v3961 = vld [vmem:[%s3 + $0xfc] sm:$0xf]
    %v3962 = vld [vmem:[%s4] sm:$0x1]
    %v3964 = vlaneseq
    %v3965 = vshrl.u32 %v3964, 7
    %v3966 = vsub.s32 0, %v3965
    %v3967 = vrot.slane %v3962, %v3966
    %v4033 = vunpack.c.l.b16 %v3898
    %v4034 = vunpack.c.l.b16 %v3899
    %v4035 = vunpack.c.l.b16 %v3900
    %v4036 = vunpack.c.l.b16 %v3901
    %v4037 = vunpack.c.l.b16 %v3902
    %v4038 = vunpack.c.l.b16 %v3903
    %v4039 = vunpack.c.l.b16 %v3904
    %v4040 = vunpack.c.l.b16 %v3905
    %v4041 = vunpack.c.l.b16 %v3906
    %v4042 = vunpack.c.l.b16 %v3907
    %v4043 = vunpack.c.l.b16 %v3908
    %v4044 = vunpack.c.l.b16 %v3909
    %v4045 = vunpack.c.l.b16 %v3910
    %v4046 = vunpack.c.l.b16 %v3911
    %v4047 = vunpack.c.l.b16 %v3912
    %v4048 = vunpack.c.l.b16 %v3913
    %v4049 = vunpack.c.l.b16 %v3914
    %v4050 = vunpack.c.l.b16 %v3915
    %v4051 = vunpack.c.l.b16 %v3916
    %v4052 = vunpack.c.l.b16 %v3917
    %v4053 = vunpack.c.l.b16 %v3918
    %v4054 = vunpack.c.l.b16 %v3919
    %v4055 = vunpack.c.l.b16 %v3920
    %v4056 = vunpack.c.l.b16 %v3921
    %v4057 = vunpack.c.l.b16 %v3922
    %v4058 = vunpack.c.l.b16 %v3923
    %v4059 = vunpack.c.l.b16 %v3924
    %v4060 = vunpack.c.l.b16 %v3925
    %v4061 = vunpack.c.l.b16 %v3926
    %v4062 = vunpack.c.l.b16 %v3927
    %v4063 = vunpack.c.l.b16 %v3928
    %v4064 = vunpack.c.l.b16 %v3929
    %v4065 = vunpack.c.l.b16 %v3930
    %v4066 = vunpack.c.l.b16 %v3931
    %v4067 = vunpack.c.l.b16 %v3932
    %v4068 = vunpack.c.l.b16 %v3933
    %v4069 = vunpack.c.l.b16 %v3934
    %v4070 = vunpack.c.l.b16 %v3935
    %v4071 = vunpack.c.l.b16 %v3936
    %v4072 = vunpack.c.l.b16 %v3937
    %v4073 = vunpack.c.l.b16 %v3938
    %v4074 = vunpack.c.l.b16 %v3939
    %v4075 = vunpack.c.l.b16 %v3940
    %v4076 = vunpack.c.l.b16 %v3941
    %v4077 = vunpack.c.l.b16 %v3942
    %v4078 = vunpack.c.l.b16 %v3943
    %v4079 = vunpack.c.l.b16 %v3944
    %v4080 = vunpack.c.l.b16 %v3945
    %v4081 = vunpack.c.l.b16 %v3946
    %v4082 = vunpack.c.l.b16 %v3947
    %v4083 = vunpack.c.l.b16 %v3948
    %v4084 = vunpack.c.l.b16 %v3949
    %v4085 = vunpack.c.l.b16 %v3950
    %v4086 = vunpack.c.l.b16 %v3951
    %v4087 = vunpack.c.l.b16 %v3952
    %v4088 = vunpack.c.l.b16 %v3953
    %v4089 = vunpack.c.l.b16 %v3954
    %v4090 = vunpack.c.l.b16 %v3955
    %v4091 = vunpack.c.l.b16 %v3956
    %v4092 = vunpack.c.l.b16 %v3957
    %v4093 = vunpack.c.l.b16 %v3958
    %v4094 = vunpack.c.l.b16 %v3959
    %v4095 = vunpack.c.l.b16 %v3960
    %v4096 = vunpack.c.l.b16 %v3961
    %v4097 = vpack.c.b16 %v4034, %v4033
    %v4098 = vpack.c.b16 %v4036, %v4035
    %v4099 = vpack.c.b16 %v4038, %v4037
    %v4100 = vpack.c.b16 %v4040, %v4039
    %v4101 = vpack.c.b16 %v4042, %v4041
    %v4102 = vpack.c.b16 %v4044, %v4043
    %v4103 = vpack.c.b16 %v4046, %v4045
    %v4104 = vpack.c.b16 %v4048, %v4047
    %v4105 = vpack.c.b16 %v4050, %v4049
    %v4106 = vpack.c.b16 %v4052, %v4051
    %v4107 = vpack.c.b16 %v4054, %v4053
    %v4108 = vpack.c.b16 %v4056, %v4055
    %v4109 = vpack.c.b16 %v4058, %v4057
    %v4110 = vpack.c.b16 %v4060, %v4059
    %v4111 = vpack.c.b16 %v4062, %v4061
    %v4112 = vpack.c.b16 %v4064, %v4063
    %v4113 = vpack.c.b16 %v4066, %v4065
    %v4114 = vpack.c.b16 %v4068, %v4067
    %v4115 = vpack.c.b16 %v4070, %v4069
    %v4116 = vpack.c.b16 %v4072, %v4071
    %v4117 = vpack.c.b16 %v4074, %v4073
    %v4118 = vpack.c.b16 %v4076, %v4075
    %v4119 = vpack.c.b16 %v4078, %v4077
    %v4120 = vpack.c.b16 %v4080, %v4079
    %v4121 = vpack.c.b16 %v4082, %v4081
    %v4122 = vpack.c.b16 %v4084, %v4083
    %v4123 = vpack.c.b16 %v4086, %v4085
    %v4124 = vpack.c.b16 %v4088, %v4087
    %v4125 = vpack.c.b16 %v4090, %v4089
    %v4126 = vpack.c.b16 %v4092, %v4091
    %v4127 = vpack.c.b16 %v4094, %v4093
    %v4128 = vpack.c.b16 %v4096, %v4095
    %4161 = vmatprep.subr.bf16.mxu0 0
    %4162 = vmatpush1.bf16.msra.mxu0 %v4097
    %4163 = vmatprep.subr.bf16.mxu0 0
    %4164 = vmatpush1.bf16.msra.mxu0 %v4098
    %4165 = vmatprep.subr.bf16.mxu0 0
    %4166 = vmatpush1.bf16.msra.mxu0 %v4099
    %4167 = vmatprep.subr.bf16.mxu0 0
    %4168 = vmatpush1.bf16.msra.mxu0 %v4100
    %4169 = vmatprep.subr.bf16.mxu0 0
    %4170 = vmatpush1.bf16.msra.mxu0 %v4101
    %4171 = vmatprep.subr.bf16.mxu0 0
    %4172 = vmatpush1.bf16.msra.mxu0 %v4102
    %4173 = vmatprep.subr.bf16.mxu0 0
    %4174 = vmatpush1.bf16.msra.mxu0 %v4103
    %4175 = vmatprep.subr.bf16.mxu0 0
    %4176 = vmatpush1.bf16.msra.mxu0 %v4104
    %4177 = vmatprep.subr.bf16.mxu0 0
    %4178 = vmatpush1.bf16.msra.mxu0 %v4105
    %4179 = vmatprep.subr.bf16.mxu0 0
    %4180 = vmatpush1.bf16.msra.mxu0 %v4106
    %4181 = vmatprep.subr.bf16.mxu0 0
    %4182 = vmatpush1.bf16.msra.mxu0 %v4107
    %4183 = vmatprep.subr.bf16.mxu0 0
    %4184 = vmatpush1.bf16.msra.mxu0 %v4108
    %4185 = vmatprep.subr.bf16.mxu0 0
    %4186 = vmatpush1.bf16.msra.mxu0 %v4109
    %4187 = vmatprep.subr.bf16.mxu0 0
    %4188 = vmatpush1.bf16.msra.mxu0 %v4110
    %4189 = vmatprep.subr.bf16.mxu0 0
    %4190 = vmatpush1.bf16.msra.mxu0 %v4111
    %4191 = vmatprep.subr.bf16.mxu0 0
    %4192 = vmatpush1.bf16.msra.mxu0 %v4112
    %4193 = vmatprep.mubr.bf16.mxu0 %v3895
    %4194 = vmatmul.mubr.bf16.gmra.mrb[0].mxu0 %v3894
    %v4195 = vpop.f32.mrb[0].mxu0
    %v4196 = vadd.f32 %v3967, %v4195
    %v4197 = vpop.f32.mrb[0].mxu0
    %v4198 = vpop.f32.mrb[0].mxu0
    %v4199 = vpop.f32.mrb[0].mxu0
    %4200 = vdwg.mxu0
    %4201 = vmatprep.subr.bf16.mxu0 0
    %4202 = vmatpush1.bf16.msra.mxu0 %v4113
    %4203 = vmatprep.subr.bf16.mxu0 0
    %4204 = vmatpush1.bf16.msra.mxu0 %v4114
    %4205 = vmatprep.subr.bf16.mxu0 0
    %4206 = vmatpush1.bf16.msra.mxu0 %v4115
    %4207 = vmatprep.subr.bf16.mxu0 0
    %4208 = vmatpush1.bf16.msra.mxu0 %v4116
    %4209 = vmatprep.subr.bf16.mxu0 0
    %4210 = vmatpush1.bf16.msra.mxu0 %v4117
    %4211 = vmatprep.subr.bf16.mxu0 0
    %4212 = vmatpush1.bf16.msra.mxu0 %v4118
    %4213 = vmatprep.subr.bf16.mxu0 0
    %4214 = vmatpush1.bf16.msra.mxu0 %v4119
    %4215 = vmatprep.subr.bf16.mxu0 0
    %4216 = vmatpush1.bf16.msra.mxu0 %v4120
    %4217 = vmatprep.subr.bf16.mxu0 0
    %4218 = vmatpush1.bf16.msra.mxu0 %v4121
    %4219 = vmatprep.subr.bf16.mxu0 0
    %4220 = vmatpush1.bf16.msra.mxu0 %v4122
    %4221 = vmatprep.subr.bf16.mxu0 0
    %4222 = vmatpush1.bf16.msra.mxu0 %v4123
    %4223 = vmatprep.subr.bf16.mxu0 0
    %4224 = vmatpush1.bf16.msra.mxu0 %v4124
    %4225 = vmatprep.subr.bf16.mxu0 0
    %4226 = vmatpush1.bf16.msra.mxu0 %v4125
    %4227 = vmatprep.subr.bf16.mxu0 0
    %4228 = vmatpush1.bf16.msra.mxu0 %v4126
    %4229 = vmatprep.subr.bf16.mxu0 0
    %4230 = vmatpush1.bf16.msra.mxu0 %v4127
    %4231 = vmatprep.subr.bf16.mxu0 0
    %4232 = vmatpush1.bf16.msra.mxu0 %v4128
    %4233 = vmatprep.mubr.bf16.mxu0 %v3897
    %4234 = vmatmul.mubr.bf16.gmra.mrb[0].mxu0 %v3896
    %v4235 = vpop.f32.mrb[0].mxu0
    %v4236 = vadd.f32 %v4196, %v4235
    %v4237 = vpop.f32.mrb[0].mxu0
    %v4238 = vpop.f32.mrb[0].mxu0
    %v4239 = vpop.f32.mrb[0].mxu0
    %4240 = vdwg.mxu0
    %4241 = vst [vmem:[#allocation2] sm:$0x3] %v4236
    // Predicated region
    $region22: #{lenet_forward.5} parent=1 // pred_check
      _
    $region23: #{lenet_forward.5} parent=1 // pred_check_branch
      %4243 = sbr.rel (0) target = $region25
    $region24: #{lenet_forward.5} parent=1 // pred_region
      %s4245 = ssub.s32 32, 32
      %4246 = vsyncadd [#allocation3], %s4245
      %s4248 = sshll.u32 [#allocation2], 4
      %s4249 = int_to_ptr.vmem [resolvable:$true] %s4248
      %4251 = dma.vmem_to_hbm [thread:$0]  %s4249, 32, %s5, [#allocation3]
    $region25: #{lenet_forward.5} parent=1 // pred_fallthru
      _
    // Predicated region
    $region26: #{lenet_forward.5} parent=1 // pred_check
      _
    $region27: #{lenet_forward.5} parent=1 // pred_check_branch
      %4253 = sbr.rel (0) target = $region29
    $region28: #{lenet_forward.5} parent=1 // pred_region
      %4254 = dma.done [#allocation3], 32
    $region29: #{lenet_forward.5} parent=1 // pred_fallthru
      _
    %4255 = vsyncpa [#allocation3], 1

</llo_original>
